<compile_context>
chip_gen: v5e
topology: v5e:2x2
jax: 0.10.0
libtpu: 0.0.40
codegen_flags: <defaults>
</compile_context>

<pallas_src>
import functools

import jax
import jax.numpy as jnp
from jax.experimental import pallas as pl
from jax.experimental.pallas import tpu as pltpu


def _layernorm(x, gamma, beta, eps=1e-5):
    mean = jnp.mean(x, axis=-1, keepdims=True)
    var = jnp.mean((x - mean) ** 2, axis=-1, keepdims=True)
    return (x - mean) * jax.lax.rsqrt(var + eps) * gamma + beta


def attention_kernel(x_ref, wq_ref, wk_ref, wv_ref, wo_ref, bo_ref,
                     g_ref, b_ref, gk_ref, bk_ref, gv_ref, bv_ref,
                     o_ref,
                     xn_sc, kt_sc, v_sc,
                     *, heads, dim_head, q_block, fused_out_proj):
    f32, bf16 = jnp.float32, jnp.bfloat16
    scale = dim_head ** (-0.5)
    qi = pl.program_id(1)

    # ---- once per batch: LN(x), K/V projections, per-head K/V LN -> VMEM scratch
    # (the q-tile axis is "arbitrary", so these buffers stay valid across qi).
    @pl.when(qi == 0)
    def _():
        xn = _layernorm(x_ref[...].astype(f32), g_ref[...], b_ref[...])    # (N, dim) f32
        xn_sc[...] = xn.astype(bf16)                                        # reused for Q too
        xb = xn.astype(bf16)
        k = jnp.dot(xb, wk_ref[...], preferred_element_type=f32)            # (N, inner)
        v = jnp.dot(xb, wv_ref[...], preferred_element_type=f32)            # (N, inner)
        # head split + per-head LN, once per batch; K stored pre-transposed (H, dh, N)
        kt_sc[...] = jnp.stack(
            [_layernorm(k[:, h * dim_head:(h + 1) * dim_head],
                        gk_ref[...], bk_ref[...]).T
             for h in range(heads)], axis=0).astype(bf16)
        v_sc[...] = jnp.stack(
            [_layernorm(v[:, h * dim_head:(h + 1) * dim_head],
                        gv_ref[...], bv_ref[...])
             for h in range(heads)], axis=0).astype(bf16)                    # (H, N, dh)

    # ---- per q-tile: slice the LN'd query rows out of the cached sequence -----
    row0 = pl.multiple_of(qi * q_block, q_block)
    xq = xn_sc[pl.ds(row0, q_block), :]                                      # (TQ, dim) bf16
    # scale folded into q: O(TQ*inner) instead of scaling the (TQ, N) scores
    q = jnp.dot(xq, wq_ref[...], preferred_element_type=f32) * scale        # (TQ, inner) f32
    qh = jnp.stack([q[:, h * dim_head:(h + 1) * dim_head] for h in range(heads)],
                   axis=0).astype(bf16)                                      # (H, TQ, dh)

    # ---- attention, batched over heads; K already transposed (no relayout) ----
    s = jnp.einsum('hqd,hdk->hqk', qh, kt_sc[...],
                   preferred_element_type=f32)                               # (H, TQ, N)
    m = jnp.max(s, axis=-1, keepdims=True)
    p = jnp.exp(s - m)                                                       # f32 softmax
    denom = jnp.sum(p, axis=-1, keepdims=True)                               # (H, TQ, 1)
    acc = jnp.einsum('hqk,hkd->hqd', p.astype(bf16), v_sc[...],
                     preferred_element_type=f32)                             # (H, TQ, dh)
    acc = acc * pl.reciprocal(denom, approx=True)                            # EUP, not VALU div

    # ---- output projection --------------------------------------------------
    if fused_out_proj:
        # (H, TQ, dh) -> (TQ, inner), then ONE inner-deep matmul (fills the MXU)
        acc_flat = jnp.concatenate([acc[h] for h in range(heads)], axis=-1)  # (TQ, inner)
        out = jnp.dot(acc_flat.astype(bf16), wo_ref[...],
                      preferred_element_type=f32) + bo_ref[...]              # (TQ, dim)
    else:
        # conservative fallback: sum_h acc[h] @ W_out[h*dh:(h+1)*dh]
        out = bo_ref[...]
        for h in range(heads):
            out = out + jnp.dot(acc[h].astype(bf16),
                                wo_ref[h * dim_head:(h + 1) * dim_head, :],
                                preferred_element_type=f32)
    o_ref[...] = out.astype(o_ref.dtype)


def _vmem_limit_bytes():
    """Derive a VMEM budget from the hardware (review: no hardcoded 64 MiB)."""
    try:
        cap = pltpu.get_tpu_info().vmem_capacity_bytes
        # ~80% of per-core VMEM, clamped: ~51 MiB on v7x (64 MiB), ~102 MiB on v5e/v6e.
        return max(32 * 1024 * 1024, min(int(cap * 0.8), 112 * 1024 * 1024))
    except Exception:
        return None  # let the compiler default apply


def attention_forward(x, params, *, heads, dim_head, q_block=None):
    B, N, dim = x.shape
    inner = heads * dim_head

    if q_block is None:
        q_block = min(N, 256)   # review: sweep 256-512 on v5e/v6e once VMEM allows
    if N % q_block:
        q_block = N
    grid = (B, N // q_block)

    vmem_limit = _vmem_limit_bytes()

    def build(single_buffer_invariants, fused_out_proj):
        kernel = functools.partial(attention_kernel, heads=heads, dim_head=dim_head,
                                   q_block=q_block, fused_out_proj=fused_out_proj)

        def rep(shape):
            # grid-invariant operand: constant block index -> DMA'd once, resident.
            # Single-buffered (content never changes, so this is always safe).
            idx = lambda b, qi: (0,) * len(shape)
            if single_buffer_invariants:
                return pl.BlockSpec(shape, idx, pipeline_mode=pl.Buffered(1))
            return pl.BlockSpec(shape, idx)

        in_specs = [
            # full sequence per batch (for K/V + cached LN(x)); changes with b,
            # so it keeps the default double-buffering.
            pl.BlockSpec((None, N, dim), lambda b, qi: (b, 0, 0)),
            rep((dim, inner)),            # W_q  (bf16)
            rep((dim, inner)),            # W_k  (bf16)
            rep((dim, inner)),            # W_v  (bf16)
            rep((inner, dim)),            # W_out (bf16, original (inner, dim) layout)
            rep((1, dim)),                # b_out
            rep((1, dim)),                # ln gamma
            rep((1, dim)),                # ln beta
            rep((1, dim_head)),           # ln_k gamma
            rep((1, dim_head)),           # ln_k beta
            rep((1, dim_head)),           # ln_v gamma
            rep((1, dim_head)),           # ln_v beta
        ]

        scratch_shapes = [
            pltpu.VMEM((N, dim), jnp.bfloat16),               # LN(x) cache
            pltpu.VMEM((heads, dim_head, N), jnp.bfloat16),   # K cache, pre-transposed
            pltpu.VMEM((heads, N, dim_head), jnp.bfloat16),   # V cache
        ]

        return pl.pallas_call(
            kernel,
            out_shape=jax.ShapeDtypeStruct((B, N, dim), x.dtype),
            grid_spec=pltpu.PrefetchScalarGridSpec(
                num_scalar_prefetch=0,
                grid=grid,
                in_specs=in_specs,
                out_specs=pl.BlockSpec((None, q_block, dim), lambda b, qi: (b, qi, 0)),
                scratch_shapes=scratch_shapes),
            compiler_params=pltpu.CompilerParams(
                # batch "parallel" (megacore on v7x: keep B >= 2), q-tiles
                # "arbitrary" so the per-batch K/V scratch is valid across qi.
                dimension_semantics=("parallel", "arbitrary"),
                vmem_limit_bytes=vmem_limit,
            ),
        )

    args = (x,
            params["w_q"], params["w_k"], params["w_v"], params["w_out"],
            params["b_out"], params["g"], params["b"],
            params["gk"], params["bk"], params["gv"], params["bv"])

    # Try the most optimized build first, then progressively more conservative
    # variants (in case Buffered(1) or the lane-dim concat is not supported by
    # the installed Mosaic version).  Numerics are identical across variants.
    last_err = None
    for single_buf, fused in ((True, True), (False, True), (False, False)):
        try:
            return build(single_buf, fused)(*args)
        except Exception as e:  # fall back to a more conservative build
            last_err = e
    raise last_err


def attention_reference(x, params, *, heads, dim_head):
    """Pure-JAX f32 reference matching the PyTorch forward (bf16 weights upcast)."""
    B, N, dim = x.shape
    inner = heads * dim_head
    f32 = jnp.float32
    xn = _layernorm(x.astype(f32), params["g"], params["b"])
    q = xn @ params["w_q"].astype(f32)
    k = xn @ params["w_k"].astype(f32)
    v = xn @ params["w_v"].astype(f32)
    r = lambda t: t.reshape(B, N, heads, dim_head).transpose(0, 2, 1, 3)   # b h n d
    q, k, v = r(q), r(k), r(v)
    k = _layernorm(k, params["gk"], params["bk"])
    v = _layernorm(v, params["gv"], params["bv"])
    s = jnp.einsum("bhnd,bhmd->bhnm", q, k) * (dim_head ** (-0.5))
    p = jax.nn.softmax(s, axis=-1)
    o = jnp.einsum("bhnm,bhmd->bhnd", p, v)
    o = o.transpose(0, 2, 1, 3).reshape(B, N, inner)
    return o @ params["w_out"].astype(f32) + params["b_out"]


if __name__ == "__main__":
    # Small shapes: batch=2, seq=8, dim=32, heads=2, dim_head=16 (project_out=True)
    B, N, dim = 2, 8, 32
    heads, dim_head = 2, 16
    inner = heads * dim_head

    key = jax.random.PRNGKey(0)
    ks = jax.random.split(key, 8)
    x = jax.random.normal(ks[0], (B, N, dim), dtype=jnp.float32)

    # to_qkv weight, pre-transposed to (in_features, out_features) and split
    # into its q/k/v thirds; matmul weights are stored in bf16 (MXU-native).
    w_qkv = jax.random.normal(ks[1], (dim, 3 * inner), jnp.float32) * 0.05
    params = {
        "w_q": w_qkv[:, :inner].astype(jnp.bfloat16),
        "w_k": w_qkv[:, inner:2 * inner].astype(jnp.bfloat16),
        "w_v": w_qkv[:, 2 * inner:].astype(jnp.bfloat16),
        "w_out": (jax.random.normal(ks[2], (inner, dim), jnp.float32) * 0.05
                  ).astype(jnp.bfloat16),
        "b_out": jax.random.normal(ks[3], (1, dim), jnp.float32) * 0.01,
        # LayerNorm affine params (kept f32; perturbed so the affine math is exercised)
        "g":  1.0 + 0.1 * jax.random.normal(ks[4], (1, dim), jnp.float32),
        "b":  0.1 * jax.random.normal(ks[5], (1, dim), jnp.float32),
        "gk": 1.0 + 0.1 * jax.random.normal(ks[6], (1, dim_head), jnp.float32),
        "bk": 0.1 * jax.random.normal(ks[7], (1, dim_head), jnp.float32),
        "gv": 1.0 + 0.05 * jnp.cos(jnp.arange(dim_head, dtype=jnp.float32))[None, :],
        "bv": 0.05 * jnp.sin(jnp.arange(dim_head, dtype=jnp.float32))[None, :],
    }

    out = attention_forward(x, params, heads=heads, dim_head=dim_head)
    out = jax.block_until_ready(out)

    ref = attention_reference(x, params, heads=heads, dim_head=dim_head)
    assert out.shape == (B, N, dim)
    max_err = float(jnp.max(jnp.abs(out - ref)))
    assert jnp.allclose(out, ref, atol=2e-2, rtol=2e-2), f"mismatch vs reference: {max_err}"

    print("KERNEL_OK")
</pallas_src>

<mosaic_0001>
module attributes {stable_mosaic.version = 11 : i64} {
  func.func @attention_kernel(%arg0: i32, %arg1: i32, %arg2: memref<1x8x32xf32, #tpu.memory_space<vmem>>, %arg3: memref<32x32xbf16, #tpu.memory_space<vmem>>, %arg4: memref<32x32xbf16, #tpu.memory_space<vmem>>, %arg5: memref<32x32xbf16, #tpu.memory_space<vmem>>, %arg6: memref<32x32xbf16, #tpu.memory_space<vmem>>, %arg7: memref<1x32xf32, #tpu.memory_space<vmem>>, %arg8: memref<1x32xf32, #tpu.memory_space<vmem>>, %arg9: memref<1x32xf32, #tpu.memory_space<vmem>>, %arg10: memref<1x16xf32, #tpu.memory_space<vmem>>, %arg11: memref<1x16xf32, #tpu.memory_space<vmem>>, %arg12: memref<1x16xf32, #tpu.memory_space<vmem>>, %arg13: memref<1x16xf32, #tpu.memory_space<vmem>>, %arg14: memref<1x8x32xf32, #tpu.memory_space<vmem>>, %arg15: memref<8x32xbf16, #tpu.memory_space<vmem>>, %arg16: memref<2x16x8xbf16, #tpu.memory_space<vmem>>, %arg17: memref<2x8x16xbf16, #tpu.memory_space<vmem>>) attributes {dimension_semantics = [#tpu.dimension_semantics<parallel>, #tpu.dimension_semantics<arbitrary>], iteration_bounds = array<i64: 2, 1>, scalar_prefetch = 0 : i64, scratch_operands = 3 : i64, tpu.core_type = #tpu.core_type<tc>, window_params = [{transform_indices = @transform_0, window_bounds = array<i64: 1, 8, 32>}, {pipeline_mode = #tpu.pipeline_mode<synchronous>, transform_indices = @transform_1, window_bounds = array<i64: 32, 32>}, {pipeline_mode = #tpu.pipeline_mode<synchronous>, transform_indices = @transform_2, window_bounds = array<i64: 32, 32>}, {pipeline_mode = #tpu.pipeline_mode<synchronous>, transform_indices = @transform_3, window_bounds = array<i64: 32, 32>}, {pipeline_mode = #tpu.pipeline_mode<synchronous>, transform_indices = @transform_4, window_bounds = array<i64: 32, 32>}, {pipeline_mode = #tpu.pipeline_mode<synchronous>, transform_indices = @transform_5, window_bounds = array<i64: 1, 32>}, {pipeline_mode = #tpu.pipeline_mode<synchronous>, transform_indices = @transform_6, window_bounds = array<i64: 1, 32>}, {pipeline_mode = #tpu.pipeline_mode<synchronous>, transform_indices = @transform_7, window_bounds = array<i64: 1, 32>}, {pipeline_mode = #tpu.pipeline_mode<synchronous>, transform_indices = @transform_8, window_bounds = array<i64: 1, 16>}, {pipeline_mode = #tpu.pipeline_mode<synchronous>, transform_indices = @transform_9, window_bounds = array<i64: 1, 16>}, {pipeline_mode = #tpu.pipeline_mode<synchronous>, transform_indices = @transform_10, window_bounds = array<i64: 1, 16>}, {pipeline_mode = #tpu.pipeline_mode<synchronous>, transform_indices = @transform_11, window_bounds = array<i64: 1, 16>}, {transform_indices = @transform_12, window_bounds = array<i64: 1, 8, 32>}]} {
    %c0_i32 = arith.constant 0 : i32
    %0 = arith.cmpi eq, %arg1, %c0_i32 : i32
    %1 = arith.extui %0 : i1 to i32
    %c0_i32_0 = arith.constant 0 : i32
    %2 = arith.cmpi ne, %1, %c0_i32_0 : i32
    scf.if %2 {
      %c0_22 = arith.constant 0 : index
      %c0_23 = arith.constant 0 : index
      %c0_24 = arith.constant 0 : index
      %46 = vector.load %arg2[%c0_22, %c0_23, %c0_24] : memref<1x8x32xf32, #tpu.memory_space<vmem>>, vector<1x8x32xf32>
      %47 = vector.shape_cast %46 : vector<1x8x32xf32> to vector<8x32xf32>
      %c0_25 = arith.constant 0 : index
      %c0_26 = arith.constant 0 : index
      %48 = vector.load %arg8[%c0_25, %c0_26] : memref<1x32xf32, #tpu.memory_space<vmem>>, vector<1x32xf32>
      %c0_27 = arith.constant 0 : index
      %c0_28 = arith.constant 0 : index
      %49 = vector.load %arg9[%c0_27, %c0_28] : memref<1x32xf32, #tpu.memory_space<vmem>>, vector<1x32xf32>
      %cst_29 = arith.constant dense<0.000000e+00> : vector<8xf32>
      %50 = vector.multi_reduction <add>, %47, %cst_29 [1] : vector<8x32xf32> to vector<8xf32>
      %51 = vector.shape_cast %50 : vector<8xf32> to vector<8x1xf32>
      %cst_30 = arith.constant 3.200000e+01 : f32
      %52 = vector.broadcast %cst_30 : f32 to vector<8x1xf32>
      %53 = arith.divf %51, %52 : vector<8x1xf32>
      %54 = vector.broadcast %53 : vector<8x1xf32> to vector<8x32xf32>
      %55 = arith.subf %47, %54 : vector<8x32xf32>
      %56 = arith.mulf %55, %55 : vector<8x32xf32>
      %cst_31 = arith.constant dense<0.000000e+00> : vector<8xf32>
      %57 = vector.multi_reduction <add>, %56, %cst_31 [1] : vector<8x32xf32> to vector<8xf32>
      %58 = vector.shape_cast %57 : vector<8xf32> to vector<8x1xf32>
      %cst_32 = arith.constant 3.200000e+01 : f32
      %59 = vector.broadcast %cst_32 : f32 to vector<8x1xf32>
      %60 = arith.divf %58, %59 : vector<8x1xf32>
      %61 = vector.broadcast %53 : vector<8x1xf32> to vector<8x32xf32>
      %62 = arith.subf %47, %61 : vector<8x32xf32>
      %cst_33 = arith.constant 9.99999974E-6 : f32
      %63 = vector.broadcast %cst_33 : f32 to vector<8x1xf32>
      %64 = arith.addf %60, %63 : vector<8x1xf32>
      %65 = math.rsqrt %64 : vector<8x1xf32>
      %66 = vector.broadcast %65 : vector<8x1xf32> to vector<8x32xf32>
      %67 = arith.mulf %62, %66 : vector<8x32xf32>
      %68 = vector.broadcast %48 : vector<1x32xf32> to vector<8x32xf32>
      %69 = arith.mulf %67, %68 : vector<8x32xf32>
      %70 = vector.broadcast %49 : vector<1x32xf32> to vector<8x32xf32>
      %71 = arith.addf %69, %70 : vector<8x32xf32>
      %72 = arith.truncf %71 : vector<8x32xf32> to vector<8x32xbf16>
      %c0_34 = arith.constant 0 : index
      %c0_35 = arith.constant 0 : index
      %73 = vector.load %arg15[%c0_34, %c0_35] : memref<8x32xbf16, #tpu.memory_space<vmem>>, vector<8x32xbf16>
      tpu.vector_store %arg15[%c0_34, %c0_35], %72 {strides = array<i32>} : memref<8x32xbf16, #tpu.memory_space<vmem>>, vector<8x32xbf16>,
      %74 = arith.truncf %71 : vector<8x32xf32> to vector<8x32xbf16>
      %c0_36 = arith.constant 0 : index
      %c0_37 = arith.constant 0 : index
      %75 = vector.load %arg4[%c0_36, %c0_37] : memref<32x32xbf16, #tpu.memory_space<vmem>>, vector<32x32xbf16>
      %cst_38 = arith.constant dense<0.000000e+00> : vector<8x32xf32>
      %76 = tpu.matmul %74, %75, %cst_38 {dimension_numbers = #tpu.dot_dimension_numbers<[1], [0], [0], [1], [0, 0, 1, 1], [], []>} : vector<8x32xbf16>, vector<32x32xbf16>, vector<8x32xf32> -> vector<8x32xf32>
      %c0_39 = arith.constant 0 : index
      %c0_40 = arith.constant 0 : index
      %77 = vector.load %arg5[%c0_39, %c0_40] : memref<32x32xbf16, #tpu.memory_space<vmem>>, vector<32x32xbf16>
      %cst_41 = arith.constant dense<0.000000e+00> : vector<8x32xf32>
      %78 = tpu.matmul %74, %77, %cst_41 {dimension_numbers = #tpu.dot_dimension_numbers<[1], [0], [0], [1], [0, 0, 1, 1], [], []>} : vector<8x32xbf16>, vector<32x32xbf16>, vector<8x32xf32> -> vector<8x32xf32>
      %79 = vector.extract_strided_slice %76 {offsets = [0, 0], sizes = [8, 16], strides = [1, 1]} : vector<8x32xf32> to vector<8x16xf32>
      %c0_42 = arith.constant 0 : index
      %c0_43 = arith.constant 0 : index
      %80 = vector.load %arg10[%c0_42, %c0_43] : memref<1x16xf32, #tpu.memory_space<vmem>>, vector<1x16xf32>
      %c0_44 = arith.constant 0 : index
      %c0_45 = arith.constant 0 : index
      %81 = vector.load %arg11[%c0_44, %c0_45] : memref<1x16xf32, #tpu.memory_space<vmem>>, vector<1x16xf32>
      %cst_46 = arith.constant dense<0.000000e+00> : vector<8xf32>
      %82 = vector.multi_reduction <add>, %79, %cst_46 [1] : vector<8x16xf32> to vector<8xf32>
      %83 = vector.shape_cast %82 : vector<8xf32> to vector<8x1xf32>
      %cst_47 = arith.constant 1.600000e+01 : f32
      %84 = vector.broadcast %cst_47 : f32 to vector<8x1xf32>
      %85 = arith.divf %83, %84 : vector<8x1xf32>
      %86 = vector.broadcast %85 : vector<8x1xf32> to vector<8x16xf32>
      %87 = arith.subf %79, %86 : vector<8x16xf32>
      %88 = arith.mulf %87, %87 : vector<8x16xf32>
      %cst_48 = arith.constant dense<0.000000e+00> : vector<8xf32>
      %89 = vector.multi_reduction <add>, %88, %cst_48 [1] : vector<8x16xf32> to vector<8xf32>
      %90 = vector.shape_cast %89 : vector<8xf32> to vector<8x1xf32>
      %cst_49 = arith.constant 1.600000e+01 : f32
      %91 = vector.broadcast %cst_49 : f32 to vector<8x1xf32>
      %92 = arith.divf %90, %91 : vector<8x1xf32>
      %93 = vector.broadcast %85 : vector<8x1xf32> to vector<8x16xf32>
      %94 = arith.subf %79, %93 : vector<8x16xf32>
      %cst_50 = arith.constant 9.99999974E-6 : f32
      %95 = vector.broadcast %cst_50 : f32 to vector<8x1xf32>
      %96 = arith.addf %92, %95 : vector<8x1xf32>
      %97 = math.rsqrt %96 : vector<8x1xf32>
      %98 = vector.broadcast %97 : vector<8x1xf32> to vector<8x16xf32>
      %99 = arith.mulf %94, %98 : vector<8x16xf32>
      %100 = vector.broadcast %80 : vector<1x16xf32> to vector<8x16xf32>
      %101 = arith.mulf %99, %100 : vector<8x16xf32>
      %102 = vector.broadcast %81 : vector<1x16xf32> to vector<8x16xf32>
      %103 = arith.addf %101, %102 : vector<8x16xf32>
      %104 = tpu.transpose %103, [1, 0] : vector<8x16xf32> -> vector<16x8xf32>
      %105 = vector.extract_strided_slice %76 {offsets = [0, 16], sizes = [8, 16], strides = [1, 1]} : vector<8x32xf32> to vector<8x16xf32>
      %c0_51 = arith.constant 0 : index
      %c0_52 = arith.constant 0 : index
      %106 = vector.load %arg10[%c0_51, %c0_52] : memref<1x16xf32, #tpu.memory_space<vmem>>, vector<1x16xf32>
      %c0_53 = arith.constant 0 : index
      %c0_54 = arith.constant 0 : index
      %107 = vector.load %arg11[%c0_53, %c0_54] : memref<1x16xf32, #tpu.memory_space<vmem>>, vector<1x16xf32>
      %cst_55 = arith.constant dense<0.000000e+00> : vector<8xf32>
      %108 = vector.multi_reduction <add>, %105, %cst_55 [1] : vector<8x16xf32> to vector<8xf32>
      %109 = vector.shape_cast %108 : vector<8xf32> to vector<8x1xf32>
      %cst_56 = arith.constant 1.600000e+01 : f32
      %110 = vector.broadcast %cst_56 : f32 to vector<8x1xf32>
      %111 = arith.divf %109, %110 : vector<8x1xf32>
      %112 = vector.broadcast %111 : vector<8x1xf32> to vector<8x16xf32>
      %113 = arith.subf %105, %112 : vector<8x16xf32>
      %114 = arith.mulf %113, %113 : vector<8x16xf32>
      %cst_57 = arith.constant dense<0.000000e+00> : vector<8xf32>
      %115 = vector.multi_reduction <add>, %114, %cst_57 [1] : vector<8x16xf32> to vector<8xf32>
      %116 = vector.shape_cast %115 : vector<8xf32> to vector<8x1xf32>
      %cst_58 = arith.constant 1.600000e+01 : f32
      %117 = vector.broadcast %cst_58 : f32 to vector<8x1xf32>
      %118 = arith.divf %116, %117 : vector<8x1xf32>
      %119 = vector.broadcast %111 : vector<8x1xf32> to vector<8x16xf32>
      %120 = arith.subf %105, %119 : vector<8x16xf32>
      %cst_59 = arith.constant 9.99999974E-6 : f32
      %121 = vector.broadcast %cst_59 : f32 to vector<8x1xf32>
      %122 = arith.addf %118, %121 : vector<8x1xf32>
      %123 = math.rsqrt %122 : vector<8x1xf32>
      %124 = vector.broadcast %123 : vector<8x1xf32> to vector<8x16xf32>
      %125 = arith.mulf %120, %124 : vector<8x16xf32>
      %126 = vector.broadcast %106 : vector<1x16xf32> to vector<8x16xf32>
      %127 = arith.mulf %125, %126 : vector<8x16xf32>
      %128 = vector.broadcast %107 : vector<1x16xf32> to vector<8x16xf32>
      %129 = arith.addf %127, %128 : vector<8x16xf32>
      %130 = tpu.transpose %129, [1, 0] : vector<8x16xf32> -> vector<16x8xf32>
      %131 = vector.shape_cast %104 : vector<16x8xf32> to vector<1x16x8xf32>
      %132 = vector.shape_cast %130 : vector<16x8xf32> to vector<1x16x8xf32>
      %133 = tpu.concatenate %131, %132 in 0 : vector<1x16x8xf32>, vector<1x16x8xf32> -> vector<2x16x8xf32>
      %134 = arith.truncf %133 : vector<2x16x8xf32> to vector<2x16x8xbf16>
      %c0_60 = arith.constant 0 : index
      %c0_61 = arith.constant 0 : index
      %c0_62 = arith.constant 0 : index
      %135 = vector.load %arg16[%c0_60, %c0_61, %c0_62] : memref<2x16x8xbf16, #tpu.memory_space<vmem>>, vector<2x16x8xbf16>
      tpu.vector_store %arg16[%c0_60, %c0_61, %c0_62], %134 {strides = array<i32>} : memref<2x16x8xbf16, #tpu.memory_space<vmem>>, vector<2x16x8xbf16>,
      %136 = vector.extract_strided_slice %78 {offsets = [0, 0], sizes = [8, 16], strides = [1, 1]} : vector<8x32xf32> to vector<8x16xf32>
      %c0_63 = arith.constant 0 : index
      %c0_64 = arith.constant 0 : index
      %137 = vector.load %arg12[%c0_63, %c0_64] : memref<1x16xf32, #tpu.memory_space<vmem>>, vector<1x16xf32>
      %c0_65 = arith.constant 0 : index
      %c0_66 = arith.constant 0 : index
      %138 = vector.load %arg13[%c0_65, %c0_66] : memref<1x16xf32, #tpu.memory_space<vmem>>, vector<1x16xf32>
      %cst_67 = arith.constant dense<0.000000e+00> : vector<8xf32>
      %139 = vector.multi_reduction <add>, %136, %cst_67 [1] : vector<8x16xf32> to vector<8xf32>
      %140 = vector.shape_cast %139 : vector<8xf32> to vector<8x1xf32>
      %cst_68 = arith.constant 1.600000e+01 : f32
      %141 = vector.broadcast %cst_68 : f32 to vector<8x1xf32>
      %142 = arith.divf %140, %141 : vector<8x1xf32>
      %143 = vector.broadcast %142 : vector<8x1xf32> to vector<8x16xf32>
      %144 = arith.subf %136, %143 : vector<8x16xf32>
      %145 = arith.mulf %144, %144 : vector<8x16xf32>
      %cst_69 = arith.constant dense<0.000000e+00> : vector<8xf32>
      %146 = vector.multi_reduction <add>, %145, %cst_69 [1] : vector<8x16xf32> to vector<8xf32>
      %147 = vector.shape_cast %146 : vector<8xf32> to vector<8x1xf32>
      %cst_70 = arith.constant 1.600000e+01 : f32
      %148 = vector.broadcast %cst_70 : f32 to vector<8x1xf32>
      %149 = arith.divf %147, %148 : vector<8x1xf32>
      %150 = vector.broadcast %142 : vector<8x1xf32> to vector<8x16xf32>
      %151 = arith.subf %136, %150 : vector<8x16xf32>
      %cst_71 = arith.constant 9.99999974E-6 : f32
      %152 = vector.broadcast %cst_71 : f32 to vector<8x1xf32>
      %153 = arith.addf %149, %152 : vector<8x1xf32>
      %154 = math.rsqrt %153 : vector<8x1xf32>
      %155 = vector.broadcast %154 : vector<8x1xf32> to vector<8x16xf32>
      %156 = arith.mulf %151, %155 : vector<8x16xf32>
      %157 = vector.broadcast %137 : vector<1x16xf32> to vector<8x16xf32>
      %158 = arith.mulf %156, %157 : vector<8x16xf32>
      %159 = vector.broadcast %138 : vector<1x16xf32> to vector<8x16xf32>
      %160 = arith.addf %158, %159 : vector<8x16xf32>
      %161 = vector.extract_strided_slice %78 {offsets = [0, 16], sizes = [8, 16], strides = [1, 1]} : vector<8x32xf32> to vector<8x16xf32>
      %c0_72 = arith.constant 0 : index
      %c0_73 = arith.constant 0 : index
      %162 = vector.load %arg12[%c0_72, %c0_73] : memref<1x16xf32, #tpu.memory_space<vmem>>, vector<1x16xf32>
      %c0_74 = arith.constant 0 : index
      %c0_75 = arith.constant 0 : index
      %163 = vector.load %arg13[%c0_74, %c0_75] : memref<1x16xf32, #tpu.memory_space<vmem>>, vector<1x16xf32>
      %cst_76 = arith.constant dense<0.000000e+00> : vector<8xf32>
      %164 = vector.multi_reduction <add>, %161, %cst_76 [1] : vector<8x16xf32> to vector<8xf32>
      %165 = vector.shape_cast %164 : vector<8xf32> to vector<8x1xf32>
      %cst_77 = arith.constant 1.600000e+01 : f32
      %166 = vector.broadcast %cst_77 : f32 to vector<8x1xf32>
      %167 = arith.divf %165, %166 : vector<8x1xf32>
      %168 = vector.broadcast %167 : vector<8x1xf32> to vector<8x16xf32>
      %169 = arith.subf %161, %168 : vector<8x16xf32>
      %170 = arith.mulf %169, %169 : vector<8x16xf32>
      %cst_78 = arith.constant dense<0.000000e+00> : vector<8xf32>
      %171 = vector.multi_reduction <add>, %170, %cst_78 [1] : vector<8x16xf32> to vector<8xf32>
      %172 = vector.shape_cast %171 : vector<8xf32> to vector<8x1xf32>
      %cst_79 = arith.constant 1.600000e+01 : f32
      %173 = vector.broadcast %cst_79 : f32 to vector<8x1xf32>
      %174 = arith.divf %172, %173 : vector<8x1xf32>
      %175 = vector.broadcast %167 : vector<8x1xf32> to vector<8x16xf32>
      %176 = arith.subf %161, %175 : vector<8x16xf32>
      %cst_80 = arith.constant 9.99999974E-6 : f32
      %177 = vector.broadcast %cst_80 : f32 to vector<8x1xf32>
      %178 = arith.addf %174, %177 : vector<8x1xf32>
      %179 = math.rsqrt %178 : vector<8x1xf32>
      %180 = vector.broadcast %179 : vector<8x1xf32> to vector<8x16xf32>
      %181 = arith.mulf %176, %180 : vector<8x16xf32>
      %182 = vector.broadcast %162 : vector<1x16xf32> to vector<8x16xf32>
      %183 = arith.mulf %181, %182 : vector<8x16xf32>
      %184 = vector.broadcast %163 : vector<1x16xf32> to vector<8x16xf32>
      %185 = arith.addf %183, %184 : vector<8x16xf32>
      %186 = vector.shape_cast %160 : vector<8x16xf32> to vector<1x8x16xf32>
      %187 = vector.shape_cast %185 : vector<8x16xf32> to vector<1x8x16xf32>
      %188 = tpu.concatenate %186, %187 in 0 : vector<1x8x16xf32>, vector<1x8x16xf32> -> vector<2x8x16xf32>
      %189 = arith.truncf %188 : vector<2x8x16xf32> to vector<2x8x16xbf16>
      %c0_81 = arith.constant 0 : index
      %c0_82 = arith.constant 0 : index
      %c0_83 = arith.constant 0 : index
      %190 = vector.load %arg17[%c0_81, %c0_82, %c0_83] : memref<2x8x16xbf16, #tpu.memory_space<vmem>>, vector<2x8x16xbf16>
      tpu.vector_store %arg17[%c0_81, %c0_82, %c0_83], %189 {strides = array<i32>} : memref<2x8x16xbf16, #tpu.memory_space<vmem>>, vector<2x8x16xbf16>,
    } else {
    }
    %c8_i32 = arith.constant 8 : i32
    %3 = arith.muli %arg1, %c8_i32 : i32
    %4 = tpu.assume_multiple %3, 8 : i32
    %5 = arith.index_cast %4 : i32 to index
    %c0 = arith.constant 0 : index
    %6 = vector.load %arg15[%5, %c0] : memref<8x32xbf16, #tpu.memory_space<vmem>>, vector<8x32xbf16>
    %c0_1 = arith.constant 0 : index
    %c0_2 = arith.constant 0 : index
    %7 = vector.load %arg3[%c0_1, %c0_2] : memref<32x32xbf16, #tpu.memory_space<vmem>>, vector<32x32xbf16>
    %cst = arith.constant dense<0.000000e+00> : vector<8x32xf32>
    %8 = tpu.matmul %6, %7, %cst {dimension_numbers = #tpu.dot_dimension_numbers<[1], [0], [0], [1], [0, 0, 1, 1], [], []>} : vector<8x32xbf16>, vector<32x32xbf16>, vector<8x32xf32> -> vector<8x32xf32>
    %cst_3 = arith.constant 2.500000e-01 : f32
    %9 = vector.broadcast %cst_3 : f32 to vector<8x32xf32>
    %10 = arith.mulf %8, %9 : vector<8x32xf32>
    %11 = vector.extract_strided_slice %10 {offsets = [0, 0], sizes = [8, 16], strides = [1, 1]} : vector<8x32xf32> to vector<8x16xf32>
    %12 = vector.extract_strided_slice %10 {offsets = [0, 16], sizes = [8, 16], strides = [1, 1]} : vector<8x32xf32> to vector<8x16xf32>
    %13 = vector.shape_cast %11 : vector<8x16xf32> to vector<1x8x16xf32>
    %14 = vector.shape_cast %12 : vector<8x16xf32> to vector<1x8x16xf32>
    %15 = tpu.concatenate %13, %14 in 0 : vector<1x8x16xf32>, vector<1x8x16xf32> -> vector<2x8x16xf32>
    %16 = arith.truncf %15 : vector<2x8x16xf32> to vector<2x8x16xbf16>
    %c0_4 = arith.constant 0 : index
    %c0_5 = arith.constant 0 : index
    %c0_6 = arith.constant 0 : index
    %17 = vector.load %arg16[%c0_4, %c0_5, %c0_6] : memref<2x16x8xbf16, #tpu.memory_space<vmem>>, vector<2x16x8xbf16>
    "tpu.trace_start"() <{level = 10 : i32, message = "hqd,hdk->hqk"}> : () -> ()
    %cst_7 = arith.constant dense<0.000000e+00> : vector<2x8x8xf32>
    %18 = tpu.matmul %16, %17, %cst_7 {dimension_numbers = #tpu.dot_dimension_numbers<[2], [1], [1], [2], [0, 0, 0, 1, 1, 2], [0], [0]>} : vector<2x8x16xbf16>, vector<2x16x8xbf16>, vector<2x8x8xf32> -> vector<2x8x8xf32>
    "tpu.trace_stop"() : () -> ()
    %cst_8 = arith.constant dense<0xFF800000> : vector<2x8xf32>
    %19 = vector.multi_reduction <maximumf>, %18, %cst_8 [2] : vector<2x8x8xf32> to vector<2x8xf32>
    %20 = vector.shape_cast %19 : vector<2x8xf32> to vector<2x8x1xf32>
    %21 = vector.broadcast %20 : vector<2x8x1xf32> to vector<2x8x8xf32>
    %22 = arith.subf %18, %21 : vector<2x8x8xf32>
    %23 = math.exp %22 : vector<2x8x8xf32>
    %cst_9 = arith.constant dense<0.000000e+00> : vector<2x8xf32>
    %24 = vector.multi_reduction <add>, %23, %cst_9 [2] : vector<2x8x8xf32> to vector<2x8xf32>
    %25 = vector.shape_cast %24 : vector<2x8xf32> to vector<2x8x1xf32>
    %26 = arith.truncf %23 : vector<2x8x8xf32> to vector<2x8x8xbf16>
    %c0_10 = arith.constant 0 : index
    %c0_11 = arith.constant 0 : index
    %c0_12 = arith.constant 0 : index
    %27 = vector.load %arg17[%c0_10, %c0_11, %c0_12] : memref<2x8x16xbf16, #tpu.memory_space<vmem>>, vector<2x8x16xbf16>
    "tpu.trace_start"() <{level = 10 : i32, message = "hqk,hkd->hqd"}> : () -> ()
    %cst_13 = arith.constant dense<0.000000e+00> : vector<2x8x16xf32>
    %28 = tpu.matmul %26, %27, %cst_13 {dimension_numbers = #tpu.dot_dimension_numbers<[2], [1], [1], [2], [0, 0, 0, 1, 1, 2], [0], [0]>} : vector<2x8x8xbf16>, vector<2x8x16xbf16>, vector<2x8x16xf32> -> vector<2x8x16xf32>
    "tpu.trace_stop"() : () -> ()
    %29 = tpu.reciprocal %25 {approx = true} : vector<2x8x1xf32> -> vector<2x8x1xf32>
    %30 = vector.broadcast %29 : vector<2x8x1xf32> to vector<2x8x16xf32>
    %31 = arith.mulf %28, %30 : vector<2x8x16xf32>
    %32 = vector.extract_strided_slice %31 {offsets = [0, 0, 0], sizes = [1, 8, 16], strides = [1, 1, 1]} : vector<2x8x16xf32> to vector<1x8x16xf32>
    %33 = vector.shape_cast %32 : vector<1x8x16xf32> to vector<8x16xf32>
    %34 = vector.extract_strided_slice %31 {offsets = [1, 0, 0], sizes = [1, 8, 16], strides = [1, 1, 1]} : vector<2x8x16xf32> to vector<1x8x16xf32>
    %35 = vector.shape_cast %34 : vector<1x8x16xf32> to vector<8x16xf32>
    %36 = tpu.concatenate %33, %35 in 1 : vector<8x16xf32>, vector<8x16xf32> -> vector<8x32xf32>
    %37 = arith.truncf %36 : vector<8x32xf32> to vector<8x32xbf16>
    %c0_14 = arith.constant 0 : index
    %c0_15 = arith.constant 0 : index
    %38 = vector.load %arg6[%c0_14, %c0_15] : memref<32x32xbf16, #tpu.memory_space<vmem>>, vector<32x32xbf16>
    %cst_16 = arith.constant dense<0.000000e+00> : vector<8x32xf32>
    %39 = tpu.matmul %37, %38, %cst_16 {dimension_numbers = #tpu.dot_dimension_numbers<[1], [0], [0], [1], [0, 0, 1, 1], [], []>} : vector<8x32xbf16>, vector<32x32xbf16>, vector<8x32xf32> -> vector<8x32xf32>
    %c0_17 = arith.constant 0 : index
    %c0_18 = arith.constant 0 : index
    %40 = vector.load %arg7[%c0_17, %c0_18] : memref<1x32xf32, #tpu.memory_space<vmem>>, vector<1x32xf32>
    %41 = vector.broadcast %40 : vector<1x32xf32> to vector<8x32xf32>
    %42 = arith.addf %39, %41 : vector<8x32xf32>
    %c0_19 = arith.constant 0 : index
    %c0_20 = arith.constant 0 : index
    %c0_21 = arith.constant 0 : index
    %43 = vector.load %arg14[%c0_19, %c0_20, %c0_21] : memref<1x8x32xf32, #tpu.memory_space<vmem>>, vector<1x8x32xf32>
    %44 = vector.shape_cast %43 : vector<1x8x32xf32> to vector<8x32xf32>
    %45 = vector.shape_cast %42 : vector<8x32xf32> to vector<1x8x32xf32>
    tpu.vector_store %arg14[%c0_19, %c0_20, %c0_21], %45 {strides = array<i32>} : memref<1x8x32xf32, #tpu.memory_space<vmem>>, vector<1x8x32xf32>,
    return
  }
  func.func @transform_0(%arg0: i32, %arg1: i32) -> (i32, i32, i32) {
    %c0_i32 = arith.constant 0 : i32
    %c0_i32_0 = arith.constant 0 : i32
    %c0_i32_1 = arith.constant 0 : i32
    return %arg0, %c0_i32, %c0_i32_0 : i32, i32, i32
  }
  func.func @transform_1(%arg0: i32, %arg1: i32) -> (i32, i32) {
    %c0_i32 = arith.constant 0 : i32
    %c0_i32_0 = arith.constant 0 : i32
    %c0_i32_1 = arith.constant 0 : i32
    return %c0_i32, %c0_i32_0 : i32, i32
  }
  func.func @transform_2(%arg0: i32, %arg1: i32) -> (i32, i32) {
    %c0_i32 = arith.constant 0 : i32
    %c0_i32_0 = arith.constant 0 : i32
    %c0_i32_1 = arith.constant 0 : i32
    return %c0_i32, %c0_i32_0 : i32, i32
  }
  func.func @transform_3(%arg0: i32, %arg1: i32) -> (i32, i32) {
    %c0_i32 = arith.constant 0 : i32
    %c0_i32_0 = arith.constant 0 : i32
    %c0_i32_1 = arith.constant 0 : i32
    return %c0_i32, %c0_i32_0 : i32, i32
  }
  func.func @transform_4(%arg0: i32, %arg1: i32) -> (i32, i32) {
    %c0_i32 = arith.constant 0 : i32
    %c0_i32_0 = arith.constant 0 : i32
    %c0_i32_1 = arith.constant 0 : i32
    return %c0_i32, %c0_i32_0 : i32, i32
  }
  func.func @transform_5(%arg0: i32, %arg1: i32) -> (i32, i32) {
    %c0_i32 = arith.constant 0 : i32
    %c0_i32_0 = arith.constant 0 : i32
    %c0_i32_1 = arith.constant 0 : i32
    return %c0_i32, %c0_i32_0 : i32, i32
  }
  func.func @transform_6(%arg0: i32, %arg1: i32) -> (i32, i32) {
    %c0_i32 = arith.constant 0 : i32
    %c0_i32_0 = arith.constant 0 : i32
    %c0_i32_1 = arith.constant 0 : i32
    return %c0_i32, %c0_i32_0 : i32, i32
  }
  func.func @transform_7(%arg0: i32, %arg1: i32) -> (i32, i32) {
    %c0_i32 = arith.constant 0 : i32
    %c0_i32_0 = arith.constant 0 : i32
    %c0_i32_1 = arith.constant 0 : i32
    return %c0_i32, %c0_i32_0 : i32, i32
  }
  func.func @transform_8(%arg0: i32, %arg1: i32) -> (i32, i32) {
    %c0_i32 = arith.constant 0 : i32
    %c0_i32_0 = arith.constant 0 : i32
    %c0_i32_1 = arith.constant 0 : i32
    return %c0_i32, %c0_i32_0 : i32, i32
  }
  func.func @transform_9(%arg0: i32, %arg1: i32) -> (i32, i32) {
    %c0_i32 = arith.constant 0 : i32
    %c0_i32_0 = arith.constant 0 : i32
    %c0_i32_1 = arith.constant 0 : i32
    return %c0_i32, %c0_i32_0 : i32, i32
  }
  func.func @transform_10(%arg0: i32, %arg1: i32) -> (i32, i32) {
    %c0_i32 = arith.constant 0 : i32
    %c0_i32_0 = arith.constant 0 : i32
    %c0_i32_1 = arith.constant 0 : i32
    return %c0_i32, %c0_i32_0 : i32, i32
  }
  func.func @transform_11(%arg0: i32, %arg1: i32) -> (i32, i32) {
    %c0_i32 = arith.constant 0 : i32
    %c0_i32_0 = arith.constant 0 : i32
    %c0_i32_1 = arith.constant 0 : i32
    return %c0_i32, %c0_i32_0 : i32, i32
  }
  func.func @transform_12(%arg0: i32, %arg1: i32) -> (i32, i32, i32) {
    %c0_i32 = arith.constant 0 : i32
    %c0_i32_0 = arith.constant 0 : i32
    return %arg0, %arg1, %c0_i32 : i32, i32, i32
  }
}

module attributes {stable_mosaic.version = 11 : i64} {
  func.func @attention_kernel(%arg0: i32, %arg1: i32, %arg2: memref<1x8x32xf32, #tpu.memory_space<vmem>>, %arg3: memref<32x32xbf16, #tpu.memory_space<vmem>>, %arg4: memref<32x32xbf16, #tpu.memory_space<vmem>>, %arg5: memref<32x32xbf16, #tpu.memory_space<vmem>>, %arg6: memref<32x32xbf16, #tpu.memory_space<vmem>>, %arg7: memref<1x32xf32, #tpu.memory_space<vmem>>, %arg8: memref<1x32xf32, #tpu.memory_space<vmem>>, %arg9: memref<1x32xf32, #tpu.memory_space<vmem>>, %arg10: memref<1x16xf32, #tpu.memory_space<vmem>>, %arg11: memref<1x16xf32, #tpu.memory_space<vmem>>, %arg12: memref<1x16xf32, #tpu.memory_space<vmem>>, %arg13: memref<1x16xf32, #tpu.memory_space<vmem>>, %arg14: memref<1x8x32xf32, #tpu.memory_space<vmem>>, %arg15: memref<8x32xbf16, #tpu.memory_space<vmem>>, %arg16: memref<2x16x8xbf16, #tpu.memory_space<vmem>>, %arg17: memref<2x8x16xbf16, #tpu.memory_space<vmem>>) attributes {dimension_semantics = [#tpu.dimension_semantics<parallel>, #tpu.dimension_semantics<arbitrary>], iteration_bounds = array<i64: 2, 1>, scalar_prefetch = 0 : i64, scratch_operands = 3 : i64, tpu.core_type = #tpu.core_type<tc>, window_params = [{transform_indices = @transform_0, window_bounds = array<i64: 1, 8, 32>}, {pipeline_mode = #tpu.pipeline_mode<synchronous>, transform_indices = @transform_1, window_bounds = array<i64: 32, 32>}, {pipeline_mode = #tpu.pipeline_mode<synchronous>, transform_indices = @transform_2, window_bounds = array<i64: 32, 32>}, {pipeline_mode = #tpu.pipeline_mode<synchronous>, transform_indices = @transform_3, window_bounds = array<i64: 32, 32>}, {pipeline_mode = #tpu.pipeline_mode<synchronous>, transform_indices = @transform_4, window_bounds = array<i64: 32, 32>}, {pipeline_mode = #tpu.pipeline_mode<synchronous>, transform_indices = @transform_5, window_bounds = array<i64: 1, 32>}, {pipeline_mode = #tpu.pipeline_mode<synchronous>, transform_indices = @transform_6, window_bounds = array<i64: 1, 32>}, {pipeline_mode = #tpu.pipeline_mode<synchronous>, transform_indices = @transform_7, window_bounds = array<i64: 1, 32>}, {pipeline_mode = #tpu.pipeline_mode<synchronous>, transform_indices = @transform_8, window_bounds = array<i64: 1, 16>}, {pipeline_mode = #tpu.pipeline_mode<synchronous>, transform_indices = @transform_9, window_bounds = array<i64: 1, 16>}, {pipeline_mode = #tpu.pipeline_mode<synchronous>, transform_indices = @transform_10, window_bounds = array<i64: 1, 16>}, {pipeline_mode = #tpu.pipeline_mode<synchronous>, transform_indices = @transform_11, window_bounds = array<i64: 1, 16>}, {transform_indices = @transform_12, window_bounds = array<i64: 1, 8, 32>}]} {
    %c0_i32 = arith.constant 0 : i32
    %0 = arith.cmpi eq, %arg1, %c0_i32 : i32
    %1 = arith.extui %0 : i1 to i32
    %c0_i32_0 = arith.constant 0 : i32
    %2 = arith.cmpi ne, %1, %c0_i32_0 : i32
    scf.if %2 {
      %c0_22 = arith.constant 0 : index
      %c0_23 = arith.constant 0 : index
      %c0_24 = arith.constant 0 : index
      %46 = vector.load %arg2[%c0_22, %c0_23, %c0_24] : memref<1x8x32xf32, #tpu.memory_space<vmem>>, vector<1x8x32xf32>
      %47 = vector.shape_cast %46 : vector<1x8x32xf32> to vector<8x32xf32>
      %c0_25 = arith.constant 0 : index
      %c0_26 = arith.constant 0 : index
      %48 = vector.load %arg8[%c0_25, %c0_26] : memref<1x32xf32, #tpu.memory_space<vmem>>, vector<1x32xf32>
      %c0_27 = arith.constant 0 : index
      %c0_28 = arith.constant 0 : index
      %49 = vector.load %arg9[%c0_27, %c0_28] : memref<1x32xf32, #tpu.memory_space<vmem>>, vector<1x32xf32>
      %cst_29 = arith.constant dense<0.000000e+00> : vector<8xf32>
      %50 = vector.multi_reduction <add>, %47, %cst_29 [1] : vector<8x32xf32> to vector<8xf32>
      %51 = vector.shape_cast %50 : vector<8xf32> to vector<8x1xf32>
      %cst_30 = arith.constant 3.200000e+01 : f32
      %52 = vector.broadcast %cst_30 : f32 to vector<8x1xf32>
      %53 = arith.divf %51, %52 : vector<8x1xf32>
      %54 = vector.broadcast %53 : vector<8x1xf32> to vector<8x32xf32>
      %55 = arith.subf %47, %54 : vector<8x32xf32>
      %56 = arith.mulf %55, %55 : vector<8x32xf32>
      %cst_31 = arith.constant dense<0.000000e+00> : vector<8xf32>
      %57 = vector.multi_reduction <add>, %56, %cst_31 [1] : vector<8x32xf32> to vector<8xf32>
      %58 = vector.shape_cast %57 : vector<8xf32> to vector<8x1xf32>
      %cst_32 = arith.constant 3.200000e+01 : f32
      %59 = vector.broadcast %cst_32 : f32 to vector<8x1xf32>
      %60 = arith.divf %58, %59 : vector<8x1xf32>
      %61 = vector.broadcast %53 : vector<8x1xf32> to vector<8x32xf32>
      %62 = arith.subf %47, %61 : vector<8x32xf32>
      %cst_33 = arith.constant 9.99999974E-6 : f32
      %63 = vector.broadcast %cst_33 : f32 to vector<8x1xf32>
      %64 = arith.addf %60, %63 : vector<8x1xf32>
      %65 = math.rsqrt %64 : vector<8x1xf32>
      %66 = vector.broadcast %65 : vector<8x1xf32> to vector<8x32xf32>
      %67 = arith.mulf %62, %66 : vector<8x32xf32>
      %68 = vector.broadcast %48 : vector<1x32xf32> to vector<8x32xf32>
      %69 = arith.mulf %67, %68 : vector<8x32xf32>
      %70 = vector.broadcast %49 : vector<1x32xf32> to vector<8x32xf32>
      %71 = arith.addf %69, %70 : vector<8x32xf32>
      %72 = arith.truncf %71 : vector<8x32xf32> to vector<8x32xbf16>
      %c0_34 = arith.constant 0 : index
      %c0_35 = arith.constant 0 : index
      %73 = vector.load %arg15[%c0_34, %c0_35] : memref<8x32xbf16, #tpu.memory_space<vmem>>, vector<8x32xbf16>
      tpu.vector_store %arg15[%c0_34, %c0_35], %72 {strides = array<i32>} : memref<8x32xbf16, #tpu.memory_space<vmem>>, vector<8x32xbf16>,
      %74 = arith.truncf %71 : vector<8x32xf32> to vector<8x32xbf16>
      %c0_36 = arith.constant 0 : index
      %c0_37 = arith.constant 0 : index
      %75 = vector.load %arg4[%c0_36, %c0_37] : memref<32x32xbf16, #tpu.memory_space<vmem>>, vector<32x32xbf16>
      %cst_38 = arith.constant dense<0.000000e+00> : vector<8x32xf32>
      %76 = tpu.matmul %74, %75, %cst_38 {dimension_numbers = #tpu.dot_dimension_numbers<[1], [0], [0], [1], [0, 0, 1, 1], [], []>} : vector<8x32xbf16>, vector<32x32xbf16>, vector<8x32xf32> -> vector<8x32xf32>
      %c0_39 = arith.constant 0 : index
      %c0_40 = arith.constant 0 : index
      %77 = vector.load %arg5[%c0_39, %c0_40] : memref<32x32xbf16, #tpu.memory_space<vmem>>, vector<32x32xbf16>
      %cst_41 = arith.constant dense<0.000000e+00> : vector<8x32xf32>
      %78 = tpu.matmul %74, %77, %cst_41 {dimension_numbers = #tpu.dot_dimension_numbers<[1], [0], [0], [1], [0, 0, 1, 1], [], []>} : vector<8x32xbf16>, vector<32x32xbf16>, vector<8x32xf32> -> vector<8x32xf32>
      %79 = vector.extract_strided_slice %76 {offsets = [0, 0], sizes = [8, 16], strides = [1, 1]} : vector<8x32xf32> to vector<8x16xf32>
      %c0_42 = arith.constant 0 : index
      %c0_43 = arith.constant 0 : index
      %80 = vector.load %arg10[%c0_42, %c0_43] : memref<1x16xf32, #tpu.memory_space<vmem>>, vector<1x16xf32>
      %c0_44 = arith.constant 0 : index
      %c0_45 = arith.constant 0 : index
      %81 = vector.load %arg11[%c0_44, %c0_45] : memref<1x16xf32, #tpu.memory_space<vmem>>, vector<1x16xf32>
      %cst_46 = arith.constant dense<0.000000e+00> : vector<8xf32>
      %82 = vector.multi_reduction <add>, %79, %cst_46 [1] : vector<8x16xf32> to vector<8xf32>
      %83 = vector.shape_cast %82 : vector<8xf32> to vector<8x1xf32>
      %cst_47 = arith.constant 1.600000e+01 : f32
      %84 = vector.broadcast %cst_47 : f32 to vector<8x1xf32>
      %85 = arith.divf %83, %84 : vector<8x1xf32>
      %86 = vector.broadcast %85 : vector<8x1xf32> to vector<8x16xf32>
      %87 = arith.subf %79, %86 : vector<8x16xf32>
      %88 = arith.mulf %87, %87 : vector<8x16xf32>
      %cst_48 = arith.constant dense<0.000000e+00> : vector<8xf32>
      %89 = vector.multi_reduction <add>, %88, %cst_48 [1] : vector<8x16xf32> to vector<8xf32>
      %90 = vector.shape_cast %89 : vector<8xf32> to vector<8x1xf32>
      %cst_49 = arith.constant 1.600000e+01 : f32
      %91 = vector.broadcast %cst_49 : f32 to vector<8x1xf32>
      %92 = arith.divf %90, %91 : vector<8x1xf32>
      %93 = vector.broadcast %85 : vector<8x1xf32> to vector<8x16xf32>
      %94 = arith.subf %79, %93 : vector<8x16xf32>
      %cst_50 = arith.constant 9.99999974E-6 : f32
      %95 = vector.broadcast %cst_50 : f32 to vector<8x1xf32>
      %96 = arith.addf %92, %95 : vector<8x1xf32>
      %97 = math.rsqrt %96 : vector<8x1xf32>
      %98 = vector.broadcast %97 : vector<8x1xf32> to vector<8x16xf32>
      %99 = arith.mulf %94, %98 : vector<8x16xf32>
      %100 = vector.broadcast %80 : vector<1x16xf32> to vector<8x16xf32>
      %101 = arith.mulf %99, %100 : vector<8x16xf32>
      %102 = vector.broadcast %81 : vector<1x16xf32> to vector<8x16xf32>
      %103 = arith.addf %101, %102 : vector<8x16xf32>
      %104 = tpu.transpose %103, [1, 0] : vector<8x16xf32> -> vector<16x8xf32>
      %105 = vector.extract_strided_slice %76 {offsets = [0, 16], sizes = [8, 16], strides = [1, 1]} : vector<8x32xf32> to vector<8x16xf32>
      %c0_51 = arith.constant 0 : index
      %c0_52 = arith.constant 0 : index
      %106 = vector.load %arg10[%c0_51, %c0_52] : memref<1x16xf32, #tpu.memory_space<vmem>>, vector<1x16xf32>
      %c0_53 = arith.constant 0 : index
      %c0_54 = arith.constant 0 : index
      %107 = vector.load %arg11[%c0_53, %c0_54] : memref<1x16xf32, #tpu.memory_space<vmem>>, vector<1x16xf32>
      %cst_55 = arith.constant dense<0.000000e+00> : vector<8xf32>
      %108 = vector.multi_reduction <add>, %105, %cst_55 [1] : vector<8x16xf32> to vector<8xf32>
      %109 = vector.shape_cast %108 : vector<8xf32> to vector<8x1xf32>
      %cst_56 = arith.constant 1.600000e+01 : f32
      %110 = vector.broadcast %cst_56 : f32 to vector<8x1xf32>
      %111 = arith.divf %109, %110 : vector<8x1xf32>
      %112 = vector.broadcast %111 : vector<8x1xf32> to vector<8x16xf32>
      %113 = arith.subf %105, %112 : vector<8x16xf32>
      %114 = arith.mulf %113, %113 : vector<8x16xf32>
      %cst_57 = arith.constant dense<0.000000e+00> : vector<8xf32>
      %115 = vector.multi_reduction <add>, %114, %cst_57 [1] : vector<8x16xf32> to vector<8xf32>
      %116 = vector.shape_cast %115 : vector<8xf32> to vector<8x1xf32>
      %cst_58 = arith.constant 1.600000e+01 : f32
      %117 = vector.broadcast %cst_58 : f32 to vector<8x1xf32>
      %118 = arith.divf %116, %117 : vector<8x1xf32>
      %119 = vector.broadcast %111 : vector<8x1xf32> to vector<8x16xf32>
      %120 = arith.subf %105, %119 : vector<8x16xf32>
      %cst_59 = arith.constant 9.99999974E-6 : f32
      %121 = vector.broadcast %cst_59 : f32 to vector<8x1xf32>
      %122 = arith.addf %118, %121 : vector<8x1xf32>
      %123 = math.rsqrt %122 : vector<8x1xf32>
      %124 = vector.broadcast %123 : vector<8x1xf32> to vector<8x16xf32>
      %125 = arith.mulf %120, %124 : vector<8x16xf32>
      %126 = vector.broadcast %106 : vector<1x16xf32> to vector<8x16xf32>
      %127 = arith.mulf %125, %126 : vector<8x16xf32>
      %128 = vector.broadcast %107 : vector<1x16xf32> to vector<8x16xf32>
      %129 = arith.addf %127, %128 : vector<8x16xf32>
      %130 = tpu.transpose %129, [1, 0] : vector<8x16xf32> -> vector<16x8xf32>
      %131 = vector.shape_cast %104 : vector<16x8xf32> to vector<1x16x8xf32>
      %132 = vector.shape_cast %130 : vector<16x8xf32> to vector<1x16x8xf32>
      %133 = tpu.concatenate %131, %132 in 0 : vector<1x16x8xf32>, vector<1x16x8xf32> -> vector<2x16x8xf32>
      %134 = arith.truncf %133 : vector<2x16x8xf32> to vector<2x16x8xbf16>
      %c0_60 = arith.constant 0 : index
      %c0_61 = arith.constant 0 : index
      %c0_62 = arith.constant 0 : index
      %135 = vector.load %arg16[%c0_60, %c0_61, %c0_62] : memref<2x16x8xbf16, #tpu.memory_space<vmem>>, vector<2x16x8xbf16>
      tpu.vector_store %arg16[%c0_60, %c0_61, %c0_62], %134 {strides = array<i32>} : memref<2x16x8xbf16, #tpu.memory_space<vmem>>, vector<2x16x8xbf16>,
      %136 = vector.extract_strided_slice %78 {offsets = [0, 0], sizes = [8, 16], strides = [1, 1]} : vector<8x32xf32> to vector<8x16xf32>
      %c0_63 = arith.constant 0 : index
      %c0_64 = arith.constant 0 : index
      %137 = vector.load %arg12[%c0_63, %c0_64] : memref<1x16xf32, #tpu.memory_space<vmem>>, vector<1x16xf32>
      %c0_65 = arith.constant 0 : index
      %c0_66 = arith.constant 0 : index
      %138 = vector.load %arg13[%c0_65, %c0_66] : memref<1x16xf32, #tpu.memory_space<vmem>>, vector<1x16xf32>
      %cst_67 = arith.constant dense<0.000000e+00> : vector<8xf32>
      %139 = vector.multi_reduction <add>, %136, %cst_67 [1] : vector<8x16xf32> to vector<8xf32>
      %140 = vector.shape_cast %139 : vector<8xf32> to vector<8x1xf32>
      %cst_68 = arith.constant 1.600000e+01 : f32
      %141 = vector.broadcast %cst_68 : f32 to vector<8x1xf32>
      %142 = arith.divf %140, %141 : vector<8x1xf32>
      %143 = vector.broadcast %142 : vector<8x1xf32> to vector<8x16xf32>
      %144 = arith.subf %136, %143 : vector<8x16xf32>
      %145 = arith.mulf %144, %144 : vector<8x16xf32>
      %cst_69 = arith.constant dense<0.000000e+00> : vector<8xf32>
      %146 = vector.multi_reduction <add>, %145, %cst_69 [1] : vector<8x16xf32> to vector<8xf32>
      %147 = vector.shape_cast %146 : vector<8xf32> to vector<8x1xf32>
      %cst_70 = arith.constant 1.600000e+01 : f32
      %148 = vector.broadcast %cst_70 : f32 to vector<8x1xf32>
      %149 = arith.divf %147, %148 : vector<8x1xf32>
      %150 = vector.broadcast %142 : vector<8x1xf32> to vector<8x16xf32>
      %151 = arith.subf %136, %150 : vector<8x16xf32>
      %cst_71 = arith.constant 9.99999974E-6 : f32
      %152 = vector.broadcast %cst_71 : f32 to vector<8x1xf32>
      %153 = arith.addf %149, %152 : vector<8x1xf32>
      %154 = math.rsqrt %153 : vector<8x1xf32>
      %155 = vector.broadcast %154 : vector<8x1xf32> to vector<8x16xf32>
      %156 = arith.mulf %151, %155 : vector<8x16xf32>
      %157 = vector.broadcast %137 : vector<1x16xf32> to vector<8x16xf32>
      %158 = arith.mulf %156, %157 : vector<8x16xf32>
      %159 = vector.broadcast %138 : vector<1x16xf32> to vector<8x16xf32>
      %160 = arith.addf %158, %159 : vector<8x16xf32>
      %161 = vector.extract_strided_slice %78 {offsets = [0, 16], sizes = [8, 16], strides = [1, 1]} : vector<8x32xf32> to vector<8x16xf32>
      %c0_72 = arith.constant 0 : index
      %c0_73 = arith.constant 0 : index
      %162 = vector.load %arg12[%c0_72, %c0_73] : memref<1x16xf32, #tpu.memory_space<vmem>>, vector<1x16xf32>
      %c0_74 = arith.constant 0 : index
      %c0_75 = arith.constant 0 : index
      %163 = vector.load %arg13[%c0_74, %c0_75] : memref<1x16xf32, #tpu.memory_space<vmem>>, vector<1x16xf32>
      %cst_76 = arith.constant dense<0.000000e+00> : vector<8xf32>
      %164 = vector.multi_reduction <add>, %161, %cst_76 [1] : vector<8x16xf32> to vector<8xf32>
      %165 = vector.shape_cast %164 : vector<8xf32> to vector<8x1xf32>
      %cst_77 = arith.constant 1.600000e+01 : f32
      %166 = vector.broadcast %cst_77 : f32 to vector<8x1xf32>
      %167 = arith.divf %165, %166 : vector<8x1xf32>
      %168 = vector.broadcast %167 : vector<8x1xf32> to vector<8x16xf32>
      %169 = arith.subf %161, %168 : vector<8x16xf32>
      %170 = arith.mulf %169, %169 : vector<8x16xf32>
      %cst_78 = arith.constant dense<0.000000e+00> : vector<8xf32>
      %171 = vector.multi_reduction <add>, %170, %cst_78 [1] : vector<8x16xf32> to vector<8xf32>
      %172 = vector.shape_cast %171 : vector<8xf32> to vector<8x1xf32>
      %cst_79 = arith.constant 1.600000e+01 : f32
      %173 = vector.broadcast %cst_79 : f32 to vector<8x1xf32>
      %174 = arith.divf %172, %173 : vector<8x1xf32>
      %175 = vector.broadcast %167 : vector<8x1xf32> to vector<8x16xf32>
      %176 = arith.subf %161, %175 : vector<8x16xf32>
      %cst_80 = arith.constant 9.99999974E-6 : f32
      %177 = vector.broadcast %cst_80 : f32 to vector<8x1xf32>
      %178 = arith.addf %174, %177 : vector<8x1xf32>
      %179 = math.rsqrt %178 : vector<8x1xf32>
      %180 = vector.broadcast %179 : vector<8x1xf32> to vector<8x16xf32>
      %181 = arith.mulf %176, %180 : vector<8x16xf32>
      %182 = vector.broadcast %162 : vector<1x16xf32> to vector<8x16xf32>
      %183 = arith.mulf %181, %182 : vector<8x16xf32>
      %184 = vector.broadcast %163 : vector<1x16xf32> to vector<8x16xf32>
      %185 = arith.addf %183, %184 : vector<8x16xf32>
      %186 = vector.shape_cast %160 : vector<8x16xf32> to vector<1x8x16xf32>
      %187 = vector.shape_cast %185 : vector<8x16xf32> to vector<1x8x16xf32>
      %188 = tpu.concatenate %186, %187 in 0 : vector<1x8x16xf32>, vector<1x8x16xf32> -> vector<2x8x16xf32>
      %189 = arith.truncf %188 : vector<2x8x16xf32> to vector<2x8x16xbf16>
      %c0_81 = arith.constant 0 : index
      %c0_82 = arith.constant 0 : index
      %c0_83 = arith.constant 0 : index
      %190 = vector.load %arg17[%c0_81, %c0_82, %c0_83] : memref<2x8x16xbf16, #tpu.memory_space<vmem>>, vector<2x8x16xbf16>
      tpu.vector_store %arg17[%c0_81, %c0_82, %c0_83], %189 {strides = array<i32>} : memref<2x8x16xbf16, #tpu.memory_space<vmem>>, vector<2x8x16xbf16>,
    } else {
    }
    %c8_i32 = arith.constant 8 : i32
    %3 = arith.muli %arg1, %c8_i32 : i32
    %4 = tpu.assume_multiple %3, 8 : i32
    %5 = arith.index_cast %4 : i32 to index
    %c0 = arith.constant 0 : index
    %6 = vector.load %arg15[%5, %c0] : memref<8x32xbf16, #tpu.memory_space<vmem>>, vector<8x32xbf16>
    %c0_1 = arith.constant 0 : index
    %c0_2 = arith.constant 0 : index
    %7 = vector.load %arg3[%c0_1, %c0_2] : memref<32x32xbf16, #tpu.memory_space<vmem>>, vector<32x32xbf16>
    %cst = arith.constant dense<0.000000e+00> : vector<8x32xf32>
    %8 = tpu.matmul %6, %7, %cst {dimension_numbers = #tpu.dot_dimension_numbers<[1], [0], [0], [1], [0, 0, 1, 1], [], []>} : vector<8x32xbf16>, vector<32x32xbf16>, vector<8x32xf32> -> vector<8x32xf32>
    %cst_3 = arith.constant 2.500000e-01 : f32
    %9 = vector.broadcast %cst_3 : f32 to vector<8x32xf32>
    %10 = arith.mulf %8, %9 : vector<8x32xf32>
    %11 = vector.extract_strided_slice %10 {offsets = [0, 0], sizes = [8, 16], strides = [1, 1]} : vector<8x32xf32> to vector<8x16xf32>
    %12 = vector.extract_strided_slice %10 {offsets = [0, 16], sizes = [8, 16], strides = [1, 1]} : vector<8x32xf32> to vector<8x16xf32>
    %13 = vector.shape_cast %11 : vector<8x16xf32> to vector<1x8x16xf32>
    %14 = vector.shape_cast %12 : vector<8x16xf32> to vector<1x8x16xf32>
    %15 = tpu.concatenate %13, %14 in 0 : vector<1x8x16xf32>, vector<1x8x16xf32> -> vector<2x8x16xf32>
    %16 = arith.truncf %15 : vector<2x8x16xf32> to vector<2x8x16xbf16>
    %c0_4 = arith.constant 0 : index
    %c0_5 = arith.constant 0 : index
    %c0_6 = arith.constant 0 : index
    %17 = vector.load %arg16[%c0_4, %c0_5, %c0_6] : memref<2x16x8xbf16, #tpu.memory_space<vmem>>, vector<2x16x8xbf16>
    "tpu.trace_start"() <{level = 10 : i32, message = "hqd,hdk->hqk"}> : () -> ()
    %cst_7 = arith.constant dense<0.000000e+00> : vector<2x8x8xf32>
    %18 = tpu.matmul %16, %17, %cst_7 {dimension_numbers = #tpu.dot_dimension_numbers<[2], [1], [1], [2], [0, 0, 0, 1, 1, 2], [0], [0]>} : vector<2x8x16xbf16>, vector<2x16x8xbf16>, vector<2x8x8xf32> -> vector<2x8x8xf32>
    "tpu.trace_stop"() : () -> ()
    %cst_8 = arith.constant dense<0xFF800000> : vector<2x8xf32>
    %19 = vector.multi_reduction <maximumf>, %18, %cst_8 [2] : vector<2x8x8xf32> to vector<2x8xf32>
    %20 = vector.shape_cast %19 : vector<2x8xf32> to vector<2x8x1xf32>
    %21 = vector.broadcast %20 : vector<2x8x1xf32> to vector<2x8x8xf32>
    %22 = arith.subf %18, %21 : vector<2x8x8xf32>
    %23 = math.exp %22 : vector<2x8x8xf32>
    %cst_9 = arith.constant dense<0.000000e+00> : vector<2x8xf32>
    %24 = vector.multi_reduction <add>, %23, %cst_9 [2] : vector<2x8x8xf32> to vector<2x8xf32>
    %25 = vector.shape_cast %24 : vector<2x8xf32> to vector<2x8x1xf32>
    %26 = arith.truncf %23 : vector<2x8x8xf32> to vector<2x8x8xbf16>
    %c0_10 = arith.constant 0 : index
    %c0_11 = arith.constant 0 : index
    %c0_12 = arith.constant 0 : index
    %27 = vector.load %arg17[%c0_10, %c0_11, %c0_12] : memref<2x8x16xbf16, #tpu.memory_space<vmem>>, vector<2x8x16xbf16>
    "tpu.trace_start"() <{level = 10 : i32, message = "hqk,hkd->hqd"}> : () -> ()
    %cst_13 = arith.constant dense<0.000000e+00> : vector<2x8x16xf32>
    %28 = tpu.matmul %26, %27, %cst_13 {dimension_numbers = #tpu.dot_dimension_numbers<[2], [1], [1], [2], [0, 0, 0, 1, 1, 2], [0], [0]>} : vector<2x8x8xbf16>, vector<2x8x16xbf16>, vector<2x8x16xf32> -> vector<2x8x16xf32>
    "tpu.trace_stop"() : () -> ()
    %29 = tpu.reciprocal %25 {approx = true} : vector<2x8x1xf32> -> vector<2x8x1xf32>
    %30 = vector.broadcast %29 : vector<2x8x1xf32> to vector<2x8x16xf32>
    %31 = arith.mulf %28, %30 : vector<2x8x16xf32>
    %32 = vector.extract_strided_slice %31 {offsets = [0, 0, 0], sizes = [1, 8, 16], strides = [1, 1, 1]} : vector<2x8x16xf32> to vector<1x8x16xf32>
    %33 = vector.shape_cast %32 : vector<1x8x16xf32> to vector<8x16xf32>
    %34 = vector.extract_strided_slice %31 {offsets = [1, 0, 0], sizes = [1, 8, 16], strides = [1, 1, 1]} : vector<2x8x16xf32> to vector<1x8x16xf32>
    %35 = vector.shape_cast %34 : vector<1x8x16xf32> to vector<8x16xf32>
    %36 = tpu.concatenate %33, %35 in 1 : vector<8x16xf32>, vector<8x16xf32> -> vector<8x32xf32>
    %37 = arith.truncf %36 : vector<8x32xf32> to vector<8x32xbf16>
    %c0_14 = arith.constant 0 : index
    %c0_15 = arith.constant 0 : index
    %38 = vector.load %arg6[%c0_14, %c0_15] : memref<32x32xbf16, #tpu.memory_space<vmem>>, vector<32x32xbf16>
    %cst_16 = arith.constant dense<0.000000e+00> : vector<8x32xf32>
    %39 = tpu.matmul %37, %38, %cst_16 {dimension_numbers = #tpu.dot_dimension_numbers<[1], [0], [0], [1], [0, 0, 1, 1], [], []>} : vector<8x32xbf16>, vector<32x32xbf16>, vector<8x32xf32> -> vector<8x32xf32>
    %c0_17 = arith.constant 0 : index
    %c0_18 = arith.constant 0 : index
    %40 = vector.load %arg7[%c0_17, %c0_18] : memref<1x32xf32, #tpu.memory_space<vmem>>, vector<1x32xf32>
    %41 = vector.broadcast %40 : vector<1x32xf32> to vector<8x32xf32>
    %42 = arith.addf %39, %41 : vector<8x32xf32>
    %c0_19 = arith.constant 0 : index
    %c0_20 = arith.constant 0 : index
    %c0_21 = arith.constant 0 : index
    %43 = vector.load %arg14[%c0_19, %c0_20, %c0_21] : memref<1x8x32xf32, #tpu.memory_space<vmem>>, vector<1x8x32xf32>
    %44 = vector.shape_cast %43 : vector<1x8x32xf32> to vector<8x32xf32>
    %45 = vector.shape_cast %42 : vector<8x32xf32> to vector<1x8x32xf32>
    tpu.vector_store %arg14[%c0_19, %c0_20, %c0_21], %45 {strides = array<i32>} : memref<1x8x32xf32, #tpu.memory_space<vmem>>, vector<1x8x32xf32>,
    return
  }
  func.func @transform_0(%arg0: i32, %arg1: i32) -> (i32, i32, i32) {
    %c0_i32 = arith.constant 0 : i32
    %c0_i32_0 = arith.constant 0 : i32
    %c0_i32_1 = arith.constant 0 : i32
    return %arg0, %c0_i32, %c0_i32_0 : i32, i32, i32
  }
  func.func @transform_1(%arg0: i32, %arg1: i32) -> (i32, i32) {
    %c0_i32 = arith.constant 0 : i32
    %c0_i32_0 = arith.constant 0 : i32
    %c0_i32_1 = arith.constant 0 : i32
    return %c0_i32, %c0_i32_0 : i32, i32
  }
  func.func @transform_2(%arg0: i32, %arg1: i32) -> (i32, i32) {
    %c0_i32 = arith.constant 0 : i32
    %c0_i32_0 = arith.constant 0 : i32
    %c0_i32_1 = arith.constant 0 : i32
    return %c0_i32, %c0_i32_0 : i32, i32
  }
  func.func @transform_3(%arg0: i32, %arg1: i32) -> (i32, i32) {
    %c0_i32 = arith.constant 0 : i32
    %c0_i32_0 = arith.constant 0 : i32
    %c0_i32_1 = arith.constant 0 : i32
    return %c0_i32, %c0_i32_0 : i32, i32
  }
  func.func @transform_4(%arg0: i32, %arg1: i32) -> (i32, i32) {
    %c0_i32 = arith.constant 0 : i32
    %c0_i32_0 = arith.constant 0 : i32
    %c0_i32_1 = arith.constant 0 : i32
    return %c0_i32, %c0_i32_0 : i32, i32
  }
  func.func @transform_5(%arg0: i32, %arg1: i32) -> (i32, i32) {
    %c0_i32 = arith.constant 0 : i32
    %c0_i32_0 = arith.constant 0 : i32
    %c0_i32_1 = arith.constant 0 : i32
    return %c0_i32, %c0_i32_0 : i32, i32
  }
  func.func @transform_6(%arg0: i32, %arg1: i32) -> (i32, i32) {
    %c0_i32 = arith.constant 0 : i32
    %c0_i32_0 = arith.constant 0 : i32
    %c0_i32_1 = arith.constant 0 : i32
    return %c0_i32, %c0_i32_0 : i32, i32
  }
  func.func @transform_7(%arg0: i32, %arg1: i32) -> (i32, i32) {
    %c0_i32 = arith.constant 0 : i32
    %c0_i32_0 = arith.constant 0 : i32
    %c0_i32_1 = arith.constant 0 : i32
    return %c0_i32, %c0_i32_0 : i32, i32
  }
  func.func @transform_8(%arg0: i32, %arg1: i32) -> (i32, i32) {
    %c0_i32 = arith.constant 0 : i32
    %c0_i32_0 = arith.constant 0 : i32
    %c0_i32_1 = arith.constant 0 : i32
    return %c0_i32, %c0_i32_0 : i32, i32
  }
  func.func @transform_9(%arg0: i32, %arg1: i32) -> (i32, i32) {
    %c0_i32 = arith.constant 0 : i32
    %c0_i32_0 = arith.constant 0 : i32
    %c0_i32_1 = arith.constant 0 : i32
    return %c0_i32, %c0_i32_0 : i32, i32
  }
  func.func @transform_10(%arg0: i32, %arg1: i32) -> (i32, i32) {
    %c0_i32 = arith.constant 0 : i32
    %c0_i32_0 = arith.constant 0 : i32
    %c0_i32_1 = arith.constant 0 : i32
    return %c0_i32, %c0_i32_0 : i32, i32
  }
  func.func @transform_11(%arg0: i32, %arg1: i32) -> (i32, i32) {
    %c0_i32 = arith.constant 0 : i32
    %c0_i32_0 = arith.constant 0 : i32
    %c0_i32_1 = arith.constant 0 : i32
    return %c0_i32, %c0_i32_0 : i32, i32
  }
  func.func @transform_12(%arg0: i32, %arg1: i32) -> (i32, i32, i32) {
    %c0_i32 = arith.constant 0 : i32
    %c0_i32_0 = arith.constant 0 : i32
    return %arg0, %arg1, %c0_i32 : i32, i32, i32
  }
}

module attributes {stable_mosaic.version = 11 : i64} {
  func.func @attention_kernel(%arg0: i32, %arg1: i32, %arg2: memref<1x8x32xf32, #tpu.memory_space<vmem>>, %arg3: memref<32x32xbf16, #tpu.memory_space<vmem>>, %arg4: memref<32x32xbf16, #tpu.memory_space<vmem>>, %arg5: memref<32x32xbf16, #tpu.memory_space<vmem>>, %arg6: memref<32x32xbf16, #tpu.memory_space<vmem>>, %arg7: memref<1x32xf32, #tpu.memory_space<vmem>>, %arg8: memref<1x32xf32, #tpu.memory_space<vmem>>, %arg9: memref<1x32xf32, #tpu.memory_space<vmem>>, %arg10: memref<1x16xf32, #tpu.memory_space<vmem>>, %arg11: memref<1x16xf32, #tpu.memory_space<vmem>>, %arg12: memref<1x16xf32, #tpu.memory_space<vmem>>, %arg13: memref<1x16xf32, #tpu.memory_space<vmem>>, %arg14: memref<1x8x32xf32, #tpu.memory_space<vmem>>, %arg15: memref<8x32xbf16, #tpu.memory_space<vmem>>, %arg16: memref<2x16x8xbf16, #tpu.memory_space<vmem>>, %arg17: memref<2x8x16xbf16, #tpu.memory_space<vmem>>) attributes {dimension_semantics = [#tpu.dimension_semantics<parallel>, #tpu.dimension_semantics<arbitrary>], iteration_bounds = array<i64: 2, 1>, scalar_prefetch = 0 : i64, scratch_operands = 3 : i64, tpu.core_type = #tpu.core_type<tc>, window_params = [{transform_indices = @transform_0, window_bounds = array<i64: 1, 8, 32>}, {pipeline_mode = #tpu.pipeline_mode<synchronous>, transform_indices = @transform_1, window_bounds = array<i64: 32, 32>}, {pipeline_mode = #tpu.pipeline_mode<synchronous>, transform_indices = @transform_2, window_bounds = array<i64: 32, 32>}, {pipeline_mode = #tpu.pipeline_mode<synchronous>, transform_indices = @transform_3, window_bounds = array<i64: 32, 32>}, {pipeline_mode = #tpu.pipeline_mode<synchronous>, transform_indices = @transform_4, window_bounds = array<i64: 32, 32>}, {pipeline_mode = #tpu.pipeline_mode<synchronous>, transform_indices = @transform_5, window_bounds = array<i64: 1, 32>}, {pipeline_mode = #tpu.pipeline_mode<synchronous>, transform_indices = @transform_6, window_bounds = array<i64: 1, 32>}, {pipeline_mode = #tpu.pipeline_mode<synchronous>, transform_indices = @transform_7, window_bounds = array<i64: 1, 32>}, {pipeline_mode = #tpu.pipeline_mode<synchronous>, transform_indices = @transform_8, window_bounds = array<i64: 1, 16>}, {pipeline_mode = #tpu.pipeline_mode<synchronous>, transform_indices = @transform_9, window_bounds = array<i64: 1, 16>}, {pipeline_mode = #tpu.pipeline_mode<synchronous>, transform_indices = @transform_10, window_bounds = array<i64: 1, 16>}, {pipeline_mode = #tpu.pipeline_mode<synchronous>, transform_indices = @transform_11, window_bounds = array<i64: 1, 16>}, {transform_indices = @transform_12, window_bounds = array<i64: 1, 8, 32>}]} {
    %c0_i32 = arith.constant 0 : i32
    %0 = arith.cmpi eq, %arg1, %c0_i32 : i32
    %1 = arith.extui %0 : i1 to i32
    %c0_i32_0 = arith.constant 0 : i32
    %2 = arith.cmpi ne, %1, %c0_i32_0 : i32
    scf.if %2 {
      %c0_24 = arith.constant 0 : index
      %c0_25 = arith.constant 0 : index
      %c0_26 = arith.constant 0 : index
      %49 = vector.load %arg2[%c0_24, %c0_25, %c0_26] : memref<1x8x32xf32, #tpu.memory_space<vmem>>, vector<1x8x32xf32>
      %50 = vector.shape_cast %49 : vector<1x8x32xf32> to vector<8x32xf32>
      %c0_27 = arith.constant 0 : index
      %c0_28 = arith.constant 0 : index
      %51 = vector.load %arg8[%c0_27, %c0_28] : memref<1x32xf32, #tpu.memory_space<vmem>>, vector<1x32xf32>
      %c0_29 = arith.constant 0 : index
      %c0_30 = arith.constant 0 : index
      %52 = vector.load %arg9[%c0_29, %c0_30] : memref<1x32xf32, #tpu.memory_space<vmem>>, vector<1x32xf32>
      %cst_31 = arith.constant dense<0.000000e+00> : vector<8xf32>
      %53 = vector.multi_reduction <add>, %50, %cst_31 [1] : vector<8x32xf32> to vector<8xf32>
      %54 = vector.shape_cast %53 : vector<8xf32> to vector<8x1xf32>
      %cst_32 = arith.constant 3.200000e+01 : f32
      %55 = vector.broadcast %cst_32 : f32 to vector<8x1xf32>
      %56 = arith.divf %54, %55 : vector<8x1xf32>
      %57 = vector.broadcast %56 : vector<8x1xf32> to vector<8x32xf32>
      %58 = arith.subf %50, %57 : vector<8x32xf32>
      %59 = arith.mulf %58, %58 : vector<8x32xf32>
      %cst_33 = arith.constant dense<0.000000e+00> : vector<8xf32>
      %60 = vector.multi_reduction <add>, %59, %cst_33 [1] : vector<8x32xf32> to vector<8xf32>
      %61 = vector.shape_cast %60 : vector<8xf32> to vector<8x1xf32>
      %cst_34 = arith.constant 3.200000e+01 : f32
      %62 = vector.broadcast %cst_34 : f32 to vector<8x1xf32>
      %63 = arith.divf %61, %62 : vector<8x1xf32>
      %64 = vector.broadcast %56 : vector<8x1xf32> to vector<8x32xf32>
      %65 = arith.subf %50, %64 : vector<8x32xf32>
      %cst_35 = arith.constant 9.99999974E-6 : f32
      %66 = vector.broadcast %cst_35 : f32 to vector<8x1xf32>
      %67 = arith.addf %63, %66 : vector<8x1xf32>
      %68 = math.rsqrt %67 : vector<8x1xf32>
      %69 = vector.broadcast %68 : vector<8x1xf32> to vector<8x32xf32>
      %70 = arith.mulf %65, %69 : vector<8x32xf32>
      %71 = vector.broadcast %51 : vector<1x32xf32> to vector<8x32xf32>
      %72 = arith.mulf %70, %71 : vector<8x32xf32>
      %73 = vector.broadcast %52 : vector<1x32xf32> to vector<8x32xf32>
      %74 = arith.addf %72, %73 : vector<8x32xf32>
      %75 = arith.truncf %74 : vector<8x32xf32> to vector<8x32xbf16>
      %c0_36 = arith.constant 0 : index
      %c0_37 = arith.constant 0 : index
      %76 = vector.load %arg15[%c0_36, %c0_37] : memref<8x32xbf16, #tpu.memory_space<vmem>>, vector<8x32xbf16>
      tpu.vector_store %arg15[%c0_36, %c0_37], %75 {strides = array<i32>} : memref<8x32xbf16, #tpu.memory_space<vmem>>, vector<8x32xbf16>,
      %77 = arith.truncf %74 : vector<8x32xf32> to vector<8x32xbf16>
      %c0_38 = arith.constant 0 : index
      %c0_39 = arith.constant 0 : index
      %78 = vector.load %arg4[%c0_38, %c0_39] : memref<32x32xbf16, #tpu.memory_space<vmem>>, vector<32x32xbf16>
      %cst_40 = arith.constant dense<0.000000e+00> : vector<8x32xf32>
      %79 = tpu.matmul %77, %78, %cst_40 {dimension_numbers = #tpu.dot_dimension_numbers<[1], [0], [0], [1], [0, 0, 1, 1], [], []>} : vector<8x32xbf16>, vector<32x32xbf16>, vector<8x32xf32> -> vector<8x32xf32>
      %c0_41 = arith.constant 0 : index
      %c0_42 = arith.constant 0 : index
      %80 = vector.load %arg5[%c0_41, %c0_42] : memref<32x32xbf16, #tpu.memory_space<vmem>>, vector<32x32xbf16>
      %cst_43 = arith.constant dense<0.000000e+00> : vector<8x32xf32>
      %81 = tpu.matmul %77, %80, %cst_43 {dimension_numbers = #tpu.dot_dimension_numbers<[1], [0], [0], [1], [0, 0, 1, 1], [], []>} : vector<8x32xbf16>, vector<32x32xbf16>, vector<8x32xf32> -> vector<8x32xf32>
      %82 = vector.extract_strided_slice %79 {offsets = [0, 0], sizes = [8, 16], strides = [1, 1]} : vector<8x32xf32> to vector<8x16xf32>
      %c0_44 = arith.constant 0 : index
      %c0_45 = arith.constant 0 : index
      %83 = vector.load %arg10[%c0_44, %c0_45] : memref<1x16xf32, #tpu.memory_space<vmem>>, vector<1x16xf32>
      %c0_46 = arith.constant 0 : index
      %c0_47 = arith.constant 0 : index
      %84 = vector.load %arg11[%c0_46, %c0_47] : memref<1x16xf32, #tpu.memory_space<vmem>>, vector<1x16xf32>
      %cst_48 = arith.constant dense<0.000000e+00> : vector<8xf32>
      %85 = vector.multi_reduction <add>, %82, %cst_48 [1] : vector<8x16xf32> to vector<8xf32>
      %86 = vector.shape_cast %85 : vector<8xf32> to vector<8x1xf32>
      %cst_49 = arith.constant 1.600000e+01 : f32
      %87 = vector.broadcast %cst_49 : f32 to vector<8x1xf32>
      %88 = arith.divf %86, %87 : vector<8x1xf32>
      %89 = vector.broadcast %88 : vector<8x1xf32> to vector<8x16xf32>
      %90 = arith.subf %82, %89 : vector<8x16xf32>
      %91 = arith.mulf %90, %90 : vector<8x16xf32>
      %cst_50 = arith.constant dense<0.000000e+00> : vector<8xf32>
      %92 = vector.multi_reduction <add>, %91, %cst_50 [1] : vector<8x16xf32> to vector<8xf32>
      %93 = vector.shape_cast %92 : vector<8xf32> to vector<8x1xf32>
      %cst_51 = arith.constant 1.600000e+01 : f32
      %94 = vector.broadcast %cst_51 : f32 to vector<8x1xf32>
      %95 = arith.divf %93, %94 : vector<8x1xf32>
      %96 = vector.broadcast %88 : vector<8x1xf32> to vector<8x16xf32>
      %97 = arith.subf %82, %96 : vector<8x16xf32>
      %cst_52 = arith.constant 9.99999974E-6 : f32
      %98 = vector.broadcast %cst_52 : f32 to vector<8x1xf32>
      %99 = arith.addf %95, %98 : vector<8x1xf32>
      %100 = math.rsqrt %99 : vector<8x1xf32>
      %101 = vector.broadcast %100 : vector<8x1xf32> to vector<8x16xf32>
      %102 = arith.mulf %97, %101 : vector<8x16xf32>
      %103 = vector.broadcast %83 : vector<1x16xf32> to vector<8x16xf32>
      %104 = arith.mulf %102, %103 : vector<8x16xf32>
      %105 = vector.broadcast %84 : vector<1x16xf32> to vector<8x16xf32>
      %106 = arith.addf %104, %105 : vector<8x16xf32>
      %107 = tpu.transpose %106, [1, 0] : vector<8x16xf32> -> vector<16x8xf32>
      %108 = vector.extract_strided_slice %79 {offsets = [0, 16], sizes = [8, 16], strides = [1, 1]} : vector<8x32xf32> to vector<8x16xf32>
      %c0_53 = arith.constant 0 : index
      %c0_54 = arith.constant 0 : index
      %109 = vector.load %arg10[%c0_53, %c0_54] : memref<1x16xf32, #tpu.memory_space<vmem>>, vector<1x16xf32>
      %c0_55 = arith.constant 0 : index
      %c0_56 = arith.constant 0 : index
      %110 = vector.load %arg11[%c0_55, %c0_56] : memref<1x16xf32, #tpu.memory_space<vmem>>, vector<1x16xf32>
      %cst_57 = arith.constant dense<0.000000e+00> : vector<8xf32>
      %111 = vector.multi_reduction <add>, %108, %cst_57 [1] : vector<8x16xf32> to vector<8xf32>
      %112 = vector.shape_cast %111 : vector<8xf32> to vector<8x1xf32>
      %cst_58 = arith.constant 1.600000e+01 : f32
      %113 = vector.broadcast %cst_58 : f32 to vector<8x1xf32>
      %114 = arith.divf %112, %113 : vector<8x1xf32>
      %115 = vector.broadcast %114 : vector<8x1xf32> to vector<8x16xf32>
      %116 = arith.subf %108, %115 : vector<8x16xf32>
      %117 = arith.mulf %116, %116 : vector<8x16xf32>
      %cst_59 = arith.constant dense<0.000000e+00> : vector<8xf32>
      %118 = vector.multi_reduction <add>, %117, %cst_59 [1] : vector<8x16xf32> to vector<8xf32>
      %119 = vector.shape_cast %118 : vector<8xf32> to vector<8x1xf32>
      %cst_60 = arith.constant 1.600000e+01 : f32
      %120 = vector.broadcast %cst_60 : f32 to vector<8x1xf32>
      %121 = arith.divf %119, %120 : vector<8x1xf32>
      %122 = vector.broadcast %114 : vector<8x1xf32> to vector<8x16xf32>
      %123 = arith.subf %108, %122 : vector<8x16xf32>
      %cst_61 = arith.constant 9.99999974E-6 : f32
      %124 = vector.broadcast %cst_61 : f32 to vector<8x1xf32>
      %125 = arith.addf %121, %124 : vector<8x1xf32>
      %126 = math.rsqrt %125 : vector<8x1xf32>
      %127 = vector.broadcast %126 : vector<8x1xf32> to vector<8x16xf32>
      %128 = arith.mulf %123, %127 : vector<8x16xf32>
      %129 = vector.broadcast %109 : vector<1x16xf32> to vector<8x16xf32>
      %130 = arith.mulf %128, %129 : vector<8x16xf32>
      %131 = vector.broadcast %110 : vector<1x16xf32> to vector<8x16xf32>
      %132 = arith.addf %130, %131 : vector<8x16xf32>
      %133 = tpu.transpose %132, [1, 0] : vector<8x16xf32> -> vector<16x8xf32>
      %134 = vector.shape_cast %107 : vector<16x8xf32> to vector<1x16x8xf32>
      %135 = vector.shape_cast %133 : vector<16x8xf32> to vector<1x16x8xf32>
      %136 = tpu.concatenate %134, %135 in 0 : vector<1x16x8xf32>, vector<1x16x8xf32> -> vector<2x16x8xf32>
      %137 = arith.truncf %136 : vector<2x16x8xf32> to vector<2x16x8xbf16>
      %c0_62 = arith.constant 0 : index
      %c0_63 = arith.constant 0 : index
      %c0_64 = arith.constant 0 : index
      %138 = vector.load %arg16[%c0_62, %c0_63, %c0_64] : memref<2x16x8xbf16, #tpu.memory_space<vmem>>, vector<2x16x8xbf16>
      tpu.vector_store %arg16[%c0_62, %c0_63, %c0_64], %137 {strides = array<i32>} : memref<2x16x8xbf16, #tpu.memory_space<vmem>>, vector<2x16x8xbf16>,
      %139 = vector.extract_strided_slice %81 {offsets = [0, 0], sizes = [8, 16], strides = [1, 1]} : vector<8x32xf32> to vector<8x16xf32>
      %c0_65 = arith.constant 0 : index
      %c0_66 = arith.constant 0 : index
      %140 = vector.load %arg12[%c0_65, %c0_66] : memref<1x16xf32, #tpu.memory_space<vmem>>, vector<1x16xf32>
      %c0_67 = arith.constant 0 : index
      %c0_68 = arith.constant 0 : index
      %141 = vector.load %arg13[%c0_67, %c0_68] : memref<1x16xf32, #tpu.memory_space<vmem>>, vector<1x16xf32>
      %cst_69 = arith.constant dense<0.000000e+00> : vector<8xf32>
      %142 = vector.multi_reduction <add>, %139, %cst_69 [1] : vector<8x16xf32> to vector<8xf32>
      %143 = vector.shape_cast %142 : vector<8xf32> to vector<8x1xf32>
      %cst_70 = arith.constant 1.600000e+01 : f32
      %144 = vector.broadcast %cst_70 : f32 to vector<8x1xf32>
      %145 = arith.divf %143, %144 : vector<8x1xf32>
      %146 = vector.broadcast %145 : vector<8x1xf32> to vector<8x16xf32>
      %147 = arith.subf %139, %146 : vector<8x16xf32>
      %148 = arith.mulf %147, %147 : vector<8x16xf32>
      %cst_71 = arith.constant dense<0.000000e+00> : vector<8xf32>
      %149 = vector.multi_reduction <add>, %148, %cst_71 [1] : vector<8x16xf32> to vector<8xf32>
      %150 = vector.shape_cast %149 : vector<8xf32> to vector<8x1xf32>
      %cst_72 = arith.constant 1.600000e+01 : f32
      %151 = vector.broadcast %cst_72 : f32 to vector<8x1xf32>
      %152 = arith.divf %150, %151 : vector<8x1xf32>
      %153 = vector.broadcast %145 : vector<8x1xf32> to vector<8x16xf32>
      %154 = arith.subf %139, %153 : vector<8x16xf32>
      %cst_73 = arith.constant 9.99999974E-6 : f32
      %155 = vector.broadcast %cst_73 : f32 to vector<8x1xf32>
      %156 = arith.addf %152, %155 : vector<8x1xf32>
      %157 = math.rsqrt %156 : vector<8x1xf32>
      %158 = vector.broadcast %157 : vector<8x1xf32> to vector<8x16xf32>
      %159 = arith.mulf %154, %158 : vector<8x16xf32>
      %160 = vector.broadcast %140 : vector<1x16xf32> to vector<8x16xf32>
      %161 = arith.mulf %159, %160 : vector<8x16xf32>
      %162 = vector.broadcast %141 : vector<1x16xf32> to vector<8x16xf32>
      %163 = arith.addf %161, %162 : vector<8x16xf32>
      %164 = vector.extract_strided_slice %81 {offsets = [0, 16], sizes = [8, 16], strides = [1, 1]} : vector<8x32xf32> to vector<8x16xf32>
      %c0_74 = arith.constant 0 : index
      %c0_75 = arith.constant 0 : index
      %165 = vector.load %arg12[%c0_74, %c0_75] : memref<1x16xf32, #tpu.memory_space<vmem>>, vector<1x16xf32>
      %c0_76 = arith.constant 0 : index
      %c0_77 = arith.constant 0 : index
      %166 = vector.load %arg13[%c0_76, %c0_77] : memref<1x16xf32, #tpu.memory_space<vmem>>, vector<1x16xf32>
      %cst_78 = arith.constant dense<0.000000e+00> : vector<8xf32>
      %167 = vector.multi_reduction <add>, %164, %cst_78 [1] : vector<8x16xf32> to vector<8xf32>
      %168 = vector.shape_cast %167 : vector<8xf32> to vector<8x1xf32>
      %cst_79 = arith.constant 1.600000e+01 : f32
      %169 = vector.broadcast %cst_79 : f32 to vector<8x1xf32>
      %170 = arith.divf %168, %169 : vector<8x1xf32>
      %171 = vector.broadcast %170 : vector<8x1xf32> to vector<8x16xf32>
      %172 = arith.subf %164, %171 : vector<8x16xf32>
      %173 = arith.mulf %172, %172 : vector<8x16xf32>
      %cst_80 = arith.constant dense<0.000000e+00> : vector<8xf32>
      %174 = vector.multi_reduction <add>, %173, %cst_80 [1] : vector<8x16xf32> to vector<8xf32>
      %175 = vector.shape_cast %174 : vector<8xf32> to vector<8x1xf32>
      %cst_81 = arith.constant 1.600000e+01 : f32
      %176 = vector.broadcast %cst_81 : f32 to vector<8x1xf32>
      %177 = arith.divf %175, %176 : vector<8x1xf32>
      %178 = vector.broadcast %170 : vector<8x1xf32> to vector<8x16xf32>
      %179 = arith.subf %164, %178 : vector<8x16xf32>
      %cst_82 = arith.constant 9.99999974E-6 : f32
      %180 = vector.broadcast %cst_82 : f32 to vector<8x1xf32>
      %181 = arith.addf %177, %180 : vector<8x1xf32>
      %182 = math.rsqrt %181 : vector<8x1xf32>
      %183 = vector.broadcast %182 : vector<8x1xf32> to vector<8x16xf32>
      %184 = arith.mulf %179, %183 : vector<8x16xf32>
      %185 = vector.broadcast %165 : vector<1x16xf32> to vector<8x16xf32>
      %186 = arith.mulf %184, %185 : vector<8x16xf32>
      %187 = vector.broadcast %166 : vector<1x16xf32> to vector<8x16xf32>
      %188 = arith.addf %186, %187 : vector<8x16xf32>
      %189 = vector.shape_cast %163 : vector<8x16xf32> to vector<1x8x16xf32>
      %190 = vector.shape_cast %188 : vector<8x16xf32> to vector<1x8x16xf32>
      %191 = tpu.concatenate %189, %190 in 0 : vector<1x8x16xf32>, vector<1x8x16xf32> -> vector<2x8x16xf32>
      %192 = arith.truncf %191 : vector<2x8x16xf32> to vector<2x8x16xbf16>
      %c0_83 = arith.constant 0 : index
      %c0_84 = arith.constant 0 : index
      %c0_85 = arith.constant 0 : index
      %193 = vector.load %arg17[%c0_83, %c0_84, %c0_85] : memref<2x8x16xbf16, #tpu.memory_space<vmem>>, vector<2x8x16xbf16>
      tpu.vector_store %arg17[%c0_83, %c0_84, %c0_85], %192 {strides = array<i32>} : memref<2x8x16xbf16, #tpu.memory_space<vmem>>, vector<2x8x16xbf16>,
    } else {
    }
    %c8_i32 = arith.constant 8 : i32
    %3 = arith.muli %arg1, %c8_i32 : i32
    %4 = tpu.assume_multiple %3, 8 : i32
    %5 = arith.index_cast %4 : i32 to index
    %c0 = arith.constant 0 : index
    %6 = vector.load %arg15[%5, %c0] : memref<8x32xbf16, #tpu.memory_space<vmem>>, vector<8x32xbf16>
    %c0_1 = arith.constant 0 : index
    %c0_2 = arith.constant 0 : index
    %7 = vector.load %arg3[%c0_1, %c0_2] : memref<32x32xbf16, #tpu.memory_space<vmem>>, vector<32x32xbf16>
    %cst = arith.constant dense<0.000000e+00> : vector<8x32xf32>
    %8 = tpu.matmul %6, %7, %cst {dimension_numbers = #tpu.dot_dimension_numbers<[1], [0], [0], [1], [0, 0, 1, 1], [], []>} : vector<8x32xbf16>, vector<32x32xbf16>, vector<8x32xf32> -> vector<8x32xf32>
    %cst_3 = arith.constant 2.500000e-01 : f32
    %9 = vector.broadcast %cst_3 : f32 to vector<8x32xf32>
    %10 = arith.mulf %8, %9 : vector<8x32xf32>
    %11 = vector.extract_strided_slice %10 {offsets = [0, 0], sizes = [8, 16], strides = [1, 1]} : vector<8x32xf32> to vector<8x16xf32>
    %12 = vector.extract_strided_slice %10 {offsets = [0, 16], sizes = [8, 16], strides = [1, 1]} : vector<8x32xf32> to vector<8x16xf32>
    %13 = vector.shape_cast %11 : vector<8x16xf32> to vector<1x8x16xf32>
    %14 = vector.shape_cast %12 : vector<8x16xf32> to vector<1x8x16xf32>
    %15 = tpu.concatenate %13, %14 in 0 : vector<1x8x16xf32>, vector<1x8x16xf32> -> vector<2x8x16xf32>
    %16 = arith.truncf %15 : vector<2x8x16xf32> to vector<2x8x16xbf16>
    %c0_4 = arith.constant 0 : index
    %c0_5 = arith.constant 0 : index
    %c0_6 = arith.constant 0 : index
    %17 = vector.load %arg16[%c0_4, %c0_5, %c0_6] : memref<2x16x8xbf16, #tpu.memory_space<vmem>>, vector<2x16x8xbf16>
    "tpu.trace_start"() <{level = 10 : i32, message = "hqd,hdk->hqk"}> : () -> ()
    %cst_7 = arith.constant dense<0.000000e+00> : vector<2x8x8xf32>
    %18 = tpu.matmul %16, %17, %cst_7 {dimension_numbers = #tpu.dot_dimension_numbers<[2], [1], [1], [2], [0, 0, 0, 1, 1, 2], [0], [0]>} : vector<2x8x16xbf16>, vector<2x16x8xbf16>, vector<2x8x8xf32> -> vector<2x8x8xf32>
    "tpu.trace_stop"() : () -> ()
    %cst_8 = arith.constant dense<0xFF800000> : vector<2x8xf32>
    %19 = vector.multi_reduction <maximumf>, %18, %cst_8 [2] : vector<2x8x8xf32> to vector<2x8xf32>
    %20 = vector.shape_cast %19 : vector<2x8xf32> to vector<2x8x1xf32>
    %21 = vector.broadcast %20 : vector<2x8x1xf32> to vector<2x8x8xf32>
    %22 = arith.subf %18, %21 : vector<2x8x8xf32>
    %23 = math.exp %22 : vector<2x8x8xf32>
    %cst_9 = arith.constant dense<0.000000e+00> : vector<2x8xf32>
    %24 = vector.multi_reduction <add>, %23, %cst_9 [2] : vector<2x8x8xf32> to vector<2x8xf32>
    %25 = vector.shape_cast %24 : vector<2x8xf32> to vector<2x8x1xf32>
    %26 = arith.truncf %23 : vector<2x8x8xf32> to vector<2x8x8xbf16>
    %c0_10 = arith.constant 0 : index
    %c0_11 = arith.constant 0 : index
    %c0_12 = arith.constant 0 : index
    %27 = vector.load %arg17[%c0_10, %c0_11, %c0_12] : memref<2x8x16xbf16, #tpu.memory_space<vmem>>, vector<2x8x16xbf16>
    "tpu.trace_start"() <{level = 10 : i32, message = "hqk,hkd->hqd"}> : () -> ()
    %cst_13 = arith.constant dense<0.000000e+00> : vector<2x8x16xf32>
    %28 = tpu.matmul %26, %27, %cst_13 {dimension_numbers = #tpu.dot_dimension_numbers<[2], [1], [1], [2], [0, 0, 0, 1, 1, 2], [0], [0]>} : vector<2x8x8xbf16>, vector<2x8x16xbf16>, vector<2x8x16xf32> -> vector<2x8x16xf32>
    "tpu.trace_stop"() : () -> ()
    %29 = tpu.reciprocal %25 {approx = true} : vector<2x8x1xf32> -> vector<2x8x1xf32>
    %30 = vector.broadcast %29 : vector<2x8x1xf32> to vector<2x8x16xf32>
    %31 = arith.mulf %28, %30 : vector<2x8x16xf32>
    %c0_14 = arith.constant 0 : index
    %c0_15 = arith.constant 0 : index
    %32 = vector.load %arg7[%c0_14, %c0_15] : memref<1x32xf32, #tpu.memory_space<vmem>>, vector<1x32xf32>
    %33 = vector.extract_strided_slice %31 {offsets = [0, 0, 0], sizes = [1, 8, 16], strides = [1, 1, 1]} : vector<2x8x16xf32> to vector<1x8x16xf32>
    %34 = vector.shape_cast %33 : vector<1x8x16xf32> to vector<8x16xf32>
    %35 = arith.truncf %34 : vector<8x16xf32> to vector<8x16xbf16>
    %c0_16 = arith.constant 0 : index
    %c0_17 = arith.constant 0 : index
    %36 = vector.load %arg6[%c0_16, %c0_17] : memref<32x32xbf16, #tpu.memory_space<vmem>>, vector<16x32xbf16>
    %cst_18 = arith.constant dense<0.000000e+00> : vector<8x32xf32>
    %37 = tpu.matmul %35, %36, %cst_18 {dimension_numbers = #tpu.dot_dimension_numbers<[1], [0], [0], [1], [0, 0, 1, 1], [], []>} : vector<8x16xbf16>, vector<16x32xbf16>, vector<8x32xf32> -> vector<8x32xf32>
    %38 = vector.broadcast %32 : vector<1x32xf32> to vector<8x32xf32>
    %39 = arith.addf %38, %37 : vector<8x32xf32>
    %40 = vector.extract_strided_slice %31 {offsets = [1, 0, 0], sizes = [1, 8, 16], strides = [1, 1, 1]} : vector<2x8x16xf32> to vector<1x8x16xf32>
    %41 = vector.shape_cast %40 : vector<1x8x16xf32> to vector<8x16xf32>
    %42 = arith.truncf %41 : vector<8x16xf32> to vector<8x16xbf16>
    %c16 = arith.constant 16 : index
    %c0_19 = arith.constant 0 : index
    %43 = vector.load %arg6[%c16, %c0_19] : memref<32x32xbf16, #tpu.memory_space<vmem>>, vector<16x32xbf16>
    %cst_20 = arith.constant dense<0.000000e+00> : vector<8x32xf32>
    %44 = tpu.matmul %42, %43, %cst_20 {dimension_numbers = #tpu.dot_dimension_numbers<[1], [0], [0], [1], [0, 0, 1, 1], [], []>} : vector<8x16xbf16>, vector<16x32xbf16>, vector<8x32xf32> -> vector<8x32xf32>
    %45 = arith.addf %39, %44 : vector<8x32xf32>
    %c0_21 = arith.constant 0 : index
    %c0_22 = arith.constant 0 : index
    %c0_23 = arith.constant 0 : index
    %46 = vector.load %arg14[%c0_21, %c0_22, %c0_23] : memref<1x8x32xf32, #tpu.memory_space<vmem>>, vector<1x8x32xf32>
    %47 = vector.shape_cast %46 : vector<1x8x32xf32> to vector<8x32xf32>
    %48 = vector.shape_cast %45 : vector<8x32xf32> to vector<1x8x32xf32>
    tpu.vector_store %arg14[%c0_21, %c0_22, %c0_23], %48 {strides = array<i32>} : memref<1x8x32xf32, #tpu.memory_space<vmem>>, vector<1x8x32xf32>,
    return
  }
  func.func @transform_0(%arg0: i32, %arg1: i32) -> (i32, i32, i32) {
    %c0_i32 = arith.constant 0 : i32
    %c0_i32_0 = arith.constant 0 : i32
    %c0_i32_1 = arith.constant 0 : i32
    return %arg0, %c0_i32, %c0_i32_0 : i32, i32, i32
  }
  func.func @transform_1(%arg0: i32, %arg1: i32) -> (i32, i32) {
    %c0_i32 = arith.constant 0 : i32
    %c0_i32_0 = arith.constant 0 : i32
    %c0_i32_1 = arith.constant 0 : i32
    return %c0_i32, %c0_i32_0 : i32, i32
  }
  func.func @transform_2(%arg0: i32, %arg1: i32) -> (i32, i32) {
    %c0_i32 = arith.constant 0 : i32
    %c0_i32_0 = arith.constant 0 : i32
    %c0_i32_1 = arith.constant 0 : i32
    return %c0_i32, %c0_i32_0 : i32, i32
  }
  func.func @transform_3(%arg0: i32, %arg1: i32) -> (i32, i32) {
    %c0_i32 = arith.constant 0 : i32
    %c0_i32_0 = arith.constant 0 : i32
    %c0_i32_1 = arith.constant 0 : i32
    return %c0_i32, %c0_i32_0 : i32, i32
  }
  func.func @transform_4(%arg0: i32, %arg1: i32) -> (i32, i32) {
    %c0_i32 = arith.constant 0 : i32
    %c0_i32_0 = arith.constant 0 : i32
    %c0_i32_1 = arith.constant 0 : i32
    return %c0_i32, %c0_i32_0 : i32, i32
  }
  func.func @transform_5(%arg0: i32, %arg1: i32) -> (i32, i32) {
    %c0_i32 = arith.constant 0 : i32
    %c0_i32_0 = arith.constant 0 : i32
    %c0_i32_1 = arith.constant 0 : i32
    return %c0_i32, %c0_i32_0 : i32, i32
  }
  func.func @transform_6(%arg0: i32, %arg1: i32) -> (i32, i32) {
    %c0_i32 = arith.constant 0 : i32
    %c0_i32_0 = arith.constant 0 : i32
    %c0_i32_1 = arith.constant 0 : i32
    return %c0_i32, %c0_i32_0 : i32, i32
  }
  func.func @transform_7(%arg0: i32, %arg1: i32) -> (i32, i32) {
    %c0_i32 = arith.constant 0 : i32
    %c0_i32_0 = arith.constant 0 : i32
    %c0_i32_1 = arith.constant 0 : i32
    return %c0_i32, %c0_i32_0 : i32, i32
  }
  func.func @transform_8(%arg0: i32, %arg1: i32) -> (i32, i32) {
    %c0_i32 = arith.constant 0 : i32
    %c0_i32_0 = arith.constant 0 : i32
    %c0_i32_1 = arith.constant 0 : i32
    return %c0_i32, %c0_i32_0 : i32, i32
  }
  func.func @transform_9(%arg0: i32, %arg1: i32) -> (i32, i32) {
    %c0_i32 = arith.constant 0 : i32
    %c0_i32_0 = arith.constant 0 : i32
    %c0_i32_1 = arith.constant 0 : i32
    return %c0_i32, %c0_i32_0 : i32, i32
  }
  func.func @transform_10(%arg0: i32, %arg1: i32) -> (i32, i32) {
    %c0_i32 = arith.constant 0 : i32
    %c0_i32_0 = arith.constant 0 : i32
    %c0_i32_1 = arith.constant 0 : i32
    return %c0_i32, %c0_i32_0 : i32, i32
  }
  func.func @transform_11(%arg0: i32, %arg1: i32) -> (i32, i32) {
    %c0_i32 = arith.constant 0 : i32
    %c0_i32_0 = arith.constant 0 : i32
    %c0_i32_1 = arith.constant 0 : i32
    return %c0_i32, %c0_i32_0 : i32, i32
  }
  func.func @transform_12(%arg0: i32, %arg1: i32) -> (i32, i32, i32) {
    %c0_i32 = arith.constant 0 : i32
    %c0_i32_0 = arith.constant 0 : i32
    return %arg0, %arg1, %c0_i32 : i32, i32, i32
  }
}

</mosaic_0001>

<llo_original>
// kernel: tpu_custom_call.1
$region0: #{tpu_custom_call.1}
  #allocation0 [shape = 'u32[]', space=smem, size = 0x4, offset = 0x4, fixed_abs, tag = 'smem constant byte address 0x4 - core index']
  #allocation1 [shape = 'u32[72,128]{1,0:T(1,128)}', space=vmem, size = 0x9000, scoped, tag = 'internal scratch']
  #allocation2 [shape = 'bf16[8,32]{1,0:T(8,128)(2,1)}', space=vmem, size = 0x800, scoped, tag = 'scratch operand']
  #allocation3 [shape = 'bf16[2,16,8]{2,1,0:T(8,128)(2,1)}', space=vmem, size = 0x2000, scoped, tag = 'scratch operand']
  #allocation4 [shape = 'bf16[2,8,16]{2,1,0:T(8,128)(2,1)}', space=vmem, size = 0x1000, scoped, tag = 'scratch operand']
  %s0 = inlined_call_operand.hbm [shape: f32[2,8,32], index: 0, kind: input, shape index: {}]
  %s1 = inlined_call_operand.hbm [shape: bf16[32,32], index: 1, kind: input, shape index: {}]
  %s2 = inlined_call_operand.hbm [shape: bf16[32,32], index: 2, kind: input, shape index: {}]
  %s3 = inlined_call_operand.hbm [shape: bf16[32,32], index: 3, kind: input, shape index: {}]
  %s4 = inlined_call_operand.hbm [shape: bf16[32,32], index: 4, kind: input, shape index: {}]
  %s5 = inlined_call_operand.vmem [shape: f32[1,32], index: 5, kind: input, shape index: {}]
  %s6 = inlined_call_operand.vmem [shape: f32[1,32], index: 6, kind: input, shape index: {}]
  %s7 = inlined_call_operand.vmem [shape: f32[1,32], index: 7, kind: input, shape index: {}]
  %s8 = inlined_call_operand.vmem [shape: f32[1,16], index: 8, kind: input, shape index: {}]
  %s9 = inlined_call_operand.vmem [shape: f32[1,16], index: 9, kind: input, shape index: {}]
  %s10 = inlined_call_operand.vmem [shape: f32[1,16], index: 10, kind: input, shape index: {}]
  %s11 = inlined_call_operand.vmem [shape: f32[1,16], index: 11, kind: input, shape index: {}]
  %s12 = inlined_call_operand.hbm [shape: f32[2,8,32], index: 12, kind: output, shape index: {}]
  %s13 = sld [smem:[#allocation0]]
  $region105: #{tpu_custom_call.1} parent=0
    _
  %s15 = ssub.s32 1, %s13
  %s16 = scalar_select 0, %s15, %s13
  $region1: #{tpu_custom_call.1} parent=0
    #allocation5 [shape = 'u8[8192]{0}', space=vmem, size = 0x2000, scoped, tag = 'input window, operand 0']
    #allocation6 [shape = 's32[2]{0}', space=sflag, size = 0x8, scoped, tag = 'scoped memory for tpu_custom_call.1']
    #allocation7 [shape = 's32[2]{0}', space=sflag, size = 0x8, scoped, tag = 'scoped memory for tpu_custom_call.1']
    #allocation8 [shape = 'u8[8192]{0}', space=vmem, size = 0x2000, scoped, tag = 'input window, operand 1, single buffered']
    #allocation9 [shape = 's32[1]{0}', space=sflag, size = 0x4, scoped, tag = 'scoped memory for tpu_custom_call.1']
    #allocation10 [shape = 'u8[8192]{0}', space=vmem, size = 0x2000, scoped, tag = 'input window, operand 2, single buffered']
    #allocation11 [shape = 'u8[8192]{0}', space=vmem, size = 0x2000, scoped, tag = 'input window, operand 3, single buffered']
    #allocation12 [shape = 's32[1]{0}', space=sflag, size = 0x4, scoped, tag = 'scoped memory for tpu_custom_call.1']
    #allocation13 [shape = 'u8[8192]{0}', space=vmem, size = 0x2000, scoped, tag = 'input window, operand 4, single buffered']
    #allocation14 [shape = 'u8[8192]{0}', space=vmem, size = 0x2000, scoped, tag = 'output window, operand 0']
    %17 = vsyncpa [#allocation6], 0
    %s18 = scalar_lea.sflag [#allocation6], 1
    %19 = vsyncpa %s18, 0
    %20 = vsyncpa [#allocation9], 0
    %21 = vsyncpa [#allocation12], 0
    %22 = vsyncpa [#allocation7], 0
    %s23 = scalar_lea.sflag [#allocation7], 1
    %24 = vsyncpa %s23, 0
    loop: start=0, step=1, limit=4
    $region2: #{tpu_custom_call.1} parent=1 // loop_pre_header
      _
    $region3: #{tpu_custom_call.1} parent=1 // loop_header
      %s26 = sphi 0, %s30
      %p27 = scmp.ge.s32.totalorder %s26, 4
      %s33 = sphi 0, %s45
      %s34 = sphi 0, %s41
      %s35 = sphi 0, %s33
      %s36 = sphi 0, %s34
      %s37 = sphi 0, %s35
      %s38 = sphi 0, %s36
      %s48 = sphi 0, %s50
      %s51 = sphi 0, %s48
      %s52 = sphi 0, %s51
      %s68 = sphi 0, %s52
      %s72 = sphi 0, %s72
      %s74 = sphi 0, %s72
      %s75 = sphi 0, %s74
      %s89 = sphi 0, %s75
      %s93 = sphi 0, %s93
      %s95 = sphi 0, %s93
      %s96 = sphi 0, %s95
      %s110 = sphi 0, %s96
      %s114 = sphi 0, %s114
      %s116 = sphi 0, %s114
      %s117 = sphi 0, %s116
      %s131 = sphi 0, %s117
      %s135 = sphi 0, %s135
      %s137 = sphi 0, %s135
      %s138 = sphi 0, %s137
      %s152 = sphi 0, %s138
      %s156 = sphi 0, %s156
      %s158 = sphi 0, %s156
      %s159 = sphi 0, %s158
      %s173 = sphi 0, %s159
      %s177 = sphi 0, %s177
      %s179 = sphi 0, %s177
      %s180 = sphi 0, %s179
      %s194 = sphi 0, %s180
      %s198 = sphi 0, %s198
      %s200 = sphi 0, %s198
      %s201 = sphi 0, %s200
      %s215 = sphi 0, %s201
      %s219 = sphi 0, %s219
      %s221 = sphi 0, %s219
      %s222 = sphi 0, %s221
      %s236 = sphi 0, %s222
      %s240 = sphi 0, %s240
      %s242 = sphi 0, %s240
      %s243 = sphi 0, %s242
      %s257 = sphi 0, %s243
      %s261 = sphi 0, %s261
      %s263 = sphi 0, %s261
      %s264 = sphi 0, %s263
      %s278 = sphi 0, %s264
      %s282 = sphi 0, %s282
      %s284 = sphi 0, %s282
      %s285 = sphi 0, %s284
      %s299 = sphi 0, %s285
      %s307 = sphi 0, %s309
      %s310 = sphi 0, %s307
      %s311 = sphi 0, %s310
      %s327 = sphi 0, %s311
    $region4: #{tpu_custom_call.1} parent=1 // loop_header_branch
      %29 = sbr.rel (%p27) target = $region8
    $region5: #{tpu_custom_call.1} parent=1 // loop_body
      %s31 = ssub.s32 %s26, 1
      %s32 = ssub.s32 %s26, 2
      %s39 = sadd.s32 1, %s34
      %p40 = scmp.ge.s32.totalorder %s39, 1
      %s41 = scalar_select %p40, 0, %s39
      %s42 = sadd.s32 1, %s33
      %s43 = scalar_select %p40, %s42, %s33
      %p44 = scmp.ge.s32.totalorder %s43, 2
      %s45 = scalar_select %p44, 0, %s43
      %s46 = ssub.s32 %s33, %s45
      %p47 = scmp.eq.s32.totalorder %s46, 0
      %s49 = sadd.s32 %s48, 1
      %s50 = scalar_select %p47, %s48, %s49
      %p53 = pneg %p47
      %p54 = scmp.eq.s32.totalorder %s26, 1
      %p55 = por %p53, %p54
      %p56 = scmp.ne.s32.totalorder %s48, %s51
      %p57 = scmp.eq.s32.totalorder %s26, 0
      %p58 = por %p56, %p57
      %p59 = scmp.ne.s32.totalorder %s48, %s51
      %p60 = scmp.eq.s32.totalorder %s31, 1
      %p61 = por %p59, %p60
      %p62 = scmp.ne.s32.totalorder %s51, %s52
      %p63 = scmp.eq.s32.totalorder %s31, 0
      %p64 = por %p62, %p63
      %p65 = scmp.ne.s32.totalorder %s51, %s52
      %p66 = scmp.eq.s32.totalorder %s32, 1
      %p67 = por %p65, %p66
      %p69 = scmp.ne.s32.totalorder %s52, %s68
      %p70 = scmp.eq.s32.totalorder %s32, 0
      %p71 = por %p69, %p70
      %s73 = sadd.s32 %s72, 1
      %p76 = scmp.eq.s32.totalorder %s26, 1
      %p77 = scmp.ne.s32.totalorder %s72, %s74
      %p78 = scmp.eq.s32.totalorder %s26, 0
      %p79 = por %p77, %p78
      %p80 = scmp.ne.s32.totalorder %s72, %s74
      %p81 = scmp.eq.s32.totalorder %s31, 1
      %p82 = por %p80, %p81
      %p83 = scmp.ne.s32.totalorder %s74, %s75
      %p84 = scmp.eq.s32.totalorder %s31, 0
      %p85 = por %p83, %p84
      %p86 = scmp.ne.s32.totalorder %s74, %s75
      %p87 = scmp.eq.s32.totalorder %s32, 1
      %p88 = por %p86, %p87
      %p90 = scmp.ne.s32.totalorder %s75, %s89
      %p91 = scmp.eq.s32.totalorder %s32, 0
      %p92 = por %p90, %p91
      %s94 = sadd.s32 %s93, 1
      %p97 = scmp.eq.s32.totalorder %s26, 1
      %p98 = scmp.ne.s32.totalorder %s93, %s95
      %p99 = scmp.eq.s32.totalorder %s26, 0
      %p100 = por %p98, %p99
      %p101 = scmp.ne.s32.totalorder %s93, %s95
      %p102 = scmp.eq.s32.totalorder %s31, 1
      %p103 = por %p101, %p102
      %p104 = scmp.ne.s32.totalorder %s95, %s96
      %p105 = scmp.eq.s32.totalorder %s31, 0
      %p106 = por %p104, %p105
      %p107 = scmp.ne.s32.totalorder %s95, %s96
      %p108 = scmp.eq.s32.totalorder %s32, 1
      %p109 = por %p107, %p108
      %p111 = scmp.ne.s32.totalorder %s96, %s110
      %p112 = scmp.eq.s32.totalorder %s32, 0
      %p113 = por %p111, %p112
      %s115 = sadd.s32 %s114, 1
      %p118 = scmp.eq.s32.totalorder %s26, 1
      %p119 = scmp.ne.s32.totalorder %s114, %s116
      %p120 = scmp.eq.s32.totalorder %s26, 0
      %p121 = por %p119, %p120
      %p122 = scmp.ne.s32.totalorder %s114, %s116
      %p123 = scmp.eq.s32.totalorder %s31, 1
      %p124 = por %p122, %p123
      %p125 = scmp.ne.s32.totalorder %s116, %s117
      %p126 = scmp.eq.s32.totalorder %s31, 0
      %p127 = por %p125, %p126
      %p128 = scmp.ne.s32.totalorder %s116, %s117
      %p129 = scmp.eq.s32.totalorder %s32, 1
      %p130 = por %p128, %p129
      %p132 = scmp.ne.s32.totalorder %s117, %s131
      %p133 = scmp.eq.s32.totalorder %s32, 0
      %p134 = por %p132, %p133
      %s136 = sadd.s32 %s135, 1
      %p139 = scmp.eq.s32.totalorder %s26, 1
      %p140 = scmp.ne.s32.totalorder %s135, %s137
      %p141 = scmp.eq.s32.totalorder %s26, 0
      %p142 = por %p140, %p141
      %p143 = scmp.ne.s32.totalorder %s135, %s137
      %p144 = scmp.eq.s32.totalorder %s31, 1
      %p145 = por %p143, %p144
      %p146 = scmp.ne.s32.totalorder %s137, %s138
      %p147 = scmp.eq.s32.totalorder %s31, 0
      %p148 = por %p146, %p147
      %p149 = scmp.ne.s32.totalorder %s137, %s138
      %p150 = scmp.eq.s32.totalorder %s32, 1
      %p151 = por %p149, %p150
      %p153 = scmp.ne.s32.totalorder %s138, %s152
      %p154 = scmp.eq.s32.totalorder %s32, 0
      %p155 = por %p153, %p154
      %s157 = sadd.s32 %s156, 1
      %p160 = scmp.eq.s32.totalorder %s26, 1
      %p161 = scmp.ne.s32.totalorder %s156, %s158
      %p162 = scmp.eq.s32.totalorder %s26, 0
      %p163 = por %p161, %p162
      %p164 = scmp.ne.s32.totalorder %s156, %s158
      %p165 = scmp.eq.s32.totalorder %s31, 1
      %p166 = por %p164, %p165
      %p167 = scmp.ne.s32.totalorder %s158, %s159
      %p168 = scmp.eq.s32.totalorder %s31, 0
      %p169 = por %p167, %p168
      %p170 = scmp.ne.s32.totalorder %s158, %s159
      %p171 = scmp.eq.s32.totalorder %s32, 1
      %p172 = por %p170, %p171
      %p174 = scmp.ne.s32.totalorder %s159, %s173
      %p175 = scmp.eq.s32.totalorder %s32, 0
      %p176 = por %p174, %p175
      %s178 = sadd.s32 %s177, 1
      %p181 = scmp.eq.s32.totalorder %s26, 1
      %p182 = scmp.ne.s32.totalorder %s177, %s179
      %p183 = scmp.eq.s32.totalorder %s26, 0
      %p184 = por %p182, %p183
      %p185 = scmp.ne.s32.totalorder %s177, %s179
      %p186 = scmp.eq.s32.totalorder %s31, 1
      %p187 = por %p185, %p186
      %p188 = scmp.ne.s32.totalorder %s179, %s180
      %p189 = scmp.eq.s32.totalorder %s31, 0
      %p190 = por %p188, %p189
      %p191 = scmp.ne.s32.totalorder %s179, %s180
      %p192 = scmp.eq.s32.totalorder %s32, 1
      %p193 = por %p191, %p192
      %p195 = scmp.ne.s32.totalorder %s180, %s194
      %p196 = scmp.eq.s32.totalorder %s32, 0
      %p197 = por %p195, %p196
      %s199 = sadd.s32 %s198, 1
      %p202 = scmp.eq.s32.totalorder %s26, 1
      %p203 = scmp.ne.s32.totalorder %s198, %s200
      %p204 = scmp.eq.s32.totalorder %s26, 0
      %p205 = por %p203, %p204
      %p206 = scmp.ne.s32.totalorder %s198, %s200
      %p207 = scmp.eq.s32.totalorder %s31, 1
      %p208 = por %p206, %p207
      %p209 = scmp.ne.s32.totalorder %s200, %s201
      %p210 = scmp.eq.s32.totalorder %s31, 0
      %p211 = por %p209, %p210
      %p212 = scmp.ne.s32.totalorder %s200, %s201
      %p213 = scmp.eq.s32.totalorder %s32, 1
      %p214 = por %p212, %p213
      %p216 = scmp.ne.s32.totalorder %s201, %s215
      %p217 = scmp.eq.s32.totalorder %s32, 0
      %p218 = por %p216, %p217
      %s220 = sadd.s32 %s219, 1
      %p223 = scmp.eq.s32.totalorder %s26, 1
      %p224 = scmp.ne.s32.totalorder %s219, %s221
      %p225 = scmp.eq.s32.totalorder %s26, 0
      %p226 = por %p224, %p225
      %p227 = scmp.ne.s32.totalorder %s219, %s221
      %p228 = scmp.eq.s32.totalorder %s31, 1
      %p229 = por %p227, %p228
      %p230 = scmp.ne.s32.totalorder %s221, %s222
      %p231 = scmp.eq.s32.totalorder %s31, 0
      %p232 = por %p230, %p231
      %p233 = scmp.ne.s32.totalorder %s221, %s222
      %p234 = scmp.eq.s32.totalorder %s32, 1
      %p235 = por %p233, %p234
      %p237 = scmp.ne.s32.totalorder %s222, %s236
      %p238 = scmp.eq.s32.totalorder %s32, 0
      %p239 = por %p237, %p238
      %s241 = sadd.s32 %s240, 1
      %p244 = scmp.eq.s32.totalorder %s26, 1
      %p245 = scmp.ne.s32.totalorder %s240, %s242
      %p246 = scmp.eq.s32.totalorder %s26, 0
      %p247 = por %p245, %p246
      %p248 = scmp.ne.s32.totalorder %s240, %s242
      %p249 = scmp.eq.s32.totalorder %s31, 1
      %p250 = por %p248, %p249
      %p251 = scmp.ne.s32.totalorder %s242, %s243
      %p252 = scmp.eq.s32.totalorder %s31, 0
      %p253 = por %p251, %p252
      %p254 = scmp.ne.s32.totalorder %s242, %s243
      %p255 = scmp.eq.s32.totalorder %s32, 1
      %p256 = por %p254, %p255
      %p258 = scmp.ne.s32.totalorder %s243, %s257
      %p259 = scmp.eq.s32.totalorder %s32, 0
      %p260 = por %p258, %p259
      %s262 = sadd.s32 %s261, 1
      %p265 = scmp.eq.s32.totalorder %s26, 1
      %p266 = scmp.ne.s32.totalorder %s261, %s263
      %p267 = scmp.eq.s32.totalorder %s26, 0
      %p268 = por %p266, %p267
      %p269 = scmp.ne.s32.totalorder %s261, %s263
      %p270 = scmp.eq.s32.totalorder %s31, 1
      %p271 = por %p269, %p270
      %p272 = scmp.ne.s32.totalorder %s263, %s264
      %p273 = scmp.eq.s32.totalorder %s31, 0
      %p274 = por %p272, %p273
      %p275 = scmp.ne.s32.totalorder %s263, %s264
      %p276 = scmp.eq.s32.totalorder %s32, 1
      %p277 = por %p275, %p276
      %p279 = scmp.ne.s32.totalorder %s264, %s278
      %p280 = scmp.eq.s32.totalorder %s32, 0
      %p281 = por %p279, %p280
      %s283 = sadd.s32 %s282, 1
      %p286 = scmp.eq.s32.totalorder %s26, 1
      %p287 = scmp.ne.s32.totalorder %s282, %s284
      %p288 = scmp.eq.s32.totalorder %s26, 0
      %p289 = por %p287, %p288
      %p290 = scmp.ne.s32.totalorder %s282, %s284
      %p291 = scmp.eq.s32.totalorder %s31, 1
      %p292 = por %p290, %p291
      %p293 = scmp.ne.s32.totalorder %s284, %s285
      %p294 = scmp.eq.s32.totalorder %s31, 0
      %p295 = por %p293, %p294
      %p296 = scmp.ne.s32.totalorder %s284, %s285
      %p297 = scmp.eq.s32.totalorder %s32, 1
      %p298 = por %p296, %p297
      %p300 = scmp.ne.s32.totalorder %s285, %s299
      %p301 = scmp.eq.s32.totalorder %s32, 0
      %p302 = por %p300, %p301
      %s303 = ssub.s32 %s33, %s45
      %s304 = ssub.s32 %s34, %s41
      %s305 = sor.u32 %s303, %s304
      %p306 = scmp.eq.s32.totalorder %s305, 0
      %s308 = sadd.s32 %s307, 1
      %s309 = scalar_select %p306, %s307, %s308
      %p312 = pneg %p306
      %p313 = scmp.eq.s32.totalorder %s26, 1
      %p314 = por %p312, %p313
      %p315 = scmp.ne.s32.totalorder %s307, %s310
      %p316 = scmp.eq.s32.totalorder %s26, 0
      %p317 = por %p315, %p316
      %p318 = scmp.ne.s32.totalorder %s307, %s310
      %p319 = scmp.eq.s32.totalorder %s31, 1
      %p320 = por %p318, %p319
      %p321 = scmp.ne.s32.totalorder %s310, %s311
      %p322 = scmp.eq.s32.totalorder %s31, 0
      %p323 = por %p321, %p322
      %p324 = scmp.ne.s32.totalorder %s310, %s311
      %p325 = scmp.eq.s32.totalorder %s32, 1
      %p326 = por %p324, %p325
      %p328 = scmp.ne.s32.totalorder %s311, %s327
      %p329 = scmp.eq.s32.totalorder %s32, 0
      %p330 = por %p328, %p329
      %p331 = scmp.le.s32.totalorder 1, %s26
      %p332 = scmp.lt.s32.totalorder %s26, 3
      %p333 = pnand %p331, %p332
      %p334 = pneg %p333
      // Predicated region
      $region9: #{tpu_custom_call.1} parent=5 // pred_check
        _
      $region10: #{tpu_custom_call.1} parent=5 // pred_check_branch
        %336 = sbr.rel (%p333) target = $region12
      $region11: #{tpu_custom_call.1} parent=5 // pred_region
        %s337 = ssub.s32 %s26, 1
        // Predicated region
        $region13: #{tpu_custom_call.1} parent=11 // pred_check
          %p338 = pneg %p85
        $region14: #{tpu_custom_call.1} parent=11 // pred_check_branch
          %340 = sbr.rel (%p338) target = $region16
        $region15: #{tpu_custom_call.1} parent=11 // pred_region
          %342 = vsyncadd [#allocation9], 0
          %s343 = sshll.u32 %s1, 4
          %s344 = int_to_ptr.hbm [resolvable:$true] %s343
          %s345 = sshll.u32 [#allocation8], 4
          %s346 = int_to_ptr.vmem [resolvable:$true] %s345
          %351 = dma.hbm_to_vmem [thread:$0]  %s344, 256, %s346, [#allocation9], 64, 64, 4
        $region16: #{tpu_custom_call.1} parent=11 // pred_fallthru
          _
        // Predicated region
        $region17: #{tpu_custom_call.1} parent=11 // pred_check
          %p352 = pneg %p106
        $region18: #{tpu_custom_call.1} parent=11 // pred_check_branch
          %354 = sbr.rel (%p352) target = $region20
        $region19: #{tpu_custom_call.1} parent=11 // pred_region
          %356 = vsyncadd [#allocation9], 0
          %s357 = sshll.u32 %s2, 4
          %s358 = int_to_ptr.hbm [resolvable:$true] %s357
          %s359 = sshll.u32 [#allocation10], 4
          %s360 = int_to_ptr.vmem [resolvable:$true] %s359
          %365 = dma.hbm_to_vmem [thread:$0]  %s358, 256, %s360, [#allocation9], 64, 64, 4
        $region20: #{tpu_custom_call.1} parent=11 // pred_fallthru
          _
        // Predicated region
        $region21: #{tpu_custom_call.1} parent=11 // pred_check
          %p366 = pneg %p127
        $region22: #{tpu_custom_call.1} parent=11 // pred_check_branch
          %368 = sbr.rel (%p366) target = $region24
        $region23: #{tpu_custom_call.1} parent=11 // pred_region
          %370 = vsyncadd [#allocation12], 0
          %s371 = sshll.u32 %s3, 4
          %s372 = int_to_ptr.hbm [resolvable:$true] %s371
          %s373 = sshll.u32 [#allocation11], 4
          %s374 = int_to_ptr.vmem [resolvable:$true] %s373
          %379 = dma.hbm_to_vmem [thread:$0]  %s372, 256, %s374, [#allocation12], 64, 64, 4
        $region24: #{tpu_custom_call.1} parent=11 // pred_fallthru
          _
        // Predicated region
        $region25: #{tpu_custom_call.1} parent=11 // pred_check
          %p380 = pneg %p148
        $region26: #{tpu_custom_call.1} parent=11 // pred_check_branch
          %382 = sbr.rel (%p380) target = $region28
        $region27: #{tpu_custom_call.1} parent=11 // pred_region
          %384 = vsyncadd [#allocation12], 0
          %s385 = sshll.u32 %s4, 4
          %s386 = int_to_ptr.hbm [resolvable:$true] %s385
          %s387 = sshll.u32 [#allocation13], 4
          %s388 = int_to_ptr.vmem [resolvable:$true] %s387
          %393 = dma.hbm_to_vmem [thread:$0]  %s386, 256, %s388, [#allocation12], 64, 64, 4
        $region28: #{tpu_custom_call.1} parent=11 // pred_fallthru
          _
        // Predicated region
        $region29: #{tpu_custom_call.1} parent=11 // pred_check
          %p394 = pneg %p169
        $region30: #{tpu_custom_call.1} parent=11 // pred_check_branch
          %396 = sbr.rel (%p394) target = $region32
        $region31: #{tpu_custom_call.1} parent=11 // pred_region
          _
        $region32: #{tpu_custom_call.1} parent=11 // pred_fallthru
          _
        // Predicated region
        $region33: #{tpu_custom_call.1} parent=11 // pred_check
          %p397 = pneg %p190
        $region34: #{tpu_custom_call.1} parent=11 // pred_check_branch
          %399 = sbr.rel (%p397) target = $region36
        $region35: #{tpu_custom_call.1} parent=11 // pred_region
          _
        $region36: #{tpu_custom_call.1} parent=11 // pred_fallthru
          _
        // Predicated region
        $region37: #{tpu_custom_call.1} parent=11 // pred_check
          %p400 = pneg %p211
        $region38: #{tpu_custom_call.1} parent=11 // pred_check_branch
          %402 = sbr.rel (%p400) target = $region40
        $region39: #{tpu_custom_call.1} parent=11 // pred_region
          _
        $region40: #{tpu_custom_call.1} parent=11 // pred_fallthru
          _
        // Predicated region
        $region41: #{tpu_custom_call.1} parent=11 // pred_check
          %p403 = pneg %p232
        $region42: #{tpu_custom_call.1} parent=11 // pred_check_branch
          %405 = sbr.rel (%p403) target = $region44
        $region43: #{tpu_custom_call.1} parent=11 // pred_region
          _
        $region44: #{tpu_custom_call.1} parent=11 // pred_fallthru
          _
        // Predicated region
        $region45: #{tpu_custom_call.1} parent=11 // pred_check
          %p406 = pneg %p253
        $region46: #{tpu_custom_call.1} parent=11 // pred_check_branch
          %408 = sbr.rel (%p406) target = $region48
        $region47: #{tpu_custom_call.1} parent=11 // pred_region
          _
        $region48: #{tpu_custom_call.1} parent=11 // pred_fallthru
          _
        // Predicated region
        $region49: #{tpu_custom_call.1} parent=11 // pred_check
          %p409 = pneg %p274
        $region50: #{tpu_custom_call.1} parent=11 // pred_check_branch
          %411 = sbr.rel (%p409) target = $region52
        $region51: #{tpu_custom_call.1} parent=11 // pred_region
          _
        $region52: #{tpu_custom_call.1} parent=11 // pred_fallthru
          _
        // Predicated region
        $region53: #{tpu_custom_call.1} parent=11 // pred_check
          %p412 = pneg %p295
        $region54: #{tpu_custom_call.1} parent=11 // pred_check_branch
          %414 = sbr.rel (%p412) target = $region56
        $region55: #{tpu_custom_call.1} parent=11 // pred_region
          _
        $region56: #{tpu_custom_call.1} parent=11 // pred_fallthru
          _
      $region12: #{tpu_custom_call.1} parent=5 // pred_fallthru
        _
      %p415 = scmp.lt.s32.totalorder %s26, 2
      // Predicated region
      $region57: #{tpu_custom_call.1} parent=5 // pred_check
        %p416 = pneg %p415
      $region58: #{tpu_custom_call.1} parent=5 // pred_check_branch
        %418 = sbr.rel (%p416) target = $region60
      $region59: #{tpu_custom_call.1} parent=5 // pred_region
        // Predicated region
        $region61: #{tpu_custom_call.1} parent=59 // pred_check
          %p419 = pneg %p58
        $region62: #{tpu_custom_call.1} parent=59 // pred_check_branch
          %421 = sbr.rel (%p419) target = $region64
        $region63: #{tpu_custom_call.1} parent=59 // pred_region
          %s422 = sand.u32 %s48, 1
          %s423 = scalar_lea.sflag [#allocation6], %s422
          %s424 = sand.u32 %s48, 1
          %s425 = smul.addr %s424, 8
          %s426 = scalar_lea.vmem [#allocation5], %s425
          %428 = vsyncadd %s423, 0
          %s429 = smul.addr %s33, 8
          %s430 = scalar_lea.hbm %s0, %s429
          %s432 = sshll.u32 %s430, 4
          %s433 = int_to_ptr.hbm [resolvable:$true] %s432
          %s434 = sshll.u32 %s426, 4
          %s435 = int_to_ptr.vmem [resolvable:$true] %s434
          %437 = dma.hbm_to_vmem [thread:$0]  %s433, 128, %s435, %s423
        $region64: #{tpu_custom_call.1} parent=59 // pred_fallthru
          _
      $region60: #{tpu_custom_call.1} parent=5 // pred_fallthru
        _
      %p438 = scmp.le.s32.totalorder 1, %s26
      %p439 = scmp.lt.s32.totalorder %s26, 3
      %p440 = pnand %p438, %p439
      %p441 = pneg %p440
      // Predicated region
      $region65: #{tpu_custom_call.1} parent=5 // pred_check
        _
      $region66: #{tpu_custom_call.1} parent=5 // pred_check_branch
        %443 = sbr.rel (%p440) target = $region68
      $region67: #{tpu_custom_call.1} parent=5 // pred_region
        %s444 = ssub.s32 %s26, 1
        %s445 = sand.u32 %s51, 1
        %s446 = scalar_lea.sflag [#allocation6], %s445
        %s447 = sand.u32 %s51, 1
        %s448 = smul.addr %s447, 8
        %s449 = scalar_lea.vmem [#allocation5], %s448
        // Predicated region
        $region69: #{tpu_custom_call.1} parent=67 // pred_check
          %p450 = pneg %p64
        $region70: #{tpu_custom_call.1} parent=67 // pred_check_branch
          %452 = sbr.rel (%p450) target = $region72
        $region71: #{tpu_custom_call.1} parent=67 // pred_region
          %454 = dma.done %s446, 128
        $region72: #{tpu_custom_call.1} parent=67 // pred_fallthru
          _
        // Predicated region
        $region73: #{tpu_custom_call.1} parent=67 // pred_check
          %p455 = pneg %p85
        $region74: #{tpu_custom_call.1} parent=67 // pred_check_branch
          %457 = sbr.rel (%p455) target = $region76
        $region75: #{tpu_custom_call.1} parent=67 // pred_region
          %459 = dma.done [#allocation9], 256
        $region76: #{tpu_custom_call.1} parent=67 // pred_fallthru
          _
        // Predicated region
        $region77: #{tpu_custom_call.1} parent=67 // pred_check
          %p460 = pneg %p106
        $region78: #{tpu_custom_call.1} parent=67 // pred_check_branch
          %462 = sbr.rel (%p460) target = $region80
        $region79: #{tpu_custom_call.1} parent=67 // pred_region
          %464 = dma.done [#allocation9], 256
        $region80: #{tpu_custom_call.1} parent=67 // pred_fallthru
          _
        // Predicated region
        $region81: #{tpu_custom_call.1} parent=67 // pred_check
          %p465 = pneg %p127
        $region82: #{tpu_custom_call.1} parent=67 // pred_check_branch
          %467 = sbr.rel (%p465) target = $region84
        $region83: #{tpu_custom_call.1} parent=67 // pred_region
          %469 = dma.done [#allocation12], 256
        $region84: #{tpu_custom_call.1} parent=67 // pred_fallthru
          _
        // Predicated region
        $region85: #{tpu_custom_call.1} parent=67 // pred_check
          %p470 = pneg %p148
        $region86: #{tpu_custom_call.1} parent=67 // pred_check_branch
          %472 = sbr.rel (%p470) target = $region88
        $region87: #{tpu_custom_call.1} parent=67 // pred_region
          %474 = dma.done [#allocation12], 256
        $region88: #{tpu_custom_call.1} parent=67 // pred_fallthru
          _
        %s475 = sand.u32 %s51, 1
        %s476 = scalar_lea.sflag [#allocation6], %s475
        %s477 = sand.u32 %s51, 1
        %s478 = smul.addr %s477, 8
        %s479 = scalar_lea.vmem [#allocation5], %s478
        %p480 = pneg %p64
        %p481 = pneg %p61
        %p482 = pneg %p85
        %p483 = pneg %p82
        %p484 = pneg %p106
        %p485 = pneg %p103
        %p486 = pneg %p127
        %p487 = pneg %p124
        %p488 = pneg %p148
        %p489 = pneg %p145
        %p490 = pneg %p169
        %p491 = pneg %p166
        %p492 = pneg %p190
        %p493 = pneg %p187
        %p494 = pneg %p211
        %p495 = pneg %p208
        %p496 = pneg %p232
        %p497 = pneg %p229
        %p498 = pneg %p253
        %p499 = pneg %p250
        %p500 = pneg %p274
        %p501 = pneg %p271
        %p502 = pneg %p295
        %p503 = pneg %p292
        %p504 = pneg %p323
        %p505 = pneg %p320
        %s506 = sand.u32 %s310, 1
        %s507 = scalar_lea.sflag [#allocation7], %s506
        %s508 = sand.u32 %s310, 1
        %s509 = smul.addr %s508, 8
        %s510 = scalar_lea.vmem [#allocation14], %s509
        %p512 = scmp.eq.s32.totalorder %s36, 0
        // Predicated region
        $region89: #{tpu_custom_call.1} parent=67 // pred_check
          %p513 = pneg %p512
        $region90: #{tpu_custom_call.1} parent=67 // pred_check_branch
          %515 = sbr.rel (%p513) target = $region92
        $region91: #{tpu_custom_call.1} parent=67 // pred_region
          %v516 = vld [vmem:[%s449] sm:$0xff]
          %v517 = vld [vmem:[%s6] sm:$0x1]
          %v518 = vld [vmem:[%s7] sm:$0x1]
          %vm519 = vcmask 261120
          %v520 = vsel %vm519, %v516, 0.0
          %521 = vadd.xlane.f32.xlu0 %v520
          %v522 = vpop.xlane.xlu0 %521
          %v523 = vrcp.pop 32.0
          %v524 = vmul.f32 32.0, %v523
          %v525 = vsub.f32 1.0, %v524
          %v526 = vmul.f32 %v523, %v525
          %v527 = vadd.f32 %v523, %v526
          %vm528 = vweird.f32 %v523
          %v529 = vsel %vm528, %v523, %v527
          %v530 = vmul.f32 %v522, %v529
          %v531 = vsub.f32 %v516, %v530
          %v532 = vmul.f32 %v531, %v531
          %v533 = vsel %vm519, %v532, 0.0
          %534 = vadd.xlane.f32.xlu0 %v533
          %v535 = vpop.xlane.xlu0 %534
          %v536 = vmul.f32 %v535, %v529
          %v537 = vadd.f32 %v536, 1e-05
          %v538 = vrsqrt.pop %v537
          %v539 = vmul.f32 %v538, %v537
          %v540 = vmul.f32 %v539, %v538
          %v541 = vmul.f32 0.5, %v540
          %v542 = vsub.f32 1.5, %v541
          %v543 = vmul.f32 %v538, %v542
          %vm544 = vweird.f32 %v537
          %vm545 = vweird.f32 %v538
          %vm546 = vmor %vm544, %vm545
          %v547 = vsel %vm546, %v538, %v543
          %v548 = vmul.f32 %v531, %v547
          %v550 = vperm.slane %v517, 0
          %v552 = vmul.f32 %v548, %v550
          %v554 = vperm.slane %v518, 0
          %v556 = vadd.f32 %v552, %v554
          %v557 = vpack.c.bf16 %v556, %v556
          %vm558 = vcmask 257024
          %559 = vst.msk [vmem:[#allocation2] sm:$0xf] %vm558, %v557
          %v560 = vld [vmem:[#allocation10] sm:$0xf]
          %v561 = vld [vmem:[#allocation10 + $0x4] sm:$0xf]
          %v562 = vld [vmem:[#allocation10 + $0x8] sm:$0xf]
          %v563 = vld [vmem:[#allocation10 + $0xc] sm:$0xf]
          %v568 = vunpack.c.l.b16 %v560
          %v569 = vunpack.c.l.b16 %v561
          %v570 = vunpack.c.l.b16 %v562
          %v571 = vunpack.c.l.b16 %v563
          %v572 = vpack.c.b16 %v569, %v568
          %v573 = vpack.c.b16 %v571, %v570
          %v577 = vsel %vm519, %v557, 0
          %579 = vmatpush.bf16.msra.mxu0 0
          %580 = vmatpush.bf16.msra.mxu0 0
          %581 = vmatpush.bf16.msra.mxu0 0
          %582 = vmatpush.bf16.msra.mxu0 0
          %583 = vmatpush.bf16.msra.mxu0 0
          %584 = vmatpush.bf16.msra.mxu0 0
          %585 = vmatpush.bf16.msra.mxu0 %v573
          %586 = vmatpush.bf16.msra.mxu0 %v572
          %587 = vmatmul.bf16.gmra.mxu0 %v577
          %v588 = vpop.f32.mrf.mxu0
          %v589 = vadd.f32 0.0, %v588
          %v590 = vpop.f32.mrf.mxu0
          %591 = vdwg.mxu0
          %v592 = vld [vmem:[#allocation11] sm:$0xf]
          %v593 = vld [vmem:[#allocation11 + $0x4] sm:$0xf]
          %v594 = vld [vmem:[#allocation11 + $0x8] sm:$0xf]
          %v595 = vld [vmem:[#allocation11 + $0xc] sm:$0xf]
          %v600 = vunpack.c.l.b16 %v592
          %v601 = vunpack.c.l.b16 %v593
          %v602 = vunpack.c.l.b16 %v594
          %v603 = vunpack.c.l.b16 %v595
          %v604 = vpack.c.b16 %v601, %v600
          %v605 = vpack.c.b16 %v603, %v602
          %608 = vmatpush.bf16.msra.mxu0 0
          %609 = vmatpush.bf16.msra.mxu0 0
          %610 = vmatpush.bf16.msra.mxu0 0
          %611 = vmatpush.bf16.msra.mxu0 0
          %612 = vmatpush.bf16.msra.mxu0 0
          %613 = vmatpush.bf16.msra.mxu0 0
          %614 = vmatpush.bf16.msra.mxu0 %v605
          %615 = vmatpush.bf16.msra.mxu0 %v604
          %616 = vmatmul.bf16.gmra.mxu0 %v577
          %v617 = vpop.f32.mrf.mxu0
          %v618 = vadd.f32 0.0, %v617
          %v619 = vpop.f32.mrf.mxu0
          %620 = vdwg.mxu0
          %v621 = vld [vmem:[%s8] sm:$0x1]
          %v622 = vld [vmem:[%s9] sm:$0x1]
          %vm623 = vcmask 130048
          %v624 = vsel %vm623, %v589, 0.0
          %625 = vadd.xlane.f32.xlu0 %v624
          %v626 = vpop.xlane.xlu0 %625
          %v627 = vrcp.pop 16.0
          %v628 = vmul.f32 16.0, %v627
          %v629 = vsub.f32 1.0, %v628
          %v630 = vmul.f32 %v627, %v629
          %v631 = vadd.f32 %v627, %v630
          %vm632 = vweird.f32 %v627
          %v633 = vsel %vm632, %v627, %v631
          %v634 = vmul.f32 %v626, %v633
          %v635 = vsub.f32 %v589, %v634
          %v636 = vmul.f32 %v635, %v635
          %v637 = vsel %vm623, %v636, 0.0
          %638 = vadd.xlane.f32.xlu0 %v637
          %v639 = vpop.xlane.xlu0 %638
          %v640 = vmul.f32 %v639, %v633
          %v641 = vadd.f32 %v640, 1e-05
          %v642 = vrsqrt.pop %v641
          %v643 = vmul.f32 %v642, %v641
          %v644 = vmul.f32 %v643, %v642
          %v645 = vmul.f32 0.5, %v644
          %v646 = vsub.f32 1.5, %v645
          %v647 = vmul.f32 %v642, %v646
          %vm648 = vweird.f32 %v641
          %vm649 = vweird.f32 %v642
          %vm650 = vmor %vm648, %vm649
          %v651 = vsel %vm650, %v642, %v647
          %v652 = vmul.f32 %v635, %v651
          %v654 = vperm.slane %v621, 0
          %v656 = vmul.f32 %v652, %v654
          %v658 = vperm.slane %v622, 0
          %v660 = vadd.f32 %v656, %v658
          %661 = vxpose.xlu0.b32.start [1/16] %v660, 128
          %662 = vxpose.xlu0.b32.cont [2/16] 0.0, 128
          %663 = vxpose.xlu0.b32.cont [3/16] 0.0, 128
          %664 = vxpose.xlu0.b32.cont [4/16] 0.0, 128
          %665 = vxpose.xlu0.b32.cont [5/16] 0.0, 128
          %666 = vxpose.xlu0.b32.cont [6/16] 0.0, 128
          %667 = vxpose.xlu0.b32.cont [7/16] 0.0, 128
          %668 = vxpose.xlu0.b32.cont [8/16] 0.0, 128
          %669 = vxpose.xlu0.b32.cont [9/16] 0.0, 128
          %670 = vxpose.xlu0.b32.cont [10/16] 0.0, 128
          %671 = vxpose.xlu0.b32.cont [11/16] 0.0, 128
          %672 = vxpose.xlu0.b32.cont [12/16] 0.0, 128
          %673 = vxpose.xlu0.b32.cont [13/16] 0.0, 128
          %674 = vxpose.xlu0.b32.cont [14/16] 0.0, 128
          %675 = vxpose.xlu0.b32.cont [15/16] 0.0, 128
          %676 = vxpose.xlu0.b32.end [16/16] 0.0, 128
          %v677 = vpop.trf.xlu0
          %v678 = vpop.trf.xlu0
          %v679 = vpop.trf.xlu0
          %v680 = vpop.trf.xlu0
          %v681 = vpop.trf.xlu0
          %v682 = vpop.trf.xlu0
          %v683 = vpop.trf.xlu0
          %v684 = vpop.trf.xlu0
          %v685 = vpop.trf.xlu0
          %v686 = vpop.trf.xlu0
          %v687 = vpop.trf.xlu0
          %v688 = vpop.trf.xlu0
          %v689 = vpop.trf.xlu0
          %v690 = vpop.trf.xlu0
          %v691 = vpop.trf.xlu0
          %v692 = vpop.trf.xlu0
          %694 = vrot.lane.b32.xlu0 %v589, 112
          %v695 = vpop.permute.xlu0 %694
          %v697 = vsel %vm623, %v695, 0.0
          %698 = vadd.xlane.f32.xlu0 %v697
          %v699 = vpop.xlane.xlu0 %698
          %v700 = vmul.f32 %v699, %v633
          %v701 = vsub.f32 %v589, %v700
          %v702 = vmul.f32 %v701, %v701
          %704 = vrot.lane.b32.xlu0 %v702, 112
          %v705 = vpop.permute.xlu0 %704
          %v707 = vsel %vm623, %v705, 0.0
          %708 = vadd.xlane.f32.xlu0 %v707
          %v709 = vpop.xlane.xlu0 %708
          %v710 = vmul.f32 %v709, %v633
          %v711 = vadd.f32 %v710, 1e-05
          %v712 = vrsqrt.pop %v711
          %v713 = vmul.f32 %v712, %v711
          %v714 = vmul.f32 %v713, %v712
          %v715 = vmul.f32 0.5, %v714
          %v716 = vsub.f32 1.5, %v715
          %v717 = vmul.f32 %v712, %v716
          %vm718 = vweird.f32 %v711
          %vm719 = vweird.f32 %v712
          %vm720 = vmor %vm718, %vm719
          %v721 = vsel %vm720, %v712, %v717
          %v722 = vmul.f32 %v701, %v721
          %723 = vrot.lane.b32.xlu0 %v654, 16
          %v724 = vpop.permute.xlu0 %723
          %v726 = vmul.f32 %v722, %v724
          %727 = vrot.lane.b32.xlu0 %v658, 16
          %v728 = vpop.permute.xlu0 %727
          %v730 = vadd.f32 %v726, %v728
          %732 = vrot.lane.b32.xlu0 %v730, 112
          %v733 = vpop.permute.xlu0 %732
          %735 = vxpose.xlu0.b32.start [1/16] %v733, 128
          %736 = vxpose.xlu0.b32.cont [2/16] 0.0, 128
          %737 = vxpose.xlu0.b32.cont [3/16] 0.0, 128
          %738 = vxpose.xlu0.b32.cont [4/16] 0.0, 128
          %739 = vxpose.xlu0.b32.cont [5/16] 0.0, 128
          %740 = vxpose.xlu0.b32.cont [6/16] 0.0, 128
          %741 = vxpose.xlu0.b32.cont [7/16] 0.0, 128
          %742 = vxpose.xlu0.b32.cont [8/16] 0.0, 128
          %743 = vxpose.xlu0.b32.cont [9/16] 0.0, 128
          %744 = vxpose.xlu0.b32.cont [10/16] 0.0, 128
          %745 = vxpose.xlu0.b32.cont [11/16] 0.0, 128
          %746 = vxpose.xlu0.b32.cont [12/16] 0.0, 128
          %747 = vxpose.xlu0.b32.cont [13/16] 0.0, 128
          %748 = vxpose.xlu0.b32.cont [14/16] 0.0, 128
          %749 = vxpose.xlu0.b32.cont [15/16] 0.0, 128
          %750 = vxpose.xlu0.b32.end [16/16] 0.0, 128
          %v751 = vpop.trf.xlu0
          %v752 = vpop.trf.xlu0
          %v753 = vpop.trf.xlu0
          %v754 = vpop.trf.xlu0
          %v755 = vpop.trf.xlu0
          %v756 = vpop.trf.xlu0
          %v757 = vpop.trf.xlu0
          %v758 = vpop.trf.xlu0
          %v759 = vpop.trf.xlu0
          %v760 = vpop.trf.xlu0
          %v761 = vpop.trf.xlu0
          %v762 = vpop.trf.xlu0
          %v763 = vpop.trf.xlu0
          %v764 = vpop.trf.xlu0
          %v765 = vpop.trf.xlu0
          %v766 = vpop.trf.xlu0
          %v767 = vpack.c.bf16 %v677, %v677
          %v768 = vpack.c.bf16 %v678, %v678
          %v769 = vpack.c.bf16 %v751, %v751
          %v770 = vpack.c.bf16 %v752, %v752
          %vm771 = vcmask 60416
          %772 = vst.msk [vmem:[#allocation3] sm:$0xf] %vm771, %v767
          %773 = vst.msk [vmem:[#allocation3 + $0x4] sm:$0xf] %vm771, %v768
          %774 = vst.msk [vmem:[#allocation3 + $0x8] sm:$0xf] %vm771, %v769
          %775 = vst.msk [vmem:[#allocation3 + $0xc] sm:$0xf] %vm771, %v770
          %v776 = vld [vmem:[%s10] sm:$0x1]
          %v777 = vld [vmem:[%s11] sm:$0x1]
          %v778 = vsel %vm623, %v618, 0.0
          %779 = vadd.xlane.f32.xlu0 %v778
          %v780 = vpop.xlane.xlu0 %779
          %v781 = vmul.f32 %v780, %v633
          %v782 = vsub.f32 %v618, %v781
          %v783 = vmul.f32 %v782, %v782
          %v784 = vsel %vm623, %v783, 0.0
          %785 = vadd.xlane.f32.xlu0 %v784
          %v786 = vpop.xlane.xlu0 %785
          %v787 = vmul.f32 %v786, %v633
          %v788 = vadd.f32 %v787, 1e-05
          %v789 = vrsqrt.pop %v788
          %v790 = vmul.f32 %v789, %v788
          %v791 = vmul.f32 %v790, %v789
          %v792 = vmul.f32 0.5, %v791
          %v793 = vsub.f32 1.5, %v792
          %v794 = vmul.f32 %v789, %v793
          %vm795 = vweird.f32 %v788
          %vm796 = vweird.f32 %v789
          %vm797 = vmor %vm795, %vm796
          %v798 = vsel %vm797, %v789, %v794
          %v799 = vmul.f32 %v782, %v798
          %v801 = vperm.slane %v776, 0
          %v803 = vmul.f32 %v799, %v801
          %v805 = vperm.slane %v777, 0
          %v807 = vadd.f32 %v803, %v805
          %809 = vrot.lane.b32.xlu0 %v618, 112
          %v810 = vpop.permute.xlu0 %809
          %v812 = vsel %vm623, %v810, 0.0
          %813 = vadd.xlane.f32.xlu0 %v812
          %v814 = vpop.xlane.xlu0 %813
          %v815 = vmul.f32 %v814, %v633
          %v816 = vsub.f32 %v618, %v815
          %v817 = vmul.f32 %v816, %v816
          %819 = vrot.lane.b32.xlu0 %v817, 112
          %v820 = vpop.permute.xlu0 %819
          %v822 = vsel %vm623, %v820, 0.0
          %823 = vadd.xlane.f32.xlu0 %v822
          %v824 = vpop.xlane.xlu0 %823
          %v825 = vmul.f32 %v824, %v633
          %v826 = vadd.f32 %v825, 1e-05
          %v827 = vrsqrt.pop %v826
          %v828 = vmul.f32 %v827, %v826
          %v829 = vmul.f32 %v828, %v827
          %v830 = vmul.f32 0.5, %v829
          %v831 = vsub.f32 1.5, %v830
          %v832 = vmul.f32 %v827, %v831
          %vm833 = vweird.f32 %v826
          %vm834 = vweird.f32 %v827
          %vm835 = vmor %vm833, %vm834
          %v836 = vsel %vm835, %v827, %v832
          %v837 = vmul.f32 %v816, %v836
          %838 = vrot.lane.b32.xlu0 %v801, 16
          %v839 = vpop.permute.xlu0 %838
          %v841 = vmul.f32 %v837, %v839
          %842 = vrot.lane.b32.xlu0 %v805, 16
          %v843 = vpop.permute.xlu0 %842
          %v845 = vadd.f32 %v841, %v843
          %847 = vrot.lane.b32.xlu0 %v845, 112
          %v848 = vpop.permute.xlu0 %847
          %v850 = vpack.c.bf16 %v807, %v807
          %v851 = vpack.c.bf16 %v848, %v848
          %vm852 = vcmask 125952
          %853 = vst.msk [vmem:[#allocation4] sm:$0xf] %vm852, %v850
          %854 = vst.msk [vmem:[#allocation4 + $0x4] sm:$0xf] %vm852, %v851
        $region92: #{tpu_custom_call.1} parent=67 // pred_fallthru
          _
        %s855 = smul.u32 %s36, 8
        %s856 = sshra.s32 %s855, 3
        %s857 = sand.u32 %s855, 7
        %s858 = smul.addr %s856, 4
        %s859 = scalar_lea.vmem [#allocation2], %s858
        %v860 = vld [vmem:[%s859] sm:$0xf]
        %v861 = vld [vmem:[#allocation8] sm:$0xf]
        %v862 = vld [vmem:[#allocation8 + $0x4] sm:$0xf]
        %v863 = vld [vmem:[#allocation8 + $0x8] sm:$0xf]
        %v864 = vld [vmem:[#allocation8 + $0xc] sm:$0xf]
        %v869 = vunpack.c.l.b16 %v861
        %v870 = vunpack.c.l.b16 %v862
        %v871 = vunpack.c.l.b16 %v863
        %v872 = vunpack.c.l.b16 %v864
        %v873 = vpack.c.b16 %v870, %v869
        %v874 = vpack.c.b16 %v872, %v871
        %vm877 = vcmask 261120
        %v879 = vsel %vm877, %v860, 0
        %881 = vmatpush.bf16.msra.mxu0 0
        %882 = vmatpush.bf16.msra.mxu0 0
        %883 = vmatpush.bf16.msra.mxu0 0
        %884 = vmatpush.bf16.msra.mxu0 0
        %885 = vmatpush.bf16.msra.mxu0 0
        %886 = vmatpush.bf16.msra.mxu0 0
        %887 = vmatpush.bf16.msra.mxu0 %v874
        %888 = vmatpush.bf16.msra.mxu0 %v873
        %889 = vmatmul.bf16.gmra.mxu0 %v879
        %v890 = vpop.f32.mrf.mxu0
        %v891 = vadd.f32 0.0, %v890
        %v892 = vpop.f32.mrf.mxu0
        %893 = vdwg.mxu0
        %v894 = vmul.f32 %v891, 0.25
        %896 = vrot.lane.b32.xlu0 %v894, 112
        %v897 = vpop.permute.xlu0 %896
        %v899 = vpack.c.bf16 %v894, %v894
        %v900 = vpack.c.bf16 %v897, %v897
        %v901 = vld [vmem:[#allocation3] sm:$0xf]
        %v902 = vld [vmem:[#allocation3 + $0x4] sm:$0xf]
        %v903 = vld [vmem:[#allocation3 + $0x8] sm:$0xf]
        %v904 = vld [vmem:[#allocation3 + $0xc] sm:$0xf]
        %v907 = vunpack.c.l.b16 %v901
        %v908 = vunpack.c.l.b16 %v902
        %v909 = vpack.c.b16 %v908, %v907
        %vm911 = vcmask 130048
        %v913 = vsel %vm911, %v899, 0
        %915 = vmatpush.bf16.msra.mxu0 0
        %916 = vmatpush.bf16.msra.mxu0 0
        %917 = vmatpush.bf16.msra.mxu0 0
        %918 = vmatpush.bf16.msra.mxu0 0
        %919 = vmatpush.bf16.msra.mxu0 0
        %920 = vmatpush.bf16.msra.mxu0 0
        %921 = vmatpush.bf16.msra.mxu0 0
        %922 = vmatpush.bf16.msra.mxu0 %v909
        %923 = vmatmul.bf16.gmra.mxu0 %v913
        %v924 = vpop.f32.mrf.mxu0
        %v925 = vadd.f32 0.0, %v924
        %v926 = vpop.f32.mrf.mxu0
        %927 = vdwg.mxu0
        %v930 = vunpack.c.l.b16 %v903
        %v931 = vunpack.c.l.b16 %v904
        %v932 = vpack.c.b16 %v931, %v930
        %v935 = vsel %vm911, %v900, 0
        %937 = vmatpush.bf16.msra.mxu0 0
        %938 = vmatpush.bf16.msra.mxu0 0
        %939 = vmatpush.bf16.msra.mxu0 0
        %940 = vmatpush.bf16.msra.mxu0 0
        %941 = vmatpush.bf16.msra.mxu0 0
        %942 = vmatpush.bf16.msra.mxu0 0
        %943 = vmatpush.bf16.msra.mxu0 0
        %944 = vmatpush.bf16.msra.mxu0 %v932
        %945 = vmatmul.bf16.gmra.mxu0 %v935
        %v946 = vpop.f32.mrf.mxu0
        %v947 = vadd.f32 0.0, %v946
        %v948 = vpop.f32.mrf.mxu0
        %949 = vdwg.mxu0
        %vm950 = vcmask 64512
        %v951 = vsel %vm950, %v925, -inf
        %952 = vmax.xlane.f32.xlu0 %v951
        %v953 = vpop.xlane.xlu0 %952
        %v954 = vsel %vm950, %v947, -inf
        %955 = vmax.xlane.f32.xlu0 %v954
        %v956 = vpop.xlane.xlu0 %955
        %v957 = vsub.f32 %v925, %v953
        %v958 = vsub.f32 %v947, %v956
        %v959 = vmul.f32 %v957, 1.442695
        %v960 = vpow.pop %v959
        %v961 = vmul.f32 %v958, 1.442695
        %v962 = vpow.pop %v961
        %v963 = vsel %vm950, %v960, 0.0
        %964 = vadd.xlane.f32.xlu0 %v963
        %v965 = vpop.xlane.xlu0 %964
        %v966 = vsel %vm950, %v962, 0.0
        %967 = vadd.xlane.f32.xlu0 %v966
        %v968 = vpop.xlane.xlu0 %967
        %v969 = vpack.c.bf16 %v960, %v960
        %v970 = vpack.c.bf16 %v962, %v962
        %v971 = vld [vmem:[#allocation4] sm:$0xf]
        %v972 = vld [vmem:[#allocation4 + $0x4] sm:$0xf]
        %v974 = vsel %vm950, %v969, 0
        %vm976 = vcmask 1043456
        %v978 = vsel %vm976, %v971, 0
        %980 = vmatpush.bf16.msra.mxu0 0
        %981 = vmatpush.bf16.msra.mxu0 0
        %982 = vmatpush.bf16.msra.mxu0 0
        %983 = vmatpush.bf16.msra.mxu0 0
        %984 = vmatpush.bf16.msra.mxu0 0
        %985 = vmatpush.bf16.msra.mxu0 0
        %986 = vmatpush.bf16.msra.mxu0 0
        %987 = vmatpush.bf16.msra.mxu0 %v978
        %988 = vmatmul.bf16.gmra.mxu0 %v974
        %v989 = vpop.f32.mrf.mxu0
        %v990 = vadd.f32 0.0, %v989
        %v991 = vpop.f32.mrf.mxu0
        %992 = vdwg.mxu0
        %v994 = vsel %vm950, %v970, 0
        %v997 = vsel %vm976, %v972, 0
        %999 = vmatpush.bf16.msra.mxu0 0
        %1000 = vmatpush.bf16.msra.mxu0 0
        %1001 = vmatpush.bf16.msra.mxu0 0
        %1002 = vmatpush.bf16.msra.mxu0 0
        %1003 = vmatpush.bf16.msra.mxu0 0
        %1004 = vmatpush.bf16.msra.mxu0 0
        %1005 = vmatpush.bf16.msra.mxu0 0
        %1006 = vmatpush.bf16.msra.mxu0 %v997
        %1007 = vmatmul.bf16.gmra.mxu0 %v994
        %v1008 = vpop.f32.mrf.mxu0
        %v1009 = vadd.f32 0.0, %v1008
        %v1010 = vpop.f32.mrf.mxu0
        %1011 = vdwg.mxu0
        %v1012 = vrcp.pop %v965
        %v1013 = vrcp.pop %v968
        %v1014 = vmul.f32 %v990, %v1012
        %v1015 = vmul.f32 %v1009, %v1013
        %1017 = vrot.lane.b32.xlu0 %v1015, 16
        %v1018 = vpop.permute.xlu0 %1017
        %v1020 = vsel %vm911, %v1014, %v1018
        %v1021 = vpack.c.bf16 %v1020, %v1020
        %v1022 = vld [vmem:[#allocation13] sm:$0xf]
        %v1023 = vld [vmem:[#allocation13 + $0x4] sm:$0xf]
        %v1024 = vld [vmem:[#allocation13 + $0x8] sm:$0xf]
        %v1025 = vld [vmem:[#allocation13 + $0xc] sm:$0xf]
        %v1026 = vld [vmem:[%s5] sm:$0x1]
        %v1028 = vperm.slane %v1026, 0
        %v1034 = vunpack.c.l.b16 %v1022
        %v1035 = vunpack.c.l.b16 %v1023
        %v1036 = vunpack.c.l.b16 %v1024
        %v1037 = vunpack.c.l.b16 %v1025
        %v1038 = vpack.c.b16 %v1035, %v1034
        %v1039 = vpack.c.b16 %v1037, %v1036
        %v1043 = vsel %vm877, %v1021, 0
        %1045 = vmatpush.bf16.msra.mxu0 0
        %1046 = vmatpush.bf16.msra.mxu0 0
        %1047 = vmatpush.bf16.msra.mxu0 0
        %1048 = vmatpush.bf16.msra.mxu0 0
        %1049 = vmatpush.bf16.msra.mxu0 0
        %1050 = vmatpush.bf16.msra.mxu0 0
        %1051 = vmatpush.bf16.msra.mxu0 %v1039
        %1052 = vmatpush.bf16.msra.mxu0 %v1038
        %1053 = vmatmul.bf16.gmra.mxu0 %v1043
        %v1054 = vpop.f32.mrf.mxu0
        %v1055 = vadd.f32 %v1028, %v1054
        %v1056 = vpop.f32.mrf.mxu0
        %1057 = vdwg.mxu0
        %1058 = vst.msk [vmem:[%s510] sm:$0xff] %vm877, %v1055
        %s1059 = sand.u32 %s310, 1
        %s1060 = scalar_lea.sflag [#allocation7], %s1059
        %s1061 = sand.u32 %s310, 1
        %s1062 = smul.addr %s1061, 8
        %s1063 = scalar_lea.vmem [#allocation14], %s1062
        // Predicated region
        $region93: #{tpu_custom_call.1} parent=67 // pred_check
          %p1064 = pneg %p320
        $region94: #{tpu_custom_call.1} parent=67 // pred_check_branch
          %1066 = sbr.rel (%p1064) target = $region96
        $region95: #{tpu_custom_call.1} parent=67 // pred_region
          %1068 = vsyncadd %s1060, 0
          %s1069 = sadd.s32 %s36, %s35
          %s1070 = smul.addr %s1069, 8
          %s1071 = scalar_lea.hbm %s12, %s1070
          %s1073 = sshll.u32 %s1063, 4
          %s1074 = int_to_ptr.vmem [resolvable:$true] %s1073
          %s1075 = sshll.u32 %s1071, 4
          %s1076 = int_to_ptr.hbm [resolvable:$true] %s1075
          %1078 = dma.vmem_to_hbm [thread:$0]  %s1074, 128, %s1076, %s1060
        $region96: #{tpu_custom_call.1} parent=67 // pred_fallthru
          _
      $region68: #{tpu_custom_call.1} parent=5 // pred_fallthru
        _
      %p1079 = scmp.le.s32.totalorder 2, %s26
      // Predicated region
      $region97: #{tpu_custom_call.1} parent=5 // pred_check
        %p1080 = pneg %p1079
      $region98: #{tpu_custom_call.1} parent=5 // pred_check_branch
        %1082 = sbr.rel (%p1080) target = $region100
      $region99: #{tpu_custom_call.1} parent=5 // pred_region
        %s1083 = ssub.s32 %s26, 2
        // Predicated region
        $region101: #{tpu_custom_call.1} parent=99 // pred_check
          %p1084 = pneg %p326
        $region102: #{tpu_custom_call.1} parent=99 // pred_check_branch
          %1086 = sbr.rel (%p1084) target = $region104
        $region103: #{tpu_custom_call.1} parent=99 // pred_region
          %s1087 = sand.u32 %s311, 1
          %s1088 = scalar_lea.sflag [#allocation7], %s1087
          %s1089 = sand.u32 %s311, 1
          %s1090 = smul.addr %s1089, 8
          %s1091 = scalar_lea.vmem [#allocation14], %s1090
          %1093 = dma.done %s1088, 128
        $region104: #{tpu_custom_call.1} parent=99 // pred_fallthru
          _
      $region100: #{tpu_custom_call.1} parent=5 // pred_fallthru
        _
    $region6: #{tpu_custom_call.1} parent=1 // loop_footer
      %s30 = sadd.s32 1, %s26
    $region7: #{tpu_custom_call.1} parent=1 // loop_footer_branch
      %25 = sbr.rel target = $region3
    $region8: #{tpu_custom_call.1} parent=1 // loop_exit
      _
    %1094 = vsyncpa [#allocation6], 1
    %s1095 = scalar_lea.sflag [#allocation6], 1
    %1096 = vsyncpa %s1095, 1
    %1097 = vsyncpa [#allocation9], 1
    %1098 = vsyncpa [#allocation12], 1
    %1099 = vsyncpa [#allocation7], 1
    %s1100 = scalar_lea.sflag [#allocation7], 1
    %1101 = vsyncpa %s1100, 1

// kernel: tpu_custom_call.1
$region0: #{tpu_custom_call.1}
  #allocation0 [shape = 'u32[]', space=smem, size = 0x4, offset = 0x4, fixed_abs, tag = 'smem constant byte address 0x4 - core index']
  #allocation1 [shape = 'u32[72,128]{1,0:T(1,128)}', space=vmem, size = 0x9000, scoped, tag = 'internal scratch']
  #allocation2 [shape = 'bf16[8,32]{1,0:T(8,128)(2,1)}', space=vmem, size = 0x800, scoped, tag = 'scratch operand']
  #allocation3 [shape = 'bf16[2,16,8]{2,1,0:T(8,128)(2,1)}', space=vmem, size = 0x2000, scoped, tag = 'scratch operand']
  #allocation4 [shape = 'bf16[2,8,16]{2,1,0:T(8,128)(2,1)}', space=vmem, size = 0x1000, scoped, tag = 'scratch operand']
  %s0 = inlined_call_operand.hbm [shape: f32[2,8,32], index: 0, kind: input, shape index: {}]
  %s1 = inlined_call_operand.hbm [shape: bf16[32,32], index: 1, kind: input, shape index: {}]
  %s2 = inlined_call_operand.hbm [shape: bf16[32,32], index: 2, kind: input, shape index: {}]
  %s3 = inlined_call_operand.hbm [shape: bf16[32,32], index: 3, kind: input, shape index: {}]
  %s4 = inlined_call_operand.hbm [shape: bf16[32,32], index: 4, kind: input, shape index: {}]
  %s5 = inlined_call_operand.vmem [shape: f32[1,32], index: 5, kind: input, shape index: {}]
  %s6 = inlined_call_operand.vmem [shape: f32[1,32], index: 6, kind: input, shape index: {}]
  %s7 = inlined_call_operand.vmem [shape: f32[1,32], index: 7, kind: input, shape index: {}]
  %s8 = inlined_call_operand.vmem [shape: f32[1,16], index: 8, kind: input, shape index: {}]
  %s9 = inlined_call_operand.vmem [shape: f32[1,16], index: 9, kind: input, shape index: {}]
  %s10 = inlined_call_operand.vmem [shape: f32[1,16], index: 10, kind: input, shape index: {}]
  %s11 = inlined_call_operand.vmem [shape: f32[1,16], index: 11, kind: input, shape index: {}]
  %s12 = inlined_call_operand.hbm [shape: f32[2,8,32], index: 12, kind: output, shape index: {}]
  %s13 = sld [smem:[#allocation0]]
  $region105: #{tpu_custom_call.1} parent=0
    _
  %s15 = ssub.s32 1, %s13
  %s16 = scalar_select 0, %s15, %s13
  $region1: #{tpu_custom_call.1} parent=0
    #allocation5 [shape = 'u8[8192]{0}', space=vmem, size = 0x2000, scoped, tag = 'input window, operand 0']
    #allocation6 [shape = 's32[2]{0}', space=sflag, size = 0x8, scoped, tag = 'scoped memory for tpu_custom_call.1']
    #allocation7 [shape = 's32[2]{0}', space=sflag, size = 0x8, scoped, tag = 'scoped memory for tpu_custom_call.1']
    #allocation8 [shape = 'u8[8192]{0}', space=vmem, size = 0x2000, scoped, tag = 'input window, operand 1, single buffered']
    #allocation9 [shape = 's32[1]{0}', space=sflag, size = 0x4, scoped, tag = 'scoped memory for tpu_custom_call.1']
    #allocation10 [shape = 'u8[8192]{0}', space=vmem, size = 0x2000, scoped, tag = 'input window, operand 2, single buffered']
    #allocation11 [shape = 'u8[8192]{0}', space=vmem, size = 0x2000, scoped, tag = 'input window, operand 3, single buffered']
    #allocation12 [shape = 's32[1]{0}', space=sflag, size = 0x4, scoped, tag = 'scoped memory for tpu_custom_call.1']
    #allocation13 [shape = 'u8[8192]{0}', space=vmem, size = 0x2000, scoped, tag = 'input window, operand 4, single buffered']
    #allocation14 [shape = 'u8[8192]{0}', space=vmem, size = 0x2000, scoped, tag = 'output window, operand 0']
    %17 = vsyncpa [#allocation6], 0
    %s18 = scalar_lea.sflag [#allocation6], 1
    %19 = vsyncpa %s18, 0
    %20 = vsyncpa [#allocation9], 0
    %21 = vsyncpa [#allocation12], 0
    %22 = vsyncpa [#allocation7], 0
    %s23 = scalar_lea.sflag [#allocation7], 1
    %24 = vsyncpa %s23, 0
    loop: start=0, step=1, limit=4
    $region2: #{tpu_custom_call.1} parent=1 // loop_pre_header
      _
    $region3: #{tpu_custom_call.1} parent=1 // loop_header
      %s26 = sphi 0, %s30
      %p27 = scmp.ge.s32.totalorder %s26, 4
      %s33 = sphi 0, %s45
      %s34 = sphi 0, %s41
      %s35 = sphi 0, %s33
      %s36 = sphi 0, %s34
      %s37 = sphi 0, %s35
      %s38 = sphi 0, %s36
      %s48 = sphi 0, %s50
      %s51 = sphi 0, %s48
      %s52 = sphi 0, %s51
      %s68 = sphi 0, %s52
      %s72 = sphi 0, %s72
      %s74 = sphi 0, %s72
      %s75 = sphi 0, %s74
      %s89 = sphi 0, %s75
      %s93 = sphi 0, %s93
      %s95 = sphi 0, %s93
      %s96 = sphi 0, %s95
      %s110 = sphi 0, %s96
      %s114 = sphi 0, %s114
      %s116 = sphi 0, %s114
      %s117 = sphi 0, %s116
      %s131 = sphi 0, %s117
      %s135 = sphi 0, %s135
      %s137 = sphi 0, %s135
      %s138 = sphi 0, %s137
      %s152 = sphi 0, %s138
      %s156 = sphi 0, %s156
      %s158 = sphi 0, %s156
      %s159 = sphi 0, %s158
      %s173 = sphi 0, %s159
      %s177 = sphi 0, %s177
      %s179 = sphi 0, %s177
      %s180 = sphi 0, %s179
      %s194 = sphi 0, %s180
      %s198 = sphi 0, %s198
      %s200 = sphi 0, %s198
      %s201 = sphi 0, %s200
      %s215 = sphi 0, %s201
      %s219 = sphi 0, %s219
      %s221 = sphi 0, %s219
      %s222 = sphi 0, %s221
      %s236 = sphi 0, %s222
      %s240 = sphi 0, %s240
      %s242 = sphi 0, %s240
      %s243 = sphi 0, %s242
      %s257 = sphi 0, %s243
      %s261 = sphi 0, %s261
      %s263 = sphi 0, %s261
      %s264 = sphi 0, %s263
      %s278 = sphi 0, %s264
      %s282 = sphi 0, %s282
      %s284 = sphi 0, %s282
      %s285 = sphi 0, %s284
      %s299 = sphi 0, %s285
      %s307 = sphi 0, %s309
      %s310 = sphi 0, %s307
      %s311 = sphi 0, %s310
      %s327 = sphi 0, %s311
    $region4: #{tpu_custom_call.1} parent=1 // loop_header_branch
      %29 = sbr.rel (%p27) target = $region8
    $region5: #{tpu_custom_call.1} parent=1 // loop_body
      %s31 = ssub.s32 %s26, 1
      %s32 = ssub.s32 %s26, 2
      %s39 = sadd.s32 1, %s34
      %p40 = scmp.ge.s32.totalorder %s39, 1
      %s41 = scalar_select %p40, 0, %s39
      %s42 = sadd.s32 1, %s33
      %s43 = scalar_select %p40, %s42, %s33
      %p44 = scmp.ge.s32.totalorder %s43, 2
      %s45 = scalar_select %p44, 0, %s43
      %s46 = ssub.s32 %s33, %s45
      %p47 = scmp.eq.s32.totalorder %s46, 0
      %s49 = sadd.s32 %s48, 1
      %s50 = scalar_select %p47, %s48, %s49
      %p53 = pneg %p47
      %p54 = scmp.eq.s32.totalorder %s26, 1
      %p55 = por %p53, %p54
      %p56 = scmp.ne.s32.totalorder %s48, %s51
      %p57 = scmp.eq.s32.totalorder %s26, 0
      %p58 = por %p56, %p57
      %p59 = scmp.ne.s32.totalorder %s48, %s51
      %p60 = scmp.eq.s32.totalorder %s31, 1
      %p61 = por %p59, %p60
      %p62 = scmp.ne.s32.totalorder %s51, %s52
      %p63 = scmp.eq.s32.totalorder %s31, 0
      %p64 = por %p62, %p63
      %p65 = scmp.ne.s32.totalorder %s51, %s52
      %p66 = scmp.eq.s32.totalorder %s32, 1
      %p67 = por %p65, %p66
      %p69 = scmp.ne.s32.totalorder %s52, %s68
      %p70 = scmp.eq.s32.totalorder %s32, 0
      %p71 = por %p69, %p70
      %s73 = sadd.s32 %s72, 1
      %p76 = scmp.eq.s32.totalorder %s26, 1
      %p77 = scmp.ne.s32.totalorder %s72, %s74
      %p78 = scmp.eq.s32.totalorder %s26, 0
      %p79 = por %p77, %p78
      %p80 = scmp.ne.s32.totalorder %s72, %s74
      %p81 = scmp.eq.s32.totalorder %s31, 1
      %p82 = por %p80, %p81
      %p83 = scmp.ne.s32.totalorder %s74, %s75
      %p84 = scmp.eq.s32.totalorder %s31, 0
      %p85 = por %p83, %p84
      %p86 = scmp.ne.s32.totalorder %s74, %s75
      %p87 = scmp.eq.s32.totalorder %s32, 1
      %p88 = por %p86, %p87
      %p90 = scmp.ne.s32.totalorder %s75, %s89
      %p91 = scmp.eq.s32.totalorder %s32, 0
      %p92 = por %p90, %p91
      %s94 = sadd.s32 %s93, 1
      %p97 = scmp.eq.s32.totalorder %s26, 1
      %p98 = scmp.ne.s32.totalorder %s93, %s95
      %p99 = scmp.eq.s32.totalorder %s26, 0
      %p100 = por %p98, %p99
      %p101 = scmp.ne.s32.totalorder %s93, %s95
      %p102 = scmp.eq.s32.totalorder %s31, 1
      %p103 = por %p101, %p102
      %p104 = scmp.ne.s32.totalorder %s95, %s96
      %p105 = scmp.eq.s32.totalorder %s31, 0
      %p106 = por %p104, %p105
      %p107 = scmp.ne.s32.totalorder %s95, %s96
      %p108 = scmp.eq.s32.totalorder %s32, 1
      %p109 = por %p107, %p108
      %p111 = scmp.ne.s32.totalorder %s96, %s110
      %p112 = scmp.eq.s32.totalorder %s32, 0
      %p113 = por %p111, %p112
      %s115 = sadd.s32 %s114, 1
      %p118 = scmp.eq.s32.totalorder %s26, 1
      %p119 = scmp.ne.s32.totalorder %s114, %s116
      %p120 = scmp.eq.s32.totalorder %s26, 0
      %p121 = por %p119, %p120
      %p122 = scmp.ne.s32.totalorder %s114, %s116
      %p123 = scmp.eq.s32.totalorder %s31, 1
      %p124 = por %p122, %p123
      %p125 = scmp.ne.s32.totalorder %s116, %s117
      %p126 = scmp.eq.s32.totalorder %s31, 0
      %p127 = por %p125, %p126
      %p128 = scmp.ne.s32.totalorder %s116, %s117
      %p129 = scmp.eq.s32.totalorder %s32, 1
      %p130 = por %p128, %p129
      %p132 = scmp.ne.s32.totalorder %s117, %s131
      %p133 = scmp.eq.s32.totalorder %s32, 0
      %p134 = por %p132, %p133
      %s136 = sadd.s32 %s135, 1
      %p139 = scmp.eq.s32.totalorder %s26, 1
      %p140 = scmp.ne.s32.totalorder %s135, %s137
      %p141 = scmp.eq.s32.totalorder %s26, 0
      %p142 = por %p140, %p141
      %p143 = scmp.ne.s32.totalorder %s135, %s137
      %p144 = scmp.eq.s32.totalorder %s31, 1
      %p145 = por %p143, %p144
      %p146 = scmp.ne.s32.totalorder %s137, %s138
      %p147 = scmp.eq.s32.totalorder %s31, 0
      %p148 = por %p146, %p147
      %p149 = scmp.ne.s32.totalorder %s137, %s138
      %p150 = scmp.eq.s32.totalorder %s32, 1
      %p151 = por %p149, %p150
      %p153 = scmp.ne.s32.totalorder %s138, %s152
      %p154 = scmp.eq.s32.totalorder %s32, 0
      %p155 = por %p153, %p154
      %s157 = sadd.s32 %s156, 1
      %p160 = scmp.eq.s32.totalorder %s26, 1
      %p161 = scmp.ne.s32.totalorder %s156, %s158
      %p162 = scmp.eq.s32.totalorder %s26, 0
      %p163 = por %p161, %p162
      %p164 = scmp.ne.s32.totalorder %s156, %s158
      %p165 = scmp.eq.s32.totalorder %s31, 1
      %p166 = por %p164, %p165
      %p167 = scmp.ne.s32.totalorder %s158, %s159
      %p168 = scmp.eq.s32.totalorder %s31, 0
      %p169 = por %p167, %p168
      %p170 = scmp.ne.s32.totalorder %s158, %s159
      %p171 = scmp.eq.s32.totalorder %s32, 1
      %p172 = por %p170, %p171
      %p174 = scmp.ne.s32.totalorder %s159, %s173
      %p175 = scmp.eq.s32.totalorder %s32, 0
      %p176 = por %p174, %p175
      %s178 = sadd.s32 %s177, 1
      %p181 = scmp.eq.s32.totalorder %s26, 1
      %p182 = scmp.ne.s32.totalorder %s177, %s179
      %p183 = scmp.eq.s32.totalorder %s26, 0
      %p184 = por %p182, %p183
      %p185 = scmp.ne.s32.totalorder %s177, %s179
      %p186 = scmp.eq.s32.totalorder %s31, 1
      %p187 = por %p185, %p186
      %p188 = scmp.ne.s32.totalorder %s179, %s180
      %p189 = scmp.eq.s32.totalorder %s31, 0
      %p190 = por %p188, %p189
      %p191 = scmp.ne.s32.totalorder %s179, %s180
      %p192 = scmp.eq.s32.totalorder %s32, 1
      %p193 = por %p191, %p192
      %p195 = scmp.ne.s32.totalorder %s180, %s194
      %p196 = scmp.eq.s32.totalorder %s32, 0
      %p197 = por %p195, %p196
      %s199 = sadd.s32 %s198, 1
      %p202 = scmp.eq.s32.totalorder %s26, 1
      %p203 = scmp.ne.s32.totalorder %s198, %s200
      %p204 = scmp.eq.s32.totalorder %s26, 0
      %p205 = por %p203, %p204
      %p206 = scmp.ne.s32.totalorder %s198, %s200
      %p207 = scmp.eq.s32.totalorder %s31, 1
      %p208 = por %p206, %p207
      %p209 = scmp.ne.s32.totalorder %s200, %s201
      %p210 = scmp.eq.s32.totalorder %s31, 0
      %p211 = por %p209, %p210
      %p212 = scmp.ne.s32.totalorder %s200, %s201
      %p213 = scmp.eq.s32.totalorder %s32, 1
      %p214 = por %p212, %p213
      %p216 = scmp.ne.s32.totalorder %s201, %s215
      %p217 = scmp.eq.s32.totalorder %s32, 0
      %p218 = por %p216, %p217
      %s220 = sadd.s32 %s219, 1
      %p223 = scmp.eq.s32.totalorder %s26, 1
      %p224 = scmp.ne.s32.totalorder %s219, %s221
      %p225 = scmp.eq.s32.totalorder %s26, 0
      %p226 = por %p224, %p225
      %p227 = scmp.ne.s32.totalorder %s219, %s221
      %p228 = scmp.eq.s32.totalorder %s31, 1
      %p229 = por %p227, %p228
      %p230 = scmp.ne.s32.totalorder %s221, %s222
      %p231 = scmp.eq.s32.totalorder %s31, 0
      %p232 = por %p230, %p231
      %p233 = scmp.ne.s32.totalorder %s221, %s222
      %p234 = scmp.eq.s32.totalorder %s32, 1
      %p235 = por %p233, %p234
      %p237 = scmp.ne.s32.totalorder %s222, %s236
      %p238 = scmp.eq.s32.totalorder %s32, 0
      %p239 = por %p237, %p238
      %s241 = sadd.s32 %s240, 1
      %p244 = scmp.eq.s32.totalorder %s26, 1
      %p245 = scmp.ne.s32.totalorder %s240, %s242
      %p246 = scmp.eq.s32.totalorder %s26, 0
      %p247 = por %p245, %p246
      %p248 = scmp.ne.s32.totalorder %s240, %s242
      %p249 = scmp.eq.s32.totalorder %s31, 1
      %p250 = por %p248, %p249
      %p251 = scmp.ne.s32.totalorder %s242, %s243
      %p252 = scmp.eq.s32.totalorder %s31, 0
      %p253 = por %p251, %p252
      %p254 = scmp.ne.s32.totalorder %s242, %s243
      %p255 = scmp.eq.s32.totalorder %s32, 1
      %p256 = por %p254, %p255
      %p258 = scmp.ne.s32.totalorder %s243, %s257
      %p259 = scmp.eq.s32.totalorder %s32, 0
      %p260 = por %p258, %p259
      %s262 = sadd.s32 %s261, 1
      %p265 = scmp.eq.s32.totalorder %s26, 1
      %p266 = scmp.ne.s32.totalorder %s261, %s263
      %p267 = scmp.eq.s32.totalorder %s26, 0
      %p268 = por %p266, %p267
      %p269 = scmp.ne.s32.totalorder %s261, %s263
      %p270 = scmp.eq.s32.totalorder %s31, 1
      %p271 = por %p269, %p270
      %p272 = scmp.ne.s32.totalorder %s263, %s264
      %p273 = scmp.eq.s32.totalorder %s31, 0
      %p274 = por %p272, %p273
      %p275 = scmp.ne.s32.totalorder %s263, %s264
      %p276 = scmp.eq.s32.totalorder %s32, 1
      %p277 = por %p275, %p276
      %p279 = scmp.ne.s32.totalorder %s264, %s278
      %p280 = scmp.eq.s32.totalorder %s32, 0
      %p281 = por %p279, %p280
      %s283 = sadd.s32 %s282, 1
      %p286 = scmp.eq.s32.totalorder %s26, 1
      %p287 = scmp.ne.s32.totalorder %s282, %s284
      %p288 = scmp.eq.s32.totalorder %s26, 0
      %p289 = por %p287, %p288
      %p290 = scmp.ne.s32.totalorder %s282, %s284
      %p291 = scmp.eq.s32.totalorder %s31, 1
      %p292 = por %p290, %p291
      %p293 = scmp.ne.s32.totalorder %s284, %s285
      %p294 = scmp.eq.s32.totalorder %s31, 0
      %p295 = por %p293, %p294
      %p296 = scmp.ne.s32.totalorder %s284, %s285
      %p297 = scmp.eq.s32.totalorder %s32, 1
      %p298 = por %p296, %p297
      %p300 = scmp.ne.s32.totalorder %s285, %s299
      %p301 = scmp.eq.s32.totalorder %s32, 0
      %p302 = por %p300, %p301
      %s303 = ssub.s32 %s33, %s45
      %s304 = ssub.s32 %s34, %s41
      %s305 = sor.u32 %s303, %s304
      %p306 = scmp.eq.s32.totalorder %s305, 0
      %s308 = sadd.s32 %s307, 1
      %s309 = scalar_select %p306, %s307, %s308
      %p312 = pneg %p306
      %p313 = scmp.eq.s32.totalorder %s26, 1
      %p314 = por %p312, %p313
      %p315 = scmp.ne.s32.totalorder %s307, %s310
      %p316 = scmp.eq.s32.totalorder %s26, 0
      %p317 = por %p315, %p316
      %p318 = scmp.ne.s32.totalorder %s307, %s310
      %p319 = scmp.eq.s32.totalorder %s31, 1
      %p320 = por %p318, %p319
      %p321 = scmp.ne.s32.totalorder %s310, %s311
      %p322 = scmp.eq.s32.totalorder %s31, 0
      %p323 = por %p321, %p322
      %p324 = scmp.ne.s32.totalorder %s310, %s311
      %p325 = scmp.eq.s32.totalorder %s32, 1
      %p326 = por %p324, %p325
      %p328 = scmp.ne.s32.totalorder %s311, %s327
      %p329 = scmp.eq.s32.totalorder %s32, 0
      %p330 = por %p328, %p329
      %p331 = scmp.le.s32.totalorder 1, %s26
      %p332 = scmp.lt.s32.totalorder %s26, 3
      %p333 = pnand %p331, %p332
      %p334 = pneg %p333
      // Predicated region
      $region9: #{tpu_custom_call.1} parent=5 // pred_check
        _
      $region10: #{tpu_custom_call.1} parent=5 // pred_check_branch
        %336 = sbr.rel (%p333) target = $region12
      $region11: #{tpu_custom_call.1} parent=5 // pred_region
        %s337 = ssub.s32 %s26, 1
        // Predicated region
        $region13: #{tpu_custom_call.1} parent=11 // pred_check
          %p338 = pneg %p85
        $region14: #{tpu_custom_call.1} parent=11 // pred_check_branch
          %340 = sbr.rel (%p338) target = $region16
        $region15: #{tpu_custom_call.1} parent=11 // pred_region
          %342 = vsyncadd [#allocation9], 0
          %s343 = sshll.u32 %s1, 4
          %s344 = int_to_ptr.hbm [resolvable:$true] %s343
          %s345 = sshll.u32 [#allocation8], 4
          %s346 = int_to_ptr.vmem [resolvable:$true] %s345
          %351 = dma.hbm_to_vmem [thread:$0]  %s344, 256, %s346, [#allocation9], 64, 64, 4
        $region16: #{tpu_custom_call.1} parent=11 // pred_fallthru
          _
        // Predicated region
        $region17: #{tpu_custom_call.1} parent=11 // pred_check
          %p352 = pneg %p106
        $region18: #{tpu_custom_call.1} parent=11 // pred_check_branch
          %354 = sbr.rel (%p352) target = $region20
        $region19: #{tpu_custom_call.1} parent=11 // pred_region
          %356 = vsyncadd [#allocation9], 0
          %s357 = sshll.u32 %s2, 4
          %s358 = int_to_ptr.hbm [resolvable:$true] %s357
          %s359 = sshll.u32 [#allocation10], 4
          %s360 = int_to_ptr.vmem [resolvable:$true] %s359
          %365 = dma.hbm_to_vmem [thread:$0]  %s358, 256, %s360, [#allocation9], 64, 64, 4
        $region20: #{tpu_custom_call.1} parent=11 // pred_fallthru
          _
        // Predicated region
        $region21: #{tpu_custom_call.1} parent=11 // pred_check
          %p366 = pneg %p127
        $region22: #{tpu_custom_call.1} parent=11 // pred_check_branch
          %368 = sbr.rel (%p366) target = $region24
        $region23: #{tpu_custom_call.1} parent=11 // pred_region
          %370 = vsyncadd [#allocation12], 0
          %s371 = sshll.u32 %s3, 4
          %s372 = int_to_ptr.hbm [resolvable:$true] %s371
          %s373 = sshll.u32 [#allocation11], 4
          %s374 = int_to_ptr.vmem [resolvable:$true] %s373
          %379 = dma.hbm_to_vmem [thread:$0]  %s372, 256, %s374, [#allocation12], 64, 64, 4
        $region24: #{tpu_custom_call.1} parent=11 // pred_fallthru
          _
        // Predicated region
        $region25: #{tpu_custom_call.1} parent=11 // pred_check
          %p380 = pneg %p148
        $region26: #{tpu_custom_call.1} parent=11 // pred_check_branch
          %382 = sbr.rel (%p380) target = $region28
        $region27: #{tpu_custom_call.1} parent=11 // pred_region
          %384 = vsyncadd [#allocation12], 0
          %s385 = sshll.u32 %s4, 4
          %s386 = int_to_ptr.hbm [resolvable:$true] %s385
          %s387 = sshll.u32 [#allocation13], 4
          %s388 = int_to_ptr.vmem [resolvable:$true] %s387
          %393 = dma.hbm_to_vmem [thread:$0]  %s386, 256, %s388, [#allocation12], 64, 64, 4
        $region28: #{tpu_custom_call.1} parent=11 // pred_fallthru
          _
        // Predicated region
        $region29: #{tpu_custom_call.1} parent=11 // pred_check
          %p394 = pneg %p169
        $region30: #{tpu_custom_call.1} parent=11 // pred_check_branch
          %396 = sbr.rel (%p394) target = $region32
        $region31: #{tpu_custom_call.1} parent=11 // pred_region
          _
        $region32: #{tpu_custom_call.1} parent=11 // pred_fallthru
          _
        // Predicated region
        $region33: #{tpu_custom_call.1} parent=11 // pred_check
          %p397 = pneg %p190
        $region34: #{tpu_custom_call.1} parent=11 // pred_check_branch
          %399 = sbr.rel (%p397) target = $region36
        $region35: #{tpu_custom_call.1} parent=11 // pred_region
          _
        $region36: #{tpu_custom_call.1} parent=11 // pred_fallthru
          _
        // Predicated region
        $region37: #{tpu_custom_call.1} parent=11 // pred_check
          %p400 = pneg %p211
        $region38: #{tpu_custom_call.1} parent=11 // pred_check_branch
          %402 = sbr.rel (%p400) target = $region40
        $region39: #{tpu_custom_call.1} parent=11 // pred_region
          _
        $region40: #{tpu_custom_call.1} parent=11 // pred_fallthru
          _
        // Predicated region
        $region41: #{tpu_custom_call.1} parent=11 // pred_check
          %p403 = pneg %p232
        $region42: #{tpu_custom_call.1} parent=11 // pred_check_branch
          %405 = sbr.rel (%p403) target = $region44
        $region43: #{tpu_custom_call.1} parent=11 // pred_region
          _
        $region44: #{tpu_custom_call.1} parent=11 // pred_fallthru
          _
        // Predicated region
        $region45: #{tpu_custom_call.1} parent=11 // pred_check
          %p406 = pneg %p253
        $region46: #{tpu_custom_call.1} parent=11 // pred_check_branch
          %408 = sbr.rel (%p406) target = $region48
        $region47: #{tpu_custom_call.1} parent=11 // pred_region
          _
        $region48: #{tpu_custom_call.1} parent=11 // pred_fallthru
          _
        // Predicated region
        $region49: #{tpu_custom_call.1} parent=11 // pred_check
          %p409 = pneg %p274
        $region50: #{tpu_custom_call.1} parent=11 // pred_check_branch
          %411 = sbr.rel (%p409) target = $region52
        $region51: #{tpu_custom_call.1} parent=11 // pred_region
          _
        $region52: #{tpu_custom_call.1} parent=11 // pred_fallthru
          _
        // Predicated region
        $region53: #{tpu_custom_call.1} parent=11 // pred_check
          %p412 = pneg %p295
        $region54: #{tpu_custom_call.1} parent=11 // pred_check_branch
          %414 = sbr.rel (%p412) target = $region56
        $region55: #{tpu_custom_call.1} parent=11 // pred_region
          _
        $region56: #{tpu_custom_call.1} parent=11 // pred_fallthru
          _
      $region12: #{tpu_custom_call.1} parent=5 // pred_fallthru
        _
      %p415 = scmp.lt.s32.totalorder %s26, 2
      // Predicated region
      $region57: #{tpu_custom_call.1} parent=5 // pred_check
        %p416 = pneg %p415
      $region58: #{tpu_custom_call.1} parent=5 // pred_check_branch
        %418 = sbr.rel (%p416) target = $region60
      $region59: #{tpu_custom_call.1} parent=5 // pred_region
        // Predicated region
        $region61: #{tpu_custom_call.1} parent=59 // pred_check
          %p419 = pneg %p58
        $region62: #{tpu_custom_call.1} parent=59 // pred_check_branch
          %421 = sbr.rel (%p419) target = $region64
        $region63: #{tpu_custom_call.1} parent=59 // pred_region
          %s422 = sand.u32 %s48, 1
          %s423 = scalar_lea.sflag [#allocation6], %s422
          %s424 = sand.u32 %s48, 1
          %s425 = smul.addr %s424, 8
          %s426 = scalar_lea.vmem [#allocation5], %s425
          %428 = vsyncadd %s423, 0
          %s429 = smul.addr %s33, 8
          %s430 = scalar_lea.hbm %s0, %s429
          %s432 = sshll.u32 %s430, 4
          %s433 = int_to_ptr.hbm [resolvable:$true] %s432
          %s434 = sshll.u32 %s426, 4
          %s435 = int_to_ptr.vmem [resolvable:$true] %s434
          %437 = dma.hbm_to_vmem [thread:$0]  %s433, 128, %s435, %s423
        $region64: #{tpu_custom_call.1} parent=59 // pred_fallthru
          _
      $region60: #{tpu_custom_call.1} parent=5 // pred_fallthru
        _
      %p438 = scmp.le.s32.totalorder 1, %s26
      %p439 = scmp.lt.s32.totalorder %s26, 3
      %p440 = pnand %p438, %p439
      %p441 = pneg %p440
      // Predicated region
      $region65: #{tpu_custom_call.1} parent=5 // pred_check
        _
      $region66: #{tpu_custom_call.1} parent=5 // pred_check_branch
        %443 = sbr.rel (%p440) target = $region68
      $region67: #{tpu_custom_call.1} parent=5 // pred_region
        %s444 = ssub.s32 %s26, 1
        %s445 = sand.u32 %s51, 1
        %s446 = scalar_lea.sflag [#allocation6], %s445
        %s447 = sand.u32 %s51, 1
        %s448 = smul.addr %s447, 8
        %s449 = scalar_lea.vmem [#allocation5], %s448
        // Predicated region
        $region69: #{tpu_custom_call.1} parent=67 // pred_check
          %p450 = pneg %p64
        $region70: #{tpu_custom_call.1} parent=67 // pred_check_branch
          %452 = sbr.rel (%p450) target = $region72
        $region71: #{tpu_custom_call.1} parent=67 // pred_region
          %454 = dma.done %s446, 128
        $region72: #{tpu_custom_call.1} parent=67 // pred_fallthru
          _
        // Predicated region
        $region73: #{tpu_custom_call.1} parent=67 // pred_check
          %p455 = pneg %p85
        $region74: #{tpu_custom_call.1} parent=67 // pred_check_branch
          %457 = sbr.rel (%p455) target = $region76
        $region75: #{tpu_custom_call.1} parent=67 // pred_region
          %459 = dma.done [#allocation9], 256
        $region76: #{tpu_custom_call.1} parent=67 // pred_fallthru
          _
        // Predicated region
        $region77: #{tpu_custom_call.1} parent=67 // pred_check
          %p460 = pneg %p106
        $region78: #{tpu_custom_call.1} parent=67 // pred_check_branch
          %462 = sbr.rel (%p460) target = $region80
        $region79: #{tpu_custom_call.1} parent=67 // pred_region
          %464 = dma.done [#allocation9], 256
        $region80: #{tpu_custom_call.1} parent=67 // pred_fallthru
          _
        // Predicated region
        $region81: #{tpu_custom_call.1} parent=67 // pred_check
          %p465 = pneg %p127
        $region82: #{tpu_custom_call.1} parent=67 // pred_check_branch
          %467 = sbr.rel (%p465) target = $region84
        $region83: #{tpu_custom_call.1} parent=67 // pred_region
          %469 = dma.done [#allocation12], 256
        $region84: #{tpu_custom_call.1} parent=67 // pred_fallthru
          _
        // Predicated region
        $region85: #{tpu_custom_call.1} parent=67 // pred_check
          %p470 = pneg %p148
        $region86: #{tpu_custom_call.1} parent=67 // pred_check_branch
          %472 = sbr.rel (%p470) target = $region88
        $region87: #{tpu_custom_call.1} parent=67 // pred_region
          %474 = dma.done [#allocation12], 256
        $region88: #{tpu_custom_call.1} parent=67 // pred_fallthru
          _
        %s475 = sand.u32 %s51, 1
        %s476 = scalar_lea.sflag [#allocation6], %s475
        %s477 = sand.u32 %s51, 1
        %s478 = smul.addr %s477, 8
        %s479 = scalar_lea.vmem [#allocation5], %s478
        %p480 = pneg %p64
        %p481 = pneg %p61
        %p482 = pneg %p85
        %p483 = pneg %p82
        %p484 = pneg %p106
        %p485 = pneg %p103
        %p486 = pneg %p127
        %p487 = pneg %p124
        %p488 = pneg %p148
        %p489 = pneg %p145
        %p490 = pneg %p169
        %p491 = pneg %p166
        %p492 = pneg %p190
        %p493 = pneg %p187
        %p494 = pneg %p211
        %p495 = pneg %p208
        %p496 = pneg %p232
        %p497 = pneg %p229
        %p498 = pneg %p253
        %p499 = pneg %p250
        %p500 = pneg %p274
        %p501 = pneg %p271
        %p502 = pneg %p295
        %p503 = pneg %p292
        %p504 = pneg %p323
        %p505 = pneg %p320
        %s506 = sand.u32 %s310, 1
        %s507 = scalar_lea.sflag [#allocation7], %s506
        %s508 = sand.u32 %s310, 1
        %s509 = smul.addr %s508, 8
        %s510 = scalar_lea.vmem [#allocation14], %s509
        %p512 = scmp.eq.s32.totalorder %s36, 0
        // Predicated region
        $region89: #{tpu_custom_call.1} parent=67 // pred_check
          %p513 = pneg %p512
        $region90: #{tpu_custom_call.1} parent=67 // pred_check_branch
          %515 = sbr.rel (%p513) target = $region92
        $region91: #{tpu_custom_call.1} parent=67 // pred_region
          %v516 = vld [vmem:[%s449] sm:$0xff]
          %v517 = vld [vmem:[%s6] sm:$0x1]
          %v518 = vld [vmem:[%s7] sm:$0x1]
          %vm519 = vcmask 261120
          %v520 = vsel %vm519, %v516, 0.0
          %521 = vadd.xlane.f32.xlu0 %v520
          %v522 = vpop.xlane.xlu0 %521
          %v523 = vrcp.pop 32.0
          %v524 = vmul.f32 32.0, %v523
          %v525 = vsub.f32 1.0, %v524
          %v526 = vmul.f32 %v523, %v525
          %v527 = vadd.f32 %v523, %v526
          %vm528 = vweird.f32 %v523
          %v529 = vsel %vm528, %v523, %v527
          %v530 = vmul.f32 %v522, %v529
          %v531 = vsub.f32 %v516, %v530
          %v532 = vmul.f32 %v531, %v531
          %v533 = vsel %vm519, %v532, 0.0
          %534 = vadd.xlane.f32.xlu0 %v533
          %v535 = vpop.xlane.xlu0 %534
          %v536 = vmul.f32 %v535, %v529
          %v537 = vadd.f32 %v536, 1e-05
          %v538 = vrsqrt.pop %v537
          %v539 = vmul.f32 %v538, %v537
          %v540 = vmul.f32 %v539, %v538
          %v541 = vmul.f32 0.5, %v540
          %v542 = vsub.f32 1.5, %v541
          %v543 = vmul.f32 %v538, %v542
          %vm544 = vweird.f32 %v537
          %vm545 = vweird.f32 %v538
          %vm546 = vmor %vm544, %vm545
          %v547 = vsel %vm546, %v538, %v543
          %v548 = vmul.f32 %v531, %v547
          %v550 = vperm.slane %v517, 0
          %v552 = vmul.f32 %v548, %v550
          %v554 = vperm.slane %v518, 0
          %v556 = vadd.f32 %v552, %v554
          %v557 = vpack.c.bf16 %v556, %v556
          %vm558 = vcmask 257024
          %559 = vst.msk [vmem:[#allocation2] sm:$0xf] %vm558, %v557
          %v560 = vld [vmem:[#allocation10] sm:$0xf]
          %v561 = vld [vmem:[#allocation10 + $0x4] sm:$0xf]
          %v562 = vld [vmem:[#allocation10 + $0x8] sm:$0xf]
          %v563 = vld [vmem:[#allocation10 + $0xc] sm:$0xf]
          %v568 = vunpack.c.l.b16 %v560
          %v569 = vunpack.c.l.b16 %v561
          %v570 = vunpack.c.l.b16 %v562
          %v571 = vunpack.c.l.b16 %v563
          %v572 = vpack.c.b16 %v569, %v568
          %v573 = vpack.c.b16 %v571, %v570
          %v577 = vsel %vm519, %v557, 0
          %579 = vmatpush.bf16.msra.mxu0 0
          %580 = vmatpush.bf16.msra.mxu0 0
          %581 = vmatpush.bf16.msra.mxu0 0
          %582 = vmatpush.bf16.msra.mxu0 0
          %583 = vmatpush.bf16.msra.mxu0 0
          %584 = vmatpush.bf16.msra.mxu0 0
          %585 = vmatpush.bf16.msra.mxu0 %v573
          %586 = vmatpush.bf16.msra.mxu0 %v572
          %587 = vmatmul.bf16.gmra.mxu0 %v577
          %v588 = vpop.f32.mrf.mxu0
          %v589 = vadd.f32 0.0, %v588
          %v590 = vpop.f32.mrf.mxu0
          %591 = vdwg.mxu0
          %v592 = vld [vmem:[#allocation11] sm:$0xf]
          %v593 = vld [vmem:[#allocation11 + $0x4] sm:$0xf]
          %v594 = vld [vmem:[#allocation11 + $0x8] sm:$0xf]
          %v595 = vld [vmem:[#allocation11 + $0xc] sm:$0xf]
          %v600 = vunpack.c.l.b16 %v592
          %v601 = vunpack.c.l.b16 %v593
          %v602 = vunpack.c.l.b16 %v594
          %v603 = vunpack.c.l.b16 %v595
          %v604 = vpack.c.b16 %v601, %v600
          %v605 = vpack.c.b16 %v603, %v602
          %608 = vmatpush.bf16.msra.mxu0 0
          %609 = vmatpush.bf16.msra.mxu0 0
          %610 = vmatpush.bf16.msra.mxu0 0
          %611 = vmatpush.bf16.msra.mxu0 0
          %612 = vmatpush.bf16.msra.mxu0 0
          %613 = vmatpush.bf16.msra.mxu0 0
          %614 = vmatpush.bf16.msra.mxu0 %v605
          %615 = vmatpush.bf16.msra.mxu0 %v604
          %616 = vmatmul.bf16.gmra.mxu0 %v577
          %v617 = vpop.f32.mrf.mxu0
          %v618 = vadd.f32 0.0, %v617
          %v619 = vpop.f32.mrf.mxu0
          %620 = vdwg.mxu0
          %v621 = vld [vmem:[%s8] sm:$0x1]
          %v622 = vld [vmem:[%s9] sm:$0x1]
          %vm623 = vcmask 130048
          %v624 = vsel %vm623, %v589, 0.0
          %625 = vadd.xlane.f32.xlu0 %v624
          %v626 = vpop.xlane.xlu0 %625
          %v627 = vrcp.pop 16.0
          %v628 = vmul.f32 16.0, %v627
          %v629 = vsub.f32 1.0, %v628
          %v630 = vmul.f32 %v627, %v629
          %v631 = vadd.f32 %v627, %v630
          %vm632 = vweird.f32 %v627
          %v633 = vsel %vm632, %v627, %v631
          %v634 = vmul.f32 %v626, %v633
          %v635 = vsub.f32 %v589, %v634
          %v636 = vmul.f32 %v635, %v635
          %v637 = vsel %vm623, %v636, 0.0
          %638 = vadd.xlane.f32.xlu0 %v637
          %v639 = vpop.xlane.xlu0 %638
          %v640 = vmul.f32 %v639, %v633
          %v641 = vadd.f32 %v640, 1e-05
          %v642 = vrsqrt.pop %v641
          %v643 = vmul.f32 %v642, %v641
          %v644 = vmul.f32 %v643, %v642
          %v645 = vmul.f32 0.5, %v644
          %v646 = vsub.f32 1.5, %v645
          %v647 = vmul.f32 %v642, %v646
          %vm648 = vweird.f32 %v641
          %vm649 = vweird.f32 %v642
          %vm650 = vmor %vm648, %vm649
          %v651 = vsel %vm650, %v642, %v647
          %v652 = vmul.f32 %v635, %v651
          %v654 = vperm.slane %v621, 0
          %v656 = vmul.f32 %v652, %v654
          %v658 = vperm.slane %v622, 0
          %v660 = vadd.f32 %v656, %v658
          %661 = vxpose.xlu0.b32.start [1/16] %v660, 128
          %662 = vxpose.xlu0.b32.cont [2/16] 0.0, 128
          %663 = vxpose.xlu0.b32.cont [3/16] 0.0, 128
          %664 = vxpose.xlu0.b32.cont [4/16] 0.0, 128
          %665 = vxpose.xlu0.b32.cont [5/16] 0.0, 128
          %666 = vxpose.xlu0.b32.cont [6/16] 0.0, 128
          %667 = vxpose.xlu0.b32.cont [7/16] 0.0, 128
          %668 = vxpose.xlu0.b32.cont [8/16] 0.0, 128
          %669 = vxpose.xlu0.b32.cont [9/16] 0.0, 128
          %670 = vxpose.xlu0.b32.cont [10/16] 0.0, 128
          %671 = vxpose.xlu0.b32.cont [11/16] 0.0, 128
          %672 = vxpose.xlu0.b32.cont [12/16] 0.0, 128
          %673 = vxpose.xlu0.b32.cont [13/16] 0.0, 128
          %674 = vxpose.xlu0.b32.cont [14/16] 0.0, 128
          %675 = vxpose.xlu0.b32.cont [15/16] 0.0, 128
          %676 = vxpose.xlu0.b32.end [16/16] 0.0, 128
          %v677 = vpop.trf.xlu0
          %v678 = vpop.trf.xlu0
          %v679 = vpop.trf.xlu0
          %v680 = vpop.trf.xlu0
          %v681 = vpop.trf.xlu0
          %v682 = vpop.trf.xlu0
          %v683 = vpop.trf.xlu0
          %v684 = vpop.trf.xlu0
          %v685 = vpop.trf.xlu0
          %v686 = vpop.trf.xlu0
          %v687 = vpop.trf.xlu0
          %v688 = vpop.trf.xlu0
          %v689 = vpop.trf.xlu0
          %v690 = vpop.trf.xlu0
          %v691 = vpop.trf.xlu0
          %v692 = vpop.trf.xlu0
          %694 = vrot.lane.b32.xlu0 %v589, 112
          %v695 = vpop.permute.xlu0 %694
          %v697 = vsel %vm623, %v695, 0.0
          %698 = vadd.xlane.f32.xlu0 %v697
          %v699 = vpop.xlane.xlu0 %698
          %v700 = vmul.f32 %v699, %v633
          %v701 = vsub.f32 %v589, %v700
          %v702 = vmul.f32 %v701, %v701
          %704 = vrot.lane.b32.xlu0 %v702, 112
          %v705 = vpop.permute.xlu0 %704
          %v707 = vsel %vm623, %v705, 0.0
          %708 = vadd.xlane.f32.xlu0 %v707
          %v709 = vpop.xlane.xlu0 %708
          %v710 = vmul.f32 %v709, %v633
          %v711 = vadd.f32 %v710, 1e-05
          %v712 = vrsqrt.pop %v711
          %v713 = vmul.f32 %v712, %v711
          %v714 = vmul.f32 %v713, %v712
          %v715 = vmul.f32 0.5, %v714
          %v716 = vsub.f32 1.5, %v715
          %v717 = vmul.f32 %v712, %v716
          %vm718 = vweird.f32 %v711
          %vm719 = vweird.f32 %v712
          %vm720 = vmor %vm718, %vm719
          %v721 = vsel %vm720, %v712, %v717
          %v722 = vmul.f32 %v701, %v721
          %723 = vrot.lane.b32.xlu0 %v654, 16
          %v724 = vpop.permute.xlu0 %723
          %v726 = vmul.f32 %v722, %v724
          %727 = vrot.lane.b32.xlu0 %v658, 16
          %v728 = vpop.permute.xlu0 %727
          %v730 = vadd.f32 %v726, %v728
          %732 = vrot.lane.b32.xlu0 %v730, 112
          %v733 = vpop.permute.xlu0 %732
          %735 = vxpose.xlu0.b32.start [1/16] %v733, 128
          %736 = vxpose.xlu0.b32.cont [2/16] 0.0, 128
          %737 = vxpose.xlu0.b32.cont [3/16] 0.0, 128
          %738 = vxpose.xlu0.b32.cont [4/16] 0.0, 128
          %739 = vxpose.xlu0.b32.cont [5/16] 0.0, 128
          %740 = vxpose.xlu0.b32.cont [6/16] 0.0, 128
          %741 = vxpose.xlu0.b32.cont [7/16] 0.0, 128
          %742 = vxpose.xlu0.b32.cont [8/16] 0.0, 128
          %743 = vxpose.xlu0.b32.cont [9/16] 0.0, 128
          %744 = vxpose.xlu0.b32.cont [10/16] 0.0, 128
          %745 = vxpose.xlu0.b32.cont [11/16] 0.0, 128
          %746 = vxpose.xlu0.b32.cont [12/16] 0.0, 128
          %747 = vxpose.xlu0.b32.cont [13/16] 0.0, 128
          %748 = vxpose.xlu0.b32.cont [14/16] 0.0, 128
          %749 = vxpose.xlu0.b32.cont [15/16] 0.0, 128
          %750 = vxpose.xlu0.b32.end [16/16] 0.0, 128
          %v751 = vpop.trf.xlu0
          %v752 = vpop.trf.xlu0
          %v753 = vpop.trf.xlu0
          %v754 = vpop.trf.xlu0
          %v755 = vpop.trf.xlu0
          %v756 = vpop.trf.xlu0
          %v757 = vpop.trf.xlu0
          %v758 = vpop.trf.xlu0
          %v759 = vpop.trf.xlu0
          %v760 = vpop.trf.xlu0
          %v761 = vpop.trf.xlu0
          %v762 = vpop.trf.xlu0
          %v763 = vpop.trf.xlu0
          %v764 = vpop.trf.xlu0
          %v765 = vpop.trf.xlu0
          %v766 = vpop.trf.xlu0
          %v767 = vpack.c.bf16 %v677, %v677
          %v768 = vpack.c.bf16 %v678, %v678
          %v769 = vpack.c.bf16 %v751, %v751
          %v770 = vpack.c.bf16 %v752, %v752
          %vm771 = vcmask 60416
          %772 = vst.msk [vmem:[#allocation3] sm:$0xf] %vm771, %v767
          %773 = vst.msk [vmem:[#allocation3 + $0x4] sm:$0xf] %vm771, %v768
          %774 = vst.msk [vmem:[#allocation3 + $0x8] sm:$0xf] %vm771, %v769
          %775 = vst.msk [vmem:[#allocation3 + $0xc] sm:$0xf] %vm771, %v770
          %v776 = vld [vmem:[%s10] sm:$0x1]
          %v777 = vld [vmem:[%s11] sm:$0x1]
          %v778 = vsel %vm623, %v618, 0.0
          %779 = vadd.xlane.f32.xlu0 %v778
          %v780 = vpop.xlane.xlu0 %779
          %v781 = vmul.f32 %v780, %v633
          %v782 = vsub.f32 %v618, %v781
          %v783 = vmul.f32 %v782, %v782
          %v784 = vsel %vm623, %v783, 0.0
          %785 = vadd.xlane.f32.xlu0 %v784
          %v786 = vpop.xlane.xlu0 %785
          %v787 = vmul.f32 %v786, %v633
          %v788 = vadd.f32 %v787, 1e-05
          %v789 = vrsqrt.pop %v788
          %v790 = vmul.f32 %v789, %v788
          %v791 = vmul.f32 %v790, %v789
          %v792 = vmul.f32 0.5, %v791
          %v793 = vsub.f32 1.5, %v792
          %v794 = vmul.f32 %v789, %v793
          %vm795 = vweird.f32 %v788
          %vm796 = vweird.f32 %v789
          %vm797 = vmor %vm795, %vm796
          %v798 = vsel %vm797, %v789, %v794
          %v799 = vmul.f32 %v782, %v798
          %v801 = vperm.slane %v776, 0
          %v803 = vmul.f32 %v799, %v801
          %v805 = vperm.slane %v777, 0
          %v807 = vadd.f32 %v803, %v805
          %809 = vrot.lane.b32.xlu0 %v618, 112
          %v810 = vpop.permute.xlu0 %809
          %v812 = vsel %vm623, %v810, 0.0
          %813 = vadd.xlane.f32.xlu0 %v812
          %v814 = vpop.xlane.xlu0 %813
          %v815 = vmul.f32 %v814, %v633
          %v816 = vsub.f32 %v618, %v815
          %v817 = vmul.f32 %v816, %v816
          %819 = vrot.lane.b32.xlu0 %v817, 112
          %v820 = vpop.permute.xlu0 %819
          %v822 = vsel %vm623, %v820, 0.0
          %823 = vadd.xlane.f32.xlu0 %v822
          %v824 = vpop.xlane.xlu0 %823
          %v825 = vmul.f32 %v824, %v633
          %v826 = vadd.f32 %v825, 1e-05
          %v827 = vrsqrt.pop %v826
          %v828 = vmul.f32 %v827, %v826
          %v829 = vmul.f32 %v828, %v827
          %v830 = vmul.f32 0.5, %v829
          %v831 = vsub.f32 1.5, %v830
          %v832 = vmul.f32 %v827, %v831
          %vm833 = vweird.f32 %v826
          %vm834 = vweird.f32 %v827
          %vm835 = vmor %vm833, %vm834
          %v836 = vsel %vm835, %v827, %v832
          %v837 = vmul.f32 %v816, %v836
          %838 = vrot.lane.b32.xlu0 %v801, 16
          %v839 = vpop.permute.xlu0 %838
          %v841 = vmul.f32 %v837, %v839
          %842 = vrot.lane.b32.xlu0 %v805, 16
          %v843 = vpop.permute.xlu0 %842
          %v845 = vadd.f32 %v841, %v843
          %847 = vrot.lane.b32.xlu0 %v845, 112
          %v848 = vpop.permute.xlu0 %847
          %v850 = vpack.c.bf16 %v807, %v807
          %v851 = vpack.c.bf16 %v848, %v848
          %vm852 = vcmask 125952
          %853 = vst.msk [vmem:[#allocation4] sm:$0xf] %vm852, %v850
          %854 = vst.msk [vmem:[#allocation4 + $0x4] sm:$0xf] %vm852, %v851
        $region92: #{tpu_custom_call.1} parent=67 // pred_fallthru
          _
        %s855 = smul.u32 %s36, 8
        %s856 = sshra.s32 %s855, 3
        %s857 = sand.u32 %s855, 7
        %s858 = smul.addr %s856, 4
        %s859 = scalar_lea.vmem [#allocation2], %s858
        %v860 = vld [vmem:[%s859] sm:$0xf]
        %v861 = vld [vmem:[#allocation8] sm:$0xf]
        %v862 = vld [vmem:[#allocation8 + $0x4] sm:$0xf]
        %v863 = vld [vmem:[#allocation8 + $0x8] sm:$0xf]
        %v864 = vld [vmem:[#allocation8 + $0xc] sm:$0xf]
        %v869 = vunpack.c.l.b16 %v861
        %v870 = vunpack.c.l.b16 %v862
        %v871 = vunpack.c.l.b16 %v863
        %v872 = vunpack.c.l.b16 %v864
        %v873 = vpack.c.b16 %v870, %v869
        %v874 = vpack.c.b16 %v872, %v871
        %vm877 = vcmask 261120
        %v879 = vsel %vm877, %v860, 0
        %881 = vmatpush.bf16.msra.mxu0 0
        %882 = vmatpush.bf16.msra.mxu0 0
        %883 = vmatpush.bf16.msra.mxu0 0
        %884 = vmatpush.bf16.msra.mxu0 0
        %885 = vmatpush.bf16.msra.mxu0 0
        %886 = vmatpush.bf16.msra.mxu0 0
        %887 = vmatpush.bf16.msra.mxu0 %v874
        %888 = vmatpush.bf16.msra.mxu0 %v873
        %889 = vmatmul.bf16.gmra.mxu0 %v879
        %v890 = vpop.f32.mrf.mxu0
        %v891 = vadd.f32 0.0, %v890
        %v892 = vpop.f32.mrf.mxu0
        %893 = vdwg.mxu0
        %v894 = vmul.f32 %v891, 0.25
        %896 = vrot.lane.b32.xlu0 %v894, 112
        %v897 = vpop.permute.xlu0 %896
        %v899 = vpack.c.bf16 %v894, %v894
        %v900 = vpack.c.bf16 %v897, %v897
        %v901 = vld [vmem:[#allocation3] sm:$0xf]
        %v902 = vld [vmem:[#allocation3 + $0x4] sm:$0xf]
        %v903 = vld [vmem:[#allocation3 + $0x8] sm:$0xf]
        %v904 = vld [vmem:[#allocation3 + $0xc] sm:$0xf]
        %v907 = vunpack.c.l.b16 %v901
        %v908 = vunpack.c.l.b16 %v902
        %v909 = vpack.c.b16 %v908, %v907
        %vm911 = vcmask 130048
        %v913 = vsel %vm911, %v899, 0
        %915 = vmatpush.bf16.msra.mxu0 0
        %916 = vmatpush.bf16.msra.mxu0 0
        %917 = vmatpush.bf16.msra.mxu0 0
        %918 = vmatpush.bf16.msra.mxu0 0
        %919 = vmatpush.bf16.msra.mxu0 0
        %920 = vmatpush.bf16.msra.mxu0 0
        %921 = vmatpush.bf16.msra.mxu0 0
        %922 = vmatpush.bf16.msra.mxu0 %v909
        %923 = vmatmul.bf16.gmra.mxu0 %v913
        %v924 = vpop.f32.mrf.mxu0
        %v925 = vadd.f32 0.0, %v924
        %v926 = vpop.f32.mrf.mxu0
        %927 = vdwg.mxu0
        %v930 = vunpack.c.l.b16 %v903
        %v931 = vunpack.c.l.b16 %v904
        %v932 = vpack.c.b16 %v931, %v930
        %v935 = vsel %vm911, %v900, 0
        %937 = vmatpush.bf16.msra.mxu0 0
        %938 = vmatpush.bf16.msra.mxu0 0
        %939 = vmatpush.bf16.msra.mxu0 0
        %940 = vmatpush.bf16.msra.mxu0 0
        %941 = vmatpush.bf16.msra.mxu0 0
        %942 = vmatpush.bf16.msra.mxu0 0
        %943 = vmatpush.bf16.msra.mxu0 0
        %944 = vmatpush.bf16.msra.mxu0 %v932
        %945 = vmatmul.bf16.gmra.mxu0 %v935
        %v946 = vpop.f32.mrf.mxu0
        %v947 = vadd.f32 0.0, %v946
        %v948 = vpop.f32.mrf.mxu0
        %949 = vdwg.mxu0
        %vm950 = vcmask 64512
        %v951 = vsel %vm950, %v925, -inf
        %952 = vmax.xlane.f32.xlu0 %v951
        %v953 = vpop.xlane.xlu0 %952
        %v954 = vsel %vm950, %v947, -inf
        %955 = vmax.xlane.f32.xlu0 %v954
        %v956 = vpop.xlane.xlu0 %955
        %v957 = vsub.f32 %v925, %v953
        %v958 = vsub.f32 %v947, %v956
        %v959 = vmul.f32 %v957, 1.442695
        %v960 = vpow.pop %v959
        %v961 = vmul.f32 %v958, 1.442695
        %v962 = vpow.pop %v961
        %v963 = vsel %vm950, %v960, 0.0
        %964 = vadd.xlane.f32.xlu0 %v963
        %v965 = vpop.xlane.xlu0 %964
        %v966 = vsel %vm950, %v962, 0.0
        %967 = vadd.xlane.f32.xlu0 %v966
        %v968 = vpop.xlane.xlu0 %967
        %v969 = vpack.c.bf16 %v960, %v960
        %v970 = vpack.c.bf16 %v962, %v962
        %v971 = vld [vmem:[#allocation4] sm:$0xf]
        %v972 = vld [vmem:[#allocation4 + $0x4] sm:$0xf]
        %v974 = vsel %vm950, %v969, 0
        %vm976 = vcmask 1043456
        %v978 = vsel %vm976, %v971, 0
        %980 = vmatpush.bf16.msra.mxu0 0
        %981 = vmatpush.bf16.msra.mxu0 0
        %982 = vmatpush.bf16.msra.mxu0 0
        %983 = vmatpush.bf16.msra.mxu0 0
        %984 = vmatpush.bf16.msra.mxu0 0
        %985 = vmatpush.bf16.msra.mxu0 0
        %986 = vmatpush.bf16.msra.mxu0 0
        %987 = vmatpush.bf16.msra.mxu0 %v978
        %988 = vmatmul.bf16.gmra.mxu0 %v974
        %v989 = vpop.f32.mrf.mxu0
        %v990 = vadd.f32 0.0, %v989
        %v991 = vpop.f32.mrf.mxu0
        %992 = vdwg.mxu0
        %v994 = vsel %vm950, %v970, 0
        %v997 = vsel %vm976, %v972, 0
        %999 = vmatpush.bf16.msra.mxu0 0
        %1000 = vmatpush.bf16.msra.mxu0 0
        %1001 = vmatpush.bf16.msra.mxu0 0
        %1002 = vmatpush.bf16.msra.mxu0 0
        %1003 = vmatpush.bf16.msra.mxu0 0
        %1004 = vmatpush.bf16.msra.mxu0 0
        %1005 = vmatpush.bf16.msra.mxu0 0
        %1006 = vmatpush.bf16.msra.mxu0 %v997
        %1007 = vmatmul.bf16.gmra.mxu0 %v994
        %v1008 = vpop.f32.mrf.mxu0
        %v1009 = vadd.f32 0.0, %v1008
        %v1010 = vpop.f32.mrf.mxu0
        %1011 = vdwg.mxu0
        %v1012 = vrcp.pop %v965
        %v1013 = vrcp.pop %v968
        %v1014 = vmul.f32 %v990, %v1012
        %v1015 = vmul.f32 %v1009, %v1013
        %1017 = vrot.lane.b32.xlu0 %v1015, 16
        %v1018 = vpop.permute.xlu0 %1017
        %v1020 = vsel %vm911, %v1014, %v1018
        %v1021 = vpack.c.bf16 %v1020, %v1020
        %v1022 = vld [vmem:[#allocation13] sm:$0xf]
        %v1023 = vld [vmem:[#allocation13 + $0x4] sm:$0xf]
        %v1024 = vld [vmem:[#allocation13 + $0x8] sm:$0xf]
        %v1025 = vld [vmem:[#allocation13 + $0xc] sm:$0xf]
        %v1026 = vld [vmem:[%s5] sm:$0x1]
        %v1028 = vperm.slane %v1026, 0
        %v1034 = vunpack.c.l.b16 %v1022
        %v1035 = vunpack.c.l.b16 %v1023
        %v1036 = vunpack.c.l.b16 %v1024
        %v1037 = vunpack.c.l.b16 %v1025
        %v1038 = vpack.c.b16 %v1035, %v1034
        %v1039 = vpack.c.b16 %v1037, %v1036
        %v1043 = vsel %vm877, %v1021, 0
        %1045 = vmatpush.bf16.msra.mxu0 0
        %1046 = vmatpush.bf16.msra.mxu0 0
        %1047 = vmatpush.bf16.msra.mxu0 0
        %1048 = vmatpush.bf16.msra.mxu0 0
        %1049 = vmatpush.bf16.msra.mxu0 0
        %1050 = vmatpush.bf16.msra.mxu0 0
        %1051 = vmatpush.bf16.msra.mxu0 %v1039
        %1052 = vmatpush.bf16.msra.mxu0 %v1038
        %1053 = vmatmul.bf16.gmra.mxu0 %v1043
        %v1054 = vpop.f32.mrf.mxu0
        %v1055 = vadd.f32 %v1028, %v1054
        %v1056 = vpop.f32.mrf.mxu0
        %1057 = vdwg.mxu0
        %1058 = vst.msk [vmem:[%s510] sm:$0xff] %vm877, %v1055
        %s1059 = sand.u32 %s310, 1
        %s1060 = scalar_lea.sflag [#allocation7], %s1059
        %s1061 = sand.u32 %s310, 1
        %s1062 = smul.addr %s1061, 8
        %s1063 = scalar_lea.vmem [#allocation14], %s1062
        // Predicated region
        $region93: #{tpu_custom_call.1} parent=67 // pred_check
          %p1064 = pneg %p320
        $region94: #{tpu_custom_call.1} parent=67 // pred_check_branch
          %1066 = sbr.rel (%p1064) target = $region96
        $region95: #{tpu_custom_call.1} parent=67 // pred_region
          %1068 = vsyncadd %s1060, 0
          %s1069 = sadd.s32 %s36, %s35
          %s1070 = smul.addr %s1069, 8
          %s1071 = scalar_lea.hbm %s12, %s1070
          %s1073 = sshll.u32 %s1063, 4
          %s1074 = int_to_ptr.vmem [resolvable:$true] %s1073
          %s1075 = sshll.u32 %s1071, 4
          %s1076 = int_to_ptr.hbm [resolvable:$true] %s1075
          %1078 = dma.vmem_to_hbm [thread:$0]  %s1074, 128, %s1076, %s1060
        $region96: #{tpu_custom_call.1} parent=67 // pred_fallthru
          _
      $region68: #{tpu_custom_call.1} parent=5 // pred_fallthru
        _
      %p1079 = scmp.le.s32.totalorder 2, %s26
      // Predicated region
      $region97: #{tpu_custom_call.1} parent=5 // pred_check
        %p1080 = pneg %p1079
      $region98: #{tpu_custom_call.1} parent=5 // pred_check_branch
        %1082 = sbr.rel (%p1080) target = $region100
      $region99: #{tpu_custom_call.1} parent=5 // pred_region
        %s1083 = ssub.s32 %s26, 2
        // Predicated region
        $region101: #{tpu_custom_call.1} parent=99 // pred_check
          %p1084 = pneg %p326
        $region102: #{tpu_custom_call.1} parent=99 // pred_check_branch
          %1086 = sbr.rel (%p1084) target = $region104
        $region103: #{tpu_custom_call.1} parent=99 // pred_region
          %s1087 = sand.u32 %s311, 1
          %s1088 = scalar_lea.sflag [#allocation7], %s1087
          %s1089 = sand.u32 %s311, 1
          %s1090 = smul.addr %s1089, 8
          %s1091 = scalar_lea.vmem [#allocation14], %s1090
          %1093 = dma.done %s1088, 128
        $region104: #{tpu_custom_call.1} parent=99 // pred_fallthru
          _
      $region100: #{tpu_custom_call.1} parent=5 // pred_fallthru
        _
    $region6: #{tpu_custom_call.1} parent=1 // loop_footer
      %s30 = sadd.s32 1, %s26
    $region7: #{tpu_custom_call.1} parent=1 // loop_footer_branch
      %25 = sbr.rel target = $region3
    $region8: #{tpu_custom_call.1} parent=1 // loop_exit
      _
    %1094 = vsyncpa [#allocation6], 1
    %s1095 = scalar_lea.sflag [#allocation6], 1
    %1096 = vsyncpa %s1095, 1
    %1097 = vsyncpa [#allocation9], 1
    %1098 = vsyncpa [#allocation12], 1
    %1099 = vsyncpa [#allocation7], 1
    %s1100 = scalar_lea.sflag [#allocation7], 1
    %1101 = vsyncpa %s1100, 1

// kernel: tpu_custom_call.1
$region0: #{tpu_custom_call.1}
  #allocation0 [shape = 'u32[]', space=smem, size = 0x4, offset = 0x4, fixed_abs, tag = 'smem constant byte address 0x4 - core index']
  #allocation1 [shape = 'u32[72,128]{1,0:T(1,128)}', space=vmem, size = 0x9000, scoped, tag = 'internal scratch']
  #allocation2 [shape = 'bf16[8,32]{1,0:T(8,128)(2,1)}', space=vmem, size = 0x800, scoped, tag = 'scratch operand']
  #allocation3 [shape = 'bf16[2,16,8]{2,1,0:T(8,128)(2,1)}', space=vmem, size = 0x2000, scoped, tag = 'scratch operand']
  #allocation4 [shape = 'bf16[2,8,16]{2,1,0:T(8,128)(2,1)}', space=vmem, size = 0x1000, scoped, tag = 'scratch operand']
  %s0 = inlined_call_operand.hbm [shape: f32[2,8,32], index: 0, kind: input, shape index: {}]
  %s1 = inlined_call_operand.hbm [shape: bf16[32,32], index: 1, kind: input, shape index: {}]
  %s2 = inlined_call_operand.hbm [shape: bf16[32,32], index: 2, kind: input, shape index: {}]
  %s3 = inlined_call_operand.hbm [shape: bf16[32,32], index: 3, kind: input, shape index: {}]
  %s4 = inlined_call_operand.hbm [shape: bf16[32,32], index: 4, kind: input, shape index: {}]
  %s5 = inlined_call_operand.vmem [shape: f32[1,32], index: 5, kind: input, shape index: {}]
  %s6 = inlined_call_operand.vmem [shape: f32[1,32], index: 6, kind: input, shape index: {}]
  %s7 = inlined_call_operand.vmem [shape: f32[1,32], index: 7, kind: input, shape index: {}]
  %s8 = inlined_call_operand.vmem [shape: f32[1,16], index: 8, kind: input, shape index: {}]
  %s9 = inlined_call_operand.vmem [shape: f32[1,16], index: 9, kind: input, shape index: {}]
  %s10 = inlined_call_operand.vmem [shape: f32[1,16], index: 10, kind: input, shape index: {}]
  %s11 = inlined_call_operand.vmem [shape: f32[1,16], index: 11, kind: input, shape index: {}]
  %s12 = inlined_call_operand.hbm [shape: f32[2,8,32], index: 12, kind: output, shape index: {}]
  %s13 = sld [smem:[#allocation0]]
  $region105: #{tpu_custom_call.1} parent=0
    _
  %s15 = ssub.s32 1, %s13
  %s16 = scalar_select 0, %s15, %s13
  $region1: #{tpu_custom_call.1} parent=0
    #allocation5 [shape = 'u8[8192]{0}', space=vmem, size = 0x2000, scoped, tag = 'input window, operand 0']
    #allocation6 [shape = 's32[2]{0}', space=sflag, size = 0x8, scoped, tag = 'scoped memory for tpu_custom_call.1']
    #allocation7 [shape = 's32[2]{0}', space=sflag, size = 0x8, scoped, tag = 'scoped memory for tpu_custom_call.1']
    #allocation8 [shape = 'u8[8192]{0}', space=vmem, size = 0x2000, scoped, tag = 'input window, operand 1, single buffered']
    #allocation9 [shape = 's32[1]{0}', space=sflag, size = 0x4, scoped, tag = 'scoped memory for tpu_custom_call.1']
    #allocation10 [shape = 'u8[8192]{0}', space=vmem, size = 0x2000, scoped, tag = 'input window, operand 2, single buffered']
    #allocation11 [shape = 'u8[8192]{0}', space=vmem, size = 0x2000, scoped, tag = 'input window, operand 3, single buffered']
    #allocation12 [shape = 's32[1]{0}', space=sflag, size = 0x4, scoped, tag = 'scoped memory for tpu_custom_call.1']
    #allocation13 [shape = 'u8[8192]{0}', space=vmem, size = 0x2000, scoped, tag = 'input window, operand 4, single buffered']
    #allocation14 [shape = 'u8[8192]{0}', space=vmem, size = 0x2000, scoped, tag = 'output window, operand 0']
    %17 = vsyncpa [#allocation6], 0
    %s18 = scalar_lea.sflag [#allocation6], 1
    %19 = vsyncpa %s18, 0
    %20 = vsyncpa [#allocation9], 0
    %21 = vsyncpa [#allocation12], 0
    %22 = vsyncpa [#allocation7], 0
    %s23 = scalar_lea.sflag [#allocation7], 1
    %24 = vsyncpa %s23, 0
    loop: start=0, step=1, limit=4
    $region2: #{tpu_custom_call.1} parent=1 // loop_pre_header
      _
    $region3: #{tpu_custom_call.1} parent=1 // loop_header
      %s26 = sphi 0, %s30
      %p27 = scmp.ge.s32.totalorder %s26, 4
      %s33 = sphi 0, %s45
      %s34 = sphi 0, %s41
      %s35 = sphi 0, %s33
      %s36 = sphi 0, %s34
      %s37 = sphi 0, %s35
      %s38 = sphi 0, %s36
      %s48 = sphi 0, %s50
      %s51 = sphi 0, %s48
      %s52 = sphi 0, %s51
      %s68 = sphi 0, %s52
      %s72 = sphi 0, %s72
      %s74 = sphi 0, %s72
      %s75 = sphi 0, %s74
      %s89 = sphi 0, %s75
      %s93 = sphi 0, %s93
      %s95 = sphi 0, %s93
      %s96 = sphi 0, %s95
      %s110 = sphi 0, %s96
      %s114 = sphi 0, %s114
      %s116 = sphi 0, %s114
      %s117 = sphi 0, %s116
      %s131 = sphi 0, %s117
      %s135 = sphi 0, %s135
      %s137 = sphi 0, %s135
      %s138 = sphi 0, %s137
      %s152 = sphi 0, %s138
      %s156 = sphi 0, %s156
      %s158 = sphi 0, %s156
      %s159 = sphi 0, %s158
      %s173 = sphi 0, %s159
      %s177 = sphi 0, %s177
      %s179 = sphi 0, %s177
      %s180 = sphi 0, %s179
      %s194 = sphi 0, %s180
      %s198 = sphi 0, %s198
      %s200 = sphi 0, %s198
      %s201 = sphi 0, %s200
      %s215 = sphi 0, %s201
      %s219 = sphi 0, %s219
      %s221 = sphi 0, %s219
      %s222 = sphi 0, %s221
      %s236 = sphi 0, %s222
      %s240 = sphi 0, %s240
      %s242 = sphi 0, %s240
      %s243 = sphi 0, %s242
      %s257 = sphi 0, %s243
      %s261 = sphi 0, %s261
      %s263 = sphi 0, %s261
      %s264 = sphi 0, %s263
      %s278 = sphi 0, %s264
      %s282 = sphi 0, %s282
      %s284 = sphi 0, %s282
      %s285 = sphi 0, %s284
      %s299 = sphi 0, %s285
      %s307 = sphi 0, %s309
      %s310 = sphi 0, %s307
      %s311 = sphi 0, %s310
      %s327 = sphi 0, %s311
    $region4: #{tpu_custom_call.1} parent=1 // loop_header_branch
      %29 = sbr.rel (%p27) target = $region8
    $region5: #{tpu_custom_call.1} parent=1 // loop_body
      %s31 = ssub.s32 %s26, 1
      %s32 = ssub.s32 %s26, 2
      %s39 = sadd.s32 1, %s34
      %p40 = scmp.ge.s32.totalorder %s39, 1
      %s41 = scalar_select %p40, 0, %s39
      %s42 = sadd.s32 1, %s33
      %s43 = scalar_select %p40, %s42, %s33
      %p44 = scmp.ge.s32.totalorder %s43, 2
      %s45 = scalar_select %p44, 0, %s43
      %s46 = ssub.s32 %s33, %s45
      %p47 = scmp.eq.s32.totalorder %s46, 0
      %s49 = sadd.s32 %s48, 1
      %s50 = scalar_select %p47, %s48, %s49
      %p53 = pneg %p47
      %p54 = scmp.eq.s32.totalorder %s26, 1
      %p55 = por %p53, %p54
      %p56 = scmp.ne.s32.totalorder %s48, %s51
      %p57 = scmp.eq.s32.totalorder %s26, 0
      %p58 = por %p56, %p57
      %p59 = scmp.ne.s32.totalorder %s48, %s51
      %p60 = scmp.eq.s32.totalorder %s31, 1
      %p61 = por %p59, %p60
      %p62 = scmp.ne.s32.totalorder %s51, %s52
      %p63 = scmp.eq.s32.totalorder %s31, 0
      %p64 = por %p62, %p63
      %p65 = scmp.ne.s32.totalorder %s51, %s52
      %p66 = scmp.eq.s32.totalorder %s32, 1
      %p67 = por %p65, %p66
      %p69 = scmp.ne.s32.totalorder %s52, %s68
      %p70 = scmp.eq.s32.totalorder %s32, 0
      %p71 = por %p69, %p70
      %s73 = sadd.s32 %s72, 1
      %p76 = scmp.eq.s32.totalorder %s26, 1
      %p77 = scmp.ne.s32.totalorder %s72, %s74
      %p78 = scmp.eq.s32.totalorder %s26, 0
      %p79 = por %p77, %p78
      %p80 = scmp.ne.s32.totalorder %s72, %s74
      %p81 = scmp.eq.s32.totalorder %s31, 1
      %p82 = por %p80, %p81
      %p83 = scmp.ne.s32.totalorder %s74, %s75
      %p84 = scmp.eq.s32.totalorder %s31, 0
      %p85 = por %p83, %p84
      %p86 = scmp.ne.s32.totalorder %s74, %s75
      %p87 = scmp.eq.s32.totalorder %s32, 1
      %p88 = por %p86, %p87
      %p90 = scmp.ne.s32.totalorder %s75, %s89
      %p91 = scmp.eq.s32.totalorder %s32, 0
      %p92 = por %p90, %p91
      %s94 = sadd.s32 %s93, 1
      %p97 = scmp.eq.s32.totalorder %s26, 1
      %p98 = scmp.ne.s32.totalorder %s93, %s95
      %p99 = scmp.eq.s32.totalorder %s26, 0
      %p100 = por %p98, %p99
      %p101 = scmp.ne.s32.totalorder %s93, %s95
      %p102 = scmp.eq.s32.totalorder %s31, 1
      %p103 = por %p101, %p102
      %p104 = scmp.ne.s32.totalorder %s95, %s96
      %p105 = scmp.eq.s32.totalorder %s31, 0
      %p106 = por %p104, %p105
      %p107 = scmp.ne.s32.totalorder %s95, %s96
      %p108 = scmp.eq.s32.totalorder %s32, 1
      %p109 = por %p107, %p108
      %p111 = scmp.ne.s32.totalorder %s96, %s110
      %p112 = scmp.eq.s32.totalorder %s32, 0
      %p113 = por %p111, %p112
      %s115 = sadd.s32 %s114, 1
      %p118 = scmp.eq.s32.totalorder %s26, 1
      %p119 = scmp.ne.s32.totalorder %s114, %s116
      %p120 = scmp.eq.s32.totalorder %s26, 0
      %p121 = por %p119, %p120
      %p122 = scmp.ne.s32.totalorder %s114, %s116
      %p123 = scmp.eq.s32.totalorder %s31, 1
      %p124 = por %p122, %p123
      %p125 = scmp.ne.s32.totalorder %s116, %s117
      %p126 = scmp.eq.s32.totalorder %s31, 0
      %p127 = por %p125, %p126
      %p128 = scmp.ne.s32.totalorder %s116, %s117
      %p129 = scmp.eq.s32.totalorder %s32, 1
      %p130 = por %p128, %p129
      %p132 = scmp.ne.s32.totalorder %s117, %s131
      %p133 = scmp.eq.s32.totalorder %s32, 0
      %p134 = por %p132, %p133
      %s136 = sadd.s32 %s135, 1
      %p139 = scmp.eq.s32.totalorder %s26, 1
      %p140 = scmp.ne.s32.totalorder %s135, %s137
      %p141 = scmp.eq.s32.totalorder %s26, 0
      %p142 = por %p140, %p141
      %p143 = scmp.ne.s32.totalorder %s135, %s137
      %p144 = scmp.eq.s32.totalorder %s31, 1
      %p145 = por %p143, %p144
      %p146 = scmp.ne.s32.totalorder %s137, %s138
      %p147 = scmp.eq.s32.totalorder %s31, 0
      %p148 = por %p146, %p147
      %p149 = scmp.ne.s32.totalorder %s137, %s138
      %p150 = scmp.eq.s32.totalorder %s32, 1
      %p151 = por %p149, %p150
      %p153 = scmp.ne.s32.totalorder %s138, %s152
      %p154 = scmp.eq.s32.totalorder %s32, 0
      %p155 = por %p153, %p154
      %s157 = sadd.s32 %s156, 1
      %p160 = scmp.eq.s32.totalorder %s26, 1
      %p161 = scmp.ne.s32.totalorder %s156, %s158
      %p162 = scmp.eq.s32.totalorder %s26, 0
      %p163 = por %p161, %p162
      %p164 = scmp.ne.s32.totalorder %s156, %s158
      %p165 = scmp.eq.s32.totalorder %s31, 1
      %p166 = por %p164, %p165
      %p167 = scmp.ne.s32.totalorder %s158, %s159
      %p168 = scmp.eq.s32.totalorder %s31, 0
      %p169 = por %p167, %p168
      %p170 = scmp.ne.s32.totalorder %s158, %s159
      %p171 = scmp.eq.s32.totalorder %s32, 1
      %p172 = por %p170, %p171
      %p174 = scmp.ne.s32.totalorder %s159, %s173
      %p175 = scmp.eq.s32.totalorder %s32, 0
      %p176 = por %p174, %p175
      %s178 = sadd.s32 %s177, 1
      %p181 = scmp.eq.s32.totalorder %s26, 1
      %p182 = scmp.ne.s32.totalorder %s177, %s179
      %p183 = scmp.eq.s32.totalorder %s26, 0
      %p184 = por %p182, %p183
      %p185 = scmp.ne.s32.totalorder %s177, %s179
      %p186 = scmp.eq.s32.totalorder %s31, 1
      %p187 = por %p185, %p186
      %p188 = scmp.ne.s32.totalorder %s179, %s180
      %p189 = scmp.eq.s32.totalorder %s31, 0
      %p190 = por %p188, %p189
      %p191 = scmp.ne.s32.totalorder %s179, %s180
      %p192 = scmp.eq.s32.totalorder %s32, 1
      %p193 = por %p191, %p192
      %p195 = scmp.ne.s32.totalorder %s180, %s194
      %p196 = scmp.eq.s32.totalorder %s32, 0
      %p197 = por %p195, %p196
      %s199 = sadd.s32 %s198, 1
      %p202 = scmp.eq.s32.totalorder %s26, 1
      %p203 = scmp.ne.s32.totalorder %s198, %s200
      %p204 = scmp.eq.s32.totalorder %s26, 0
      %p205 = por %p203, %p204
      %p206 = scmp.ne.s32.totalorder %s198, %s200
      %p207 = scmp.eq.s32.totalorder %s31, 1
      %p208 = por %p206, %p207
      %p209 = scmp.ne.s32.totalorder %s200, %s201
      %p210 = scmp.eq.s32.totalorder %s31, 0
      %p211 = por %p209, %p210
      %p212 = scmp.ne.s32.totalorder %s200, %s201
      %p213 = scmp.eq.s32.totalorder %s32, 1
      %p214 = por %p212, %p213
      %p216 = scmp.ne.s32.totalorder %s201, %s215
      %p217 = scmp.eq.s32.totalorder %s32, 0
      %p218 = por %p216, %p217
      %s220 = sadd.s32 %s219, 1
      %p223 = scmp.eq.s32.totalorder %s26, 1
      %p224 = scmp.ne.s32.totalorder %s219, %s221
      %p225 = scmp.eq.s32.totalorder %s26, 0
      %p226 = por %p224, %p225
      %p227 = scmp.ne.s32.totalorder %s219, %s221
      %p228 = scmp.eq.s32.totalorder %s31, 1
      %p229 = por %p227, %p228
      %p230 = scmp.ne.s32.totalorder %s221, %s222
      %p231 = scmp.eq.s32.totalorder %s31, 0
      %p232 = por %p230, %p231
      %p233 = scmp.ne.s32.totalorder %s221, %s222
      %p234 = scmp.eq.s32.totalorder %s32, 1
      %p235 = por %p233, %p234
      %p237 = scmp.ne.s32.totalorder %s222, %s236
      %p238 = scmp.eq.s32.totalorder %s32, 0
      %p239 = por %p237, %p238
      %s241 = sadd.s32 %s240, 1
      %p244 = scmp.eq.s32.totalorder %s26, 1
      %p245 = scmp.ne.s32.totalorder %s240, %s242
      %p246 = scmp.eq.s32.totalorder %s26, 0
      %p247 = por %p245, %p246
      %p248 = scmp.ne.s32.totalorder %s240, %s242
      %p249 = scmp.eq.s32.totalorder %s31, 1
      %p250 = por %p248, %p249
      %p251 = scmp.ne.s32.totalorder %s242, %s243
      %p252 = scmp.eq.s32.totalorder %s31, 0
      %p253 = por %p251, %p252
      %p254 = scmp.ne.s32.totalorder %s242, %s243
      %p255 = scmp.eq.s32.totalorder %s32, 1
      %p256 = por %p254, %p255
      %p258 = scmp.ne.s32.totalorder %s243, %s257
      %p259 = scmp.eq.s32.totalorder %s32, 0
      %p260 = por %p258, %p259
      %s262 = sadd.s32 %s261, 1
      %p265 = scmp.eq.s32.totalorder %s26, 1
      %p266 = scmp.ne.s32.totalorder %s261, %s263
      %p267 = scmp.eq.s32.totalorder %s26, 0
      %p268 = por %p266, %p267
      %p269 = scmp.ne.s32.totalorder %s261, %s263
      %p270 = scmp.eq.s32.totalorder %s31, 1
      %p271 = por %p269, %p270
      %p272 = scmp.ne.s32.totalorder %s263, %s264
      %p273 = scmp.eq.s32.totalorder %s31, 0
      %p274 = por %p272, %p273
      %p275 = scmp.ne.s32.totalorder %s263, %s264
      %p276 = scmp.eq.s32.totalorder %s32, 1
      %p277 = por %p275, %p276
      %p279 = scmp.ne.s32.totalorder %s264, %s278
      %p280 = scmp.eq.s32.totalorder %s32, 0
      %p281 = por %p279, %p280
      %s283 = sadd.s32 %s282, 1
      %p286 = scmp.eq.s32.totalorder %s26, 1
      %p287 = scmp.ne.s32.totalorder %s282, %s284
      %p288 = scmp.eq.s32.totalorder %s26, 0
      %p289 = por %p287, %p288
      %p290 = scmp.ne.s32.totalorder %s282, %s284
      %p291 = scmp.eq.s32.totalorder %s31, 1
      %p292 = por %p290, %p291
      %p293 = scmp.ne.s32.totalorder %s284, %s285
      %p294 = scmp.eq.s32.totalorder %s31, 0
      %p295 = por %p293, %p294
      %p296 = scmp.ne.s32.totalorder %s284, %s285
      %p297 = scmp.eq.s32.totalorder %s32, 1
      %p298 = por %p296, %p297
      %p300 = scmp.ne.s32.totalorder %s285, %s299
      %p301 = scmp.eq.s32.totalorder %s32, 0
      %p302 = por %p300, %p301
      %s303 = ssub.s32 %s33, %s45
      %s304 = ssub.s32 %s34, %s41
      %s305 = sor.u32 %s303, %s304
      %p306 = scmp.eq.s32.totalorder %s305, 0
      %s308 = sadd.s32 %s307, 1
      %s309 = scalar_select %p306, %s307, %s308
      %p312 = pneg %p306
      %p313 = scmp.eq.s32.totalorder %s26, 1
      %p314 = por %p312, %p313
      %p315 = scmp.ne.s32.totalorder %s307, %s310
      %p316 = scmp.eq.s32.totalorder %s26, 0
      %p317 = por %p315, %p316
      %p318 = scmp.ne.s32.totalorder %s307, %s310
      %p319 = scmp.eq.s32.totalorder %s31, 1
      %p320 = por %p318, %p319
      %p321 = scmp.ne.s32.totalorder %s310, %s311
      %p322 = scmp.eq.s32.totalorder %s31, 0
      %p323 = por %p321, %p322
      %p324 = scmp.ne.s32.totalorder %s310, %s311
      %p325 = scmp.eq.s32.totalorder %s32, 1
      %p326 = por %p324, %p325
      %p328 = scmp.ne.s32.totalorder %s311, %s327
      %p329 = scmp.eq.s32.totalorder %s32, 0
      %p330 = por %p328, %p329
      %p331 = scmp.le.s32.totalorder 1, %s26
      %p332 = scmp.lt.s32.totalorder %s26, 3
      %p333 = pnand %p331, %p332
      %p334 = pneg %p333
      // Predicated region
      $region9: #{tpu_custom_call.1} parent=5 // pred_check
        _
      $region10: #{tpu_custom_call.1} parent=5 // pred_check_branch
        %336 = sbr.rel (%p333) target = $region12
      $region11: #{tpu_custom_call.1} parent=5 // pred_region
        %s337 = ssub.s32 %s26, 1
        // Predicated region
        $region13: #{tpu_custom_call.1} parent=11 // pred_check
          %p338 = pneg %p85
        $region14: #{tpu_custom_call.1} parent=11 // pred_check_branch
          %340 = sbr.rel (%p338) target = $region16
        $region15: #{tpu_custom_call.1} parent=11 // pred_region
          %342 = vsyncadd [#allocation9], 0
          %s343 = sshll.u32 %s1, 4
          %s344 = int_to_ptr.hbm [resolvable:$true] %s343
          %s345 = sshll.u32 [#allocation8], 4
          %s346 = int_to_ptr.vmem [resolvable:$true] %s345
          %351 = dma.hbm_to_vmem [thread:$0]  %s344, 256, %s346, [#allocation9], 64, 64, 4
        $region16: #{tpu_custom_call.1} parent=11 // pred_fallthru
          _
        // Predicated region
        $region17: #{tpu_custom_call.1} parent=11 // pred_check
          %p352 = pneg %p106
        $region18: #{tpu_custom_call.1} parent=11 // pred_check_branch
          %354 = sbr.rel (%p352) target = $region20
        $region19: #{tpu_custom_call.1} parent=11 // pred_region
          %356 = vsyncadd [#allocation9], 0
          %s357 = sshll.u32 %s2, 4
          %s358 = int_to_ptr.hbm [resolvable:$true] %s357
          %s359 = sshll.u32 [#allocation10], 4
          %s360 = int_to_ptr.vmem [resolvable:$true] %s359
          %365 = dma.hbm_to_vmem [thread:$0]  %s358, 256, %s360, [#allocation9], 64, 64, 4
        $region20: #{tpu_custom_call.1} parent=11 // pred_fallthru
          _
        // Predicated region
        $region21: #{tpu_custom_call.1} parent=11 // pred_check
          %p366 = pneg %p127
        $region22: #{tpu_custom_call.1} parent=11 // pred_check_branch
          %368 = sbr.rel (%p366) target = $region24
        $region23: #{tpu_custom_call.1} parent=11 // pred_region
          %370 = vsyncadd [#allocation12], 0
          %s371 = sshll.u32 %s3, 4
          %s372 = int_to_ptr.hbm [resolvable:$true] %s371
          %s373 = sshll.u32 [#allocation11], 4
          %s374 = int_to_ptr.vmem [resolvable:$true] %s373
          %379 = dma.hbm_to_vmem [thread:$0]  %s372, 256, %s374, [#allocation12], 64, 64, 4
        $region24: #{tpu_custom_call.1} parent=11 // pred_fallthru
          _
        // Predicated region
        $region25: #{tpu_custom_call.1} parent=11 // pred_check
          %p380 = pneg %p148
        $region26: #{tpu_custom_call.1} parent=11 // pred_check_branch
          %382 = sbr.rel (%p380) target = $region28
        $region27: #{tpu_custom_call.1} parent=11 // pred_region
          %384 = vsyncadd [#allocation12], 0
          %s385 = sshll.u32 %s4, 4
          %s386 = int_to_ptr.hbm [resolvable:$true] %s385
          %s387 = sshll.u32 [#allocation13], 4
          %s388 = int_to_ptr.vmem [resolvable:$true] %s387
          %393 = dma.hbm_to_vmem [thread:$0]  %s386, 256, %s388, [#allocation12], 64, 64, 4
        $region28: #{tpu_custom_call.1} parent=11 // pred_fallthru
          _
        // Predicated region
        $region29: #{tpu_custom_call.1} parent=11 // pred_check
          %p394 = pneg %p169
        $region30: #{tpu_custom_call.1} parent=11 // pred_check_branch
          %396 = sbr.rel (%p394) target = $region32
        $region31: #{tpu_custom_call.1} parent=11 // pred_region
          _
        $region32: #{tpu_custom_call.1} parent=11 // pred_fallthru
          _
        // Predicated region
        $region33: #{tpu_custom_call.1} parent=11 // pred_check
          %p397 = pneg %p190
        $region34: #{tpu_custom_call.1} parent=11 // pred_check_branch
          %399 = sbr.rel (%p397) target = $region36
        $region35: #{tpu_custom_call.1} parent=11 // pred_region
          _
        $region36: #{tpu_custom_call.1} parent=11 // pred_fallthru
          _
        // Predicated region
        $region37: #{tpu_custom_call.1} parent=11 // pred_check
          %p400 = pneg %p211
        $region38: #{tpu_custom_call.1} parent=11 // pred_check_branch
          %402 = sbr.rel (%p400) target = $region40
        $region39: #{tpu_custom_call.1} parent=11 // pred_region
          _
        $region40: #{tpu_custom_call.1} parent=11 // pred_fallthru
          _
        // Predicated region
        $region41: #{tpu_custom_call.1} parent=11 // pred_check
          %p403 = pneg %p232
        $region42: #{tpu_custom_call.1} parent=11 // pred_check_branch
          %405 = sbr.rel (%p403) target = $region44
        $region43: #{tpu_custom_call.1} parent=11 // pred_region
          _
        $region44: #{tpu_custom_call.1} parent=11 // pred_fallthru
          _
        // Predicated region
        $region45: #{tpu_custom_call.1} parent=11 // pred_check
          %p406 = pneg %p253
        $region46: #{tpu_custom_call.1} parent=11 // pred_check_branch
          %408 = sbr.rel (%p406) target = $region48
        $region47: #{tpu_custom_call.1} parent=11 // pred_region
          _
        $region48: #{tpu_custom_call.1} parent=11 // pred_fallthru
          _
        // Predicated region
        $region49: #{tpu_custom_call.1} parent=11 // pred_check
          %p409 = pneg %p274
        $region50: #{tpu_custom_call.1} parent=11 // pred_check_branch
          %411 = sbr.rel (%p409) target = $region52
        $region51: #{tpu_custom_call.1} parent=11 // pred_region
          _
        $region52: #{tpu_custom_call.1} parent=11 // pred_fallthru
          _
        // Predicated region
        $region53: #{tpu_custom_call.1} parent=11 // pred_check
          %p412 = pneg %p295
        $region54: #{tpu_custom_call.1} parent=11 // pred_check_branch
          %414 = sbr.rel (%p412) target = $region56
        $region55: #{tpu_custom_call.1} parent=11 // pred_region
          _
        $region56: #{tpu_custom_call.1} parent=11 // pred_fallthru
          _
      $region12: #{tpu_custom_call.1} parent=5 // pred_fallthru
        _
      %p415 = scmp.lt.s32.totalorder %s26, 2
      // Predicated region
      $region57: #{tpu_custom_call.1} parent=5 // pred_check
        %p416 = pneg %p415
      $region58: #{tpu_custom_call.1} parent=5 // pred_check_branch
        %418 = sbr.rel (%p416) target = $region60
      $region59: #{tpu_custom_call.1} parent=5 // pred_region
        // Predicated region
        $region61: #{tpu_custom_call.1} parent=59 // pred_check
          %p419 = pneg %p58
        $region62: #{tpu_custom_call.1} parent=59 // pred_check_branch
          %421 = sbr.rel (%p419) target = $region64
        $region63: #{tpu_custom_call.1} parent=59 // pred_region
          %s422 = sand.u32 %s48, 1
          %s423 = scalar_lea.sflag [#allocation6], %s422
          %s424 = sand.u32 %s48, 1
          %s425 = smul.addr %s424, 8
          %s426 = scalar_lea.vmem [#allocation5], %s425
          %428 = vsyncadd %s423, 0
          %s429 = smul.addr %s33, 8
          %s430 = scalar_lea.hbm %s0, %s429
          %s432 = sshll.u32 %s430, 4
          %s433 = int_to_ptr.hbm [resolvable:$true] %s432
          %s434 = sshll.u32 %s426, 4
          %s435 = int_to_ptr.vmem [resolvable:$true] %s434
          %437 = dma.hbm_to_vmem [thread:$0]  %s433, 128, %s435, %s423
        $region64: #{tpu_custom_call.1} parent=59 // pred_fallthru
          _
      $region60: #{tpu_custom_call.1} parent=5 // pred_fallthru
        _
      %p438 = scmp.le.s32.totalorder 1, %s26
      %p439 = scmp.lt.s32.totalorder %s26, 3
      %p440 = pnand %p438, %p439
      %p441 = pneg %p440
      // Predicated region
      $region65: #{tpu_custom_call.1} parent=5 // pred_check
        _
      $region66: #{tpu_custom_call.1} parent=5 // pred_check_branch
        %443 = sbr.rel (%p440) target = $region68
      $region67: #{tpu_custom_call.1} parent=5 // pred_region
        %s444 = ssub.s32 %s26, 1
        %s445 = sand.u32 %s51, 1
        %s446 = scalar_lea.sflag [#allocation6], %s445
        %s447 = sand.u32 %s51, 1
        %s448 = smul.addr %s447, 8
        %s449 = scalar_lea.vmem [#allocation5], %s448
        // Predicated region
        $region69: #{tpu_custom_call.1} parent=67 // pred_check
          %p450 = pneg %p64
        $region70: #{tpu_custom_call.1} parent=67 // pred_check_branch
          %452 = sbr.rel (%p450) target = $region72
        $region71: #{tpu_custom_call.1} parent=67 // pred_region
          %454 = dma.done %s446, 128
        $region72: #{tpu_custom_call.1} parent=67 // pred_fallthru
          _
        // Predicated region
        $region73: #{tpu_custom_call.1} parent=67 // pred_check
          %p455 = pneg %p85
        $region74: #{tpu_custom_call.1} parent=67 // pred_check_branch
          %457 = sbr.rel (%p455) target = $region76
        $region75: #{tpu_custom_call.1} parent=67 // pred_region
          %459 = dma.done [#allocation9], 256
        $region76: #{tpu_custom_call.1} parent=67 // pred_fallthru
          _
        // Predicated region
        $region77: #{tpu_custom_call.1} parent=67 // pred_check
          %p460 = pneg %p106
        $region78: #{tpu_custom_call.1} parent=67 // pred_check_branch
          %462 = sbr.rel (%p460) target = $region80
        $region79: #{tpu_custom_call.1} parent=67 // pred_region
          %464 = dma.done [#allocation9], 256
        $region80: #{tpu_custom_call.1} parent=67 // pred_fallthru
          _
        // Predicated region
        $region81: #{tpu_custom_call.1} parent=67 // pred_check
          %p465 = pneg %p127
        $region82: #{tpu_custom_call.1} parent=67 // pred_check_branch
          %467 = sbr.rel (%p465) target = $region84
        $region83: #{tpu_custom_call.1} parent=67 // pred_region
          %469 = dma.done [#allocation12], 256
        $region84: #{tpu_custom_call.1} parent=67 // pred_fallthru
          _
        // Predicated region
        $region85: #{tpu_custom_call.1} parent=67 // pred_check
          %p470 = pneg %p148
        $region86: #{tpu_custom_call.1} parent=67 // pred_check_branch
          %472 = sbr.rel (%p470) target = $region88
        $region87: #{tpu_custom_call.1} parent=67 // pred_region
          %474 = dma.done [#allocation12], 256
        $region88: #{tpu_custom_call.1} parent=67 // pred_fallthru
          _
        %s475 = sand.u32 %s51, 1
        %s476 = scalar_lea.sflag [#allocation6], %s475
        %s477 = sand.u32 %s51, 1
        %s478 = smul.addr %s477, 8
        %s479 = scalar_lea.vmem [#allocation5], %s478
        %p480 = pneg %p64
        %p481 = pneg %p61
        %p482 = pneg %p85
        %p483 = pneg %p82
        %p484 = pneg %p106
        %p485 = pneg %p103
        %p486 = pneg %p127
        %p487 = pneg %p124
        %p488 = pneg %p148
        %p489 = pneg %p145
        %p490 = pneg %p169
        %p491 = pneg %p166
        %p492 = pneg %p190
        %p493 = pneg %p187
        %p494 = pneg %p211
        %p495 = pneg %p208
        %p496 = pneg %p232
        %p497 = pneg %p229
        %p498 = pneg %p253
        %p499 = pneg %p250
        %p500 = pneg %p274
        %p501 = pneg %p271
        %p502 = pneg %p295
        %p503 = pneg %p292
        %p504 = pneg %p323
        %p505 = pneg %p320
        %s506 = sand.u32 %s310, 1
        %s507 = scalar_lea.sflag [#allocation7], %s506
        %s508 = sand.u32 %s310, 1
        %s509 = smul.addr %s508, 8
        %s510 = scalar_lea.vmem [#allocation14], %s509
        %p512 = scmp.eq.s32.totalorder %s36, 0
        // Predicated region
        $region89: #{tpu_custom_call.1} parent=67 // pred_check
          %p513 = pneg %p512
        $region90: #{tpu_custom_call.1} parent=67 // pred_check_branch
          %515 = sbr.rel (%p513) target = $region92
        $region91: #{tpu_custom_call.1} parent=67 // pred_region
          %v516 = vld [vmem:[%s449] sm:$0xff]
          %v517 = vld [vmem:[%s6] sm:$0x1]
          %v518 = vld [vmem:[%s7] sm:$0x1]
          %vm519 = vcmask 261120
          %v520 = vsel %vm519, %v516, 0.0
          %521 = vadd.xlane.f32.xlu0 %v520
          %v522 = vpop.xlane.xlu0 %521
          %v523 = vrcp.pop 32.0
          %v524 = vmul.f32 32.0, %v523
          %v525 = vsub.f32 1.0, %v524
          %v526 = vmul.f32 %v523, %v525
          %v527 = vadd.f32 %v523, %v526
          %vm528 = vweird.f32 %v523
          %v529 = vsel %vm528, %v523, %v527
          %v530 = vmul.f32 %v522, %v529
          %v531 = vsub.f32 %v516, %v530
          %v532 = vmul.f32 %v531, %v531
          %v533 = vsel %vm519, %v532, 0.0
          %534 = vadd.xlane.f32.xlu0 %v533
          %v535 = vpop.xlane.xlu0 %534
          %v536 = vmul.f32 %v535, %v529
          %v537 = vadd.f32 %v536, 1e-05
          %v538 = vrsqrt.pop %v537
          %v539 = vmul.f32 %v538, %v537
          %v540 = vmul.f32 %v539, %v538
          %v541 = vmul.f32 0.5, %v540
          %v542 = vsub.f32 1.5, %v541
          %v543 = vmul.f32 %v538, %v542
          %vm544 = vweird.f32 %v537
          %vm545 = vweird.f32 %v538
          %vm546 = vmor %vm544, %vm545
          %v547 = vsel %vm546, %v538, %v543
          %v548 = vmul.f32 %v531, %v547
          %v550 = vperm.slane %v517, 0
          %v552 = vmul.f32 %v548, %v550
          %v554 = vperm.slane %v518, 0
          %v556 = vadd.f32 %v552, %v554
          %v557 = vpack.c.bf16 %v556, %v556
          %vm558 = vcmask 257024
          %559 = vst.msk [vmem:[#allocation2] sm:$0xf] %vm558, %v557
          %v560 = vld [vmem:[#allocation10] sm:$0xf]
          %v561 = vld [vmem:[#allocation10 + $0x4] sm:$0xf]
          %v562 = vld [vmem:[#allocation10 + $0x8] sm:$0xf]
          %v563 = vld [vmem:[#allocation10 + $0xc] sm:$0xf]
          %v568 = vunpack.c.l.b16 %v560
          %v569 = vunpack.c.l.b16 %v561
          %v570 = vunpack.c.l.b16 %v562
          %v571 = vunpack.c.l.b16 %v563
          %v572 = vpack.c.b16 %v569, %v568
          %v573 = vpack.c.b16 %v571, %v570
          %v577 = vsel %vm519, %v557, 0
          %579 = vmatpush.bf16.msra.mxu0 0
          %580 = vmatpush.bf16.msra.mxu0 0
          %581 = vmatpush.bf16.msra.mxu0 0
          %582 = vmatpush.bf16.msra.mxu0 0
          %583 = vmatpush.bf16.msra.mxu0 0
          %584 = vmatpush.bf16.msra.mxu0 0
          %585 = vmatpush.bf16.msra.mxu0 %v573
          %586 = vmatpush.bf16.msra.mxu0 %v572
          %587 = vmatmul.bf16.gmra.mxu0 %v577
          %v588 = vpop.f32.mrf.mxu0
          %v589 = vadd.f32 0.0, %v588
          %v590 = vpop.f32.mrf.mxu0
          %591 = vdwg.mxu0
          %v592 = vld [vmem:[#allocation11] sm:$0xf]
          %v593 = vld [vmem:[#allocation11 + $0x4] sm:$0xf]
          %v594 = vld [vmem:[#allocation11 + $0x8] sm:$0xf]
          %v595 = vld [vmem:[#allocation11 + $0xc] sm:$0xf]
          %v600 = vunpack.c.l.b16 %v592
          %v601 = vunpack.c.l.b16 %v593
          %v602 = vunpack.c.l.b16 %v594
          %v603 = vunpack.c.l.b16 %v595
          %v604 = vpack.c.b16 %v601, %v600
          %v605 = vpack.c.b16 %v603, %v602
          %608 = vmatpush.bf16.msra.mxu0 0
          %609 = vmatpush.bf16.msra.mxu0 0
          %610 = vmatpush.bf16.msra.mxu0 0
          %611 = vmatpush.bf16.msra.mxu0 0
          %612 = vmatpush.bf16.msra.mxu0 0
          %613 = vmatpush.bf16.msra.mxu0 0
          %614 = vmatpush.bf16.msra.mxu0 %v605
          %615 = vmatpush.bf16.msra.mxu0 %v604
          %616 = vmatmul.bf16.gmra.mxu0 %v577
          %v617 = vpop.f32.mrf.mxu0
          %v618 = vadd.f32 0.0, %v617
          %v619 = vpop.f32.mrf.mxu0
          %620 = vdwg.mxu0
          %v621 = vld [vmem:[%s8] sm:$0x1]
          %v622 = vld [vmem:[%s9] sm:$0x1]
          %vm623 = vcmask 130048
          %v624 = vsel %vm623, %v589, 0.0
          %625 = vadd.xlane.f32.xlu0 %v624
          %v626 = vpop.xlane.xlu0 %625
          %v627 = vrcp.pop 16.0
          %v628 = vmul.f32 16.0, %v627
          %v629 = vsub.f32 1.0, %v628
          %v630 = vmul.f32 %v627, %v629
          %v631 = vadd.f32 %v627, %v630
          %vm632 = vweird.f32 %v627
          %v633 = vsel %vm632, %v627, %v631
          %v634 = vmul.f32 %v626, %v633
          %v635 = vsub.f32 %v589, %v634
          %v636 = vmul.f32 %v635, %v635
          %v637 = vsel %vm623, %v636, 0.0
          %638 = vadd.xlane.f32.xlu0 %v637
          %v639 = vpop.xlane.xlu0 %638
          %v640 = vmul.f32 %v639, %v633
          %v641 = vadd.f32 %v640, 1e-05
          %v642 = vrsqrt.pop %v641
          %v643 = vmul.f32 %v642, %v641
          %v644 = vmul.f32 %v643, %v642
          %v645 = vmul.f32 0.5, %v644
          %v646 = vsub.f32 1.5, %v645
          %v647 = vmul.f32 %v642, %v646
          %vm648 = vweird.f32 %v641
          %vm649 = vweird.f32 %v642
          %vm650 = vmor %vm648, %vm649
          %v651 = vsel %vm650, %v642, %v647
          %v652 = vmul.f32 %v635, %v651
          %v654 = vperm.slane %v621, 0
          %v656 = vmul.f32 %v652, %v654
          %v658 = vperm.slane %v622, 0
          %v660 = vadd.f32 %v656, %v658
          %661 = vxpose.xlu0.b32.start [1/16] %v660, 128
          %662 = vxpose.xlu0.b32.cont [2/16] 0.0, 128
          %663 = vxpose.xlu0.b32.cont [3/16] 0.0, 128
          %664 = vxpose.xlu0.b32.cont [4/16] 0.0, 128
          %665 = vxpose.xlu0.b32.cont [5/16] 0.0, 128
          %666 = vxpose.xlu0.b32.cont [6/16] 0.0, 128
          %667 = vxpose.xlu0.b32.cont [7/16] 0.0, 128
          %668 = vxpose.xlu0.b32.cont [8/16] 0.0, 128
          %669 = vxpose.xlu0.b32.cont [9/16] 0.0, 128
          %670 = vxpose.xlu0.b32.cont [10/16] 0.0, 128
          %671 = vxpose.xlu0.b32.cont [11/16] 0.0, 128
          %672 = vxpose.xlu0.b32.cont [12/16] 0.0, 128
          %673 = vxpose.xlu0.b32.cont [13/16] 0.0, 128
          %674 = vxpose.xlu0.b32.cont [14/16] 0.0, 128
          %675 = vxpose.xlu0.b32.cont [15/16] 0.0, 128
          %676 = vxpose.xlu0.b32.end [16/16] 0.0, 128
          %v677 = vpop.trf.xlu0
          %v678 = vpop.trf.xlu0
          %v679 = vpop.trf.xlu0
          %v680 = vpop.trf.xlu0
          %v681 = vpop.trf.xlu0
          %v682 = vpop.trf.xlu0
          %v683 = vpop.trf.xlu0
          %v684 = vpop.trf.xlu0
          %v685 = vpop.trf.xlu0
          %v686 = vpop.trf.xlu0
          %v687 = vpop.trf.xlu0
          %v688 = vpop.trf.xlu0
          %v689 = vpop.trf.xlu0
          %v690 = vpop.trf.xlu0
          %v691 = vpop.trf.xlu0
          %v692 = vpop.trf.xlu0
          %694 = vrot.lane.b32.xlu0 %v589, 112
          %v695 = vpop.permute.xlu0 %694
          %v697 = vsel %vm623, %v695, 0.0
          %698 = vadd.xlane.f32.xlu0 %v697
          %v699 = vpop.xlane.xlu0 %698
          %v700 = vmul.f32 %v699, %v633
          %v701 = vsub.f32 %v589, %v700
          %v702 = vmul.f32 %v701, %v701
          %704 = vrot.lane.b32.xlu0 %v702, 112
          %v705 = vpop.permute.xlu0 %704
          %v707 = vsel %vm623, %v705, 0.0
          %708 = vadd.xlane.f32.xlu0 %v707
          %v709 = vpop.xlane.xlu0 %708
          %v710 = vmul.f32 %v709, %v633
          %v711 = vadd.f32 %v710, 1e-05
          %v712 = vrsqrt.pop %v711
          %v713 = vmul.f32 %v712, %v711
          %v714 = vmul.f32 %v713, %v712
          %v715 = vmul.f32 0.5, %v714
          %v716 = vsub.f32 1.5, %v715
          %v717 = vmul.f32 %v712, %v716
          %vm718 = vweird.f32 %v711
          %vm719 = vweird.f32 %v712
          %vm720 = vmor %vm718, %vm719
          %v721 = vsel %vm720, %v712, %v717
          %v722 = vmul.f32 %v701, %v721
          %723 = vrot.lane.b32.xlu0 %v654, 16
          %v724 = vpop.permute.xlu0 %723
          %v726 = vmul.f32 %v722, %v724
          %727 = vrot.lane.b32.xlu0 %v658, 16
          %v728 = vpop.permute.xlu0 %727
          %v730 = vadd.f32 %v726, %v728
          %732 = vrot.lane.b32.xlu0 %v730, 112
          %v733 = vpop.permute.xlu0 %732
          %735 = vxpose.xlu0.b32.start [1/16] %v733, 128
          %736 = vxpose.xlu0.b32.cont [2/16] 0.0, 128
          %737 = vxpose.xlu0.b32.cont [3/16] 0.0, 128
          %738 = vxpose.xlu0.b32.cont [4/16] 0.0, 128
          %739 = vxpose.xlu0.b32.cont [5/16] 0.0, 128
          %740 = vxpose.xlu0.b32.cont [6/16] 0.0, 128
          %741 = vxpose.xlu0.b32.cont [7/16] 0.0, 128
          %742 = vxpose.xlu0.b32.cont [8/16] 0.0, 128
          %743 = vxpose.xlu0.b32.cont [9/16] 0.0, 128
          %744 = vxpose.xlu0.b32.cont [10/16] 0.0, 128
          %745 = vxpose.xlu0.b32.cont [11/16] 0.0, 128
          %746 = vxpose.xlu0.b32.cont [12/16] 0.0, 128
          %747 = vxpose.xlu0.b32.cont [13/16] 0.0, 128
          %748 = vxpose.xlu0.b32.cont [14/16] 0.0, 128
          %749 = vxpose.xlu0.b32.cont [15/16] 0.0, 128
          %750 = vxpose.xlu0.b32.end [16/16] 0.0, 128
          %v751 = vpop.trf.xlu0
          %v752 = vpop.trf.xlu0
          %v753 = vpop.trf.xlu0
          %v754 = vpop.trf.xlu0
          %v755 = vpop.trf.xlu0
          %v756 = vpop.trf.xlu0
          %v757 = vpop.trf.xlu0
          %v758 = vpop.trf.xlu0
          %v759 = vpop.trf.xlu0
          %v760 = vpop.trf.xlu0
          %v761 = vpop.trf.xlu0
          %v762 = vpop.trf.xlu0
          %v763 = vpop.trf.xlu0
          %v764 = vpop.trf.xlu0
          %v765 = vpop.trf.xlu0
          %v766 = vpop.trf.xlu0
          %v767 = vpack.c.bf16 %v677, %v677
          %v768 = vpack.c.bf16 %v678, %v678
          %v769 = vpack.c.bf16 %v751, %v751
          %v770 = vpack.c.bf16 %v752, %v752
          %vm771 = vcmask 60416
          %772 = vst.msk [vmem:[#allocation3] sm:$0xf] %vm771, %v767
          %773 = vst.msk [vmem:[#allocation3 + $0x4] sm:$0xf] %vm771, %v768
          %774 = vst.msk [vmem:[#allocation3 + $0x8] sm:$0xf] %vm771, %v769
          %775 = vst.msk [vmem:[#allocation3 + $0xc] sm:$0xf] %vm771, %v770
          %v776 = vld [vmem:[%s10] sm:$0x1]
          %v777 = vld [vmem:[%s11] sm:$0x1]
          %v778 = vsel %vm623, %v618, 0.0
          %779 = vadd.xlane.f32.xlu0 %v778
          %v780 = vpop.xlane.xlu0 %779
          %v781 = vmul.f32 %v780, %v633
          %v782 = vsub.f32 %v618, %v781
          %v783 = vmul.f32 %v782, %v782
          %v784 = vsel %vm623, %v783, 0.0
          %785 = vadd.xlane.f32.xlu0 %v784
          %v786 = vpop.xlane.xlu0 %785
          %v787 = vmul.f32 %v786, %v633
          %v788 = vadd.f32 %v787, 1e-05
          %v789 = vrsqrt.pop %v788
          %v790 = vmul.f32 %v789, %v788
          %v791 = vmul.f32 %v790, %v789
          %v792 = vmul.f32 0.5, %v791
          %v793 = vsub.f32 1.5, %v792
          %v794 = vmul.f32 %v789, %v793
          %vm795 = vweird.f32 %v788
          %vm796 = vweird.f32 %v789
          %vm797 = vmor %vm795, %vm796
          %v798 = vsel %vm797, %v789, %v794
          %v799 = vmul.f32 %v782, %v798
          %v801 = vperm.slane %v776, 0
          %v803 = vmul.f32 %v799, %v801
          %v805 = vperm.slane %v777, 0
          %v807 = vadd.f32 %v803, %v805
          %809 = vrot.lane.b32.xlu0 %v618, 112
          %v810 = vpop.permute.xlu0 %809
          %v812 = vsel %vm623, %v810, 0.0
          %813 = vadd.xlane.f32.xlu0 %v812
          %v814 = vpop.xlane.xlu0 %813
          %v815 = vmul.f32 %v814, %v633
          %v816 = vsub.f32 %v618, %v815
          %v817 = vmul.f32 %v816, %v816
          %819 = vrot.lane.b32.xlu0 %v817, 112
          %v820 = vpop.permute.xlu0 %819
          %v822 = vsel %vm623, %v820, 0.0
          %823 = vadd.xlane.f32.xlu0 %v822
          %v824 = vpop.xlane.xlu0 %823
          %v825 = vmul.f32 %v824, %v633
          %v826 = vadd.f32 %v825, 1e-05
          %v827 = vrsqrt.pop %v826
          %v828 = vmul.f32 %v827, %v826
          %v829 = vmul.f32 %v828, %v827
          %v830 = vmul.f32 0.5, %v829
          %v831 = vsub.f32 1.5, %v830
          %v832 = vmul.f32 %v827, %v831
          %vm833 = vweird.f32 %v826
          %vm834 = vweird.f32 %v827
          %vm835 = vmor %vm833, %vm834
          %v836 = vsel %vm835, %v827, %v832
          %v837 = vmul.f32 %v816, %v836
          %838 = vrot.lane.b32.xlu0 %v801, 16
          %v839 = vpop.permute.xlu0 %838
          %v841 = vmul.f32 %v837, %v839
          %842 = vrot.lane.b32.xlu0 %v805, 16
          %v843 = vpop.permute.xlu0 %842
          %v845 = vadd.f32 %v841, %v843
          %847 = vrot.lane.b32.xlu0 %v845, 112
          %v848 = vpop.permute.xlu0 %847
          %v850 = vpack.c.bf16 %v807, %v807
          %v851 = vpack.c.bf16 %v848, %v848
          %vm852 = vcmask 125952
          %853 = vst.msk [vmem:[#allocation4] sm:$0xf] %vm852, %v850
          %854 = vst.msk [vmem:[#allocation4 + $0x4] sm:$0xf] %vm852, %v851
        $region92: #{tpu_custom_call.1} parent=67 // pred_fallthru
          _
        %s855 = smul.u32 %s36, 8
        %s856 = sshra.s32 %s855, 3
        %s857 = sand.u32 %s855, 7
        %s858 = smul.addr %s856, 4
        %s859 = scalar_lea.vmem [#allocation2], %s858
        %v860 = vld [vmem:[%s859] sm:$0xf]
        %v861 = vld [vmem:[#allocation8] sm:$0xf]
        %v862 = vld [vmem:[#allocation8 + $0x4] sm:$0xf]
        %v863 = vld [vmem:[#allocation8 + $0x8] sm:$0xf]
        %v864 = vld [vmem:[#allocation8 + $0xc] sm:$0xf]
        %v869 = vunpack.c.l.b16 %v861
        %v870 = vunpack.c.l.b16 %v862
        %v871 = vunpack.c.l.b16 %v863
        %v872 = vunpack.c.l.b16 %v864
        %v873 = vpack.c.b16 %v870, %v869
        %v874 = vpack.c.b16 %v872, %v871
        %vm877 = vcmask 261120
        %v879 = vsel %vm877, %v860, 0
        %881 = vmatpush.bf16.msra.mxu0 0
        %882 = vmatpush.bf16.msra.mxu0 0
        %883 = vmatpush.bf16.msra.mxu0 0
        %884 = vmatpush.bf16.msra.mxu0 0
        %885 = vmatpush.bf16.msra.mxu0 0
        %886 = vmatpush.bf16.msra.mxu0 0
        %887 = vmatpush.bf16.msra.mxu0 %v874
        %888 = vmatpush.bf16.msra.mxu0 %v873
        %889 = vmatmul.bf16.gmra.mxu0 %v879
        %v890 = vpop.f32.mrf.mxu0
        %v891 = vadd.f32 0.0, %v890
        %v892 = vpop.f32.mrf.mxu0
        %893 = vdwg.mxu0
        %v894 = vmul.f32 %v891, 0.25
        %896 = vrot.lane.b32.xlu0 %v894, 112
        %v897 = vpop.permute.xlu0 %896
        %v899 = vpack.c.bf16 %v894, %v894
        %v900 = vpack.c.bf16 %v897, %v897
        %v901 = vld [vmem:[#allocation3] sm:$0xf]
        %v902 = vld [vmem:[#allocation3 + $0x4] sm:$0xf]
        %v903 = vld [vmem:[#allocation3 + $0x8] sm:$0xf]
        %v904 = vld [vmem:[#allocation3 + $0xc] sm:$0xf]
        %v907 = vunpack.c.l.b16 %v901
        %v908 = vunpack.c.l.b16 %v902
        %v909 = vpack.c.b16 %v908, %v907
        %vm911 = vcmask 130048
        %v913 = vsel %vm911, %v899, 0
        %915 = vmatpush.bf16.msra.mxu0 0
        %916 = vmatpush.bf16.msra.mxu0 0
        %917 = vmatpush.bf16.msra.mxu0 0
        %918 = vmatpush.bf16.msra.mxu0 0
        %919 = vmatpush.bf16.msra.mxu0 0
        %920 = vmatpush.bf16.msra.mxu0 0
        %921 = vmatpush.bf16.msra.mxu0 0
        %922 = vmatpush.bf16.msra.mxu0 %v909
        %923 = vmatmul.bf16.gmra.mxu0 %v913
        %v924 = vpop.f32.mrf.mxu0
        %v925 = vadd.f32 0.0, %v924
        %v926 = vpop.f32.mrf.mxu0
        %927 = vdwg.mxu0
        %v930 = vunpack.c.l.b16 %v903
        %v931 = vunpack.c.l.b16 %v904
        %v932 = vpack.c.b16 %v931, %v930
        %v935 = vsel %vm911, %v900, 0
        %937 = vmatpush.bf16.msra.mxu0 0
        %938 = vmatpush.bf16.msra.mxu0 0
        %939 = vmatpush.bf16.msra.mxu0 0
        %940 = vmatpush.bf16.msra.mxu0 0
        %941 = vmatpush.bf16.msra.mxu0 0
        %942 = vmatpush.bf16.msra.mxu0 0
        %943 = vmatpush.bf16.msra.mxu0 0
        %944 = vmatpush.bf16.msra.mxu0 %v932
        %945 = vmatmul.bf16.gmra.mxu0 %v935
        %v946 = vpop.f32.mrf.mxu0
        %v947 = vadd.f32 0.0, %v946
        %v948 = vpop.f32.mrf.mxu0
        %949 = vdwg.mxu0
        %vm950 = vcmask 64512
        %v951 = vsel %vm950, %v925, -inf
        %952 = vmax.xlane.f32.xlu0 %v951
        %v953 = vpop.xlane.xlu0 %952
        %v954 = vsel %vm950, %v947, -inf
        %955 = vmax.xlane.f32.xlu0 %v954
        %v956 = vpop.xlane.xlu0 %955
        %v957 = vsub.f32 %v925, %v953
        %v958 = vsub.f32 %v947, %v956
        %v959 = vmul.f32 %v957, 1.442695
        %v960 = vpow.pop %v959
        %v961 = vmul.f32 %v958, 1.442695
        %v962 = vpow.pop %v961
        %v963 = vsel %vm950, %v960, 0.0
        %964 = vadd.xlane.f32.xlu0 %v963
        %v965 = vpop.xlane.xlu0 %964
        %v966 = vsel %vm950, %v962, 0.0
        %967 = vadd.xlane.f32.xlu0 %v966
        %v968 = vpop.xlane.xlu0 %967
        %v969 = vpack.c.bf16 %v960, %v960
        %v970 = vpack.c.bf16 %v962, %v962
        %v971 = vld [vmem:[#allocation4] sm:$0xf]
        %v972 = vld [vmem:[#allocation4 + $0x4] sm:$0xf]
        %v974 = vsel %vm950, %v969, 0
        %vm976 = vcmask 1043456
        %v978 = vsel %vm976, %v971, 0
        %980 = vmatpush.bf16.msra.mxu0 0
        %981 = vmatpush.bf16.msra.mxu0 0
        %982 = vmatpush.bf16.msra.mxu0 0
        %983 = vmatpush.bf16.msra.mxu0 0
        %984 = vmatpush.bf16.msra.mxu0 0
        %985 = vmatpush.bf16.msra.mxu0 0
        %986 = vmatpush.bf16.msra.mxu0 0
        %987 = vmatpush.bf16.msra.mxu0 %v978
        %988 = vmatmul.bf16.gmra.mxu0 %v974
        %v989 = vpop.f32.mrf.mxu0
        %v990 = vadd.f32 0.0, %v989
        %v991 = vpop.f32.mrf.mxu0
        %992 = vdwg.mxu0
        %v994 = vsel %vm950, %v970, 0
        %v997 = vsel %vm976, %v972, 0
        %999 = vmatpush.bf16.msra.mxu0 0
        %1000 = vmatpush.bf16.msra.mxu0 0
        %1001 = vmatpush.bf16.msra.mxu0 0
        %1002 = vmatpush.bf16.msra.mxu0 0
        %1003 = vmatpush.bf16.msra.mxu0 0
        %1004 = vmatpush.bf16.msra.mxu0 0
        %1005 = vmatpush.bf16.msra.mxu0 0
        %1006 = vmatpush.bf16.msra.mxu0 %v997
        %1007 = vmatmul.bf16.gmra.mxu0 %v994
        %v1008 = vpop.f32.mrf.mxu0
        %v1009 = vadd.f32 0.0, %v1008
        %v1010 = vpop.f32.mrf.mxu0
        %1011 = vdwg.mxu0
        %v1012 = vrcp.pop %v965
        %v1013 = vrcp.pop %v968
        %v1014 = vmul.f32 %v990, %v1012
        %v1015 = vmul.f32 %v1009, %v1013
        %v1016 = vld [vmem:[%s5] sm:$0x1]
        %v1017 = vpack.c.bf16 %v1014, %v1014
        %v1018 = vld [vmem:[#allocation13] sm:$0xf]
        %v1019 = vld [vmem:[#allocation13 + $0x4] sm:$0xf]
        %v1022 = vunpack.c.l.b16 %v1018
        %v1023 = vunpack.c.l.b16 %v1019
        %v1024 = vpack.c.b16 %v1023, %v1022
        %v1027 = vsel %vm911, %v1017, 0
        %1029 = vmatpush.bf16.msra.mxu0 0
        %1030 = vmatpush.bf16.msra.mxu0 0
        %1031 = vmatpush.bf16.msra.mxu0 0
        %1032 = vmatpush.bf16.msra.mxu0 0
        %1033 = vmatpush.bf16.msra.mxu0 0
        %1034 = vmatpush.bf16.msra.mxu0 0
        %1035 = vmatpush.bf16.msra.mxu0 0
        %1036 = vmatpush.bf16.msra.mxu0 %v1024
        %1037 = vmatmul.bf16.gmra.mxu0 %v1027
        %v1038 = vpop.f32.mrf.mxu0
        %v1039 = vadd.f32 0.0, %v1038
        %v1040 = vpop.f32.mrf.mxu0
        %1041 = vdwg.mxu0
        %v1043 = vperm.slane %v1016, 0
        %v1045 = vadd.f32 %v1043, %v1039
        %v1046 = vpack.c.bf16 %v1015, %v1015
        %v1047 = vld [vmem:[#allocation13 + $0x8] sm:$0xf]
        %v1048 = vld [vmem:[#allocation13 + $0xc] sm:$0xf]
        %v1051 = vunpack.c.l.b16 %v1047
        %v1052 = vunpack.c.l.b16 %v1048
        %v1053 = vpack.c.b16 %v1052, %v1051
        %v1056 = vsel %vm911, %v1046, 0
        %1058 = vmatpush.bf16.msra.mxu0 0
        %1059 = vmatpush.bf16.msra.mxu0 0
        %1060 = vmatpush.bf16.msra.mxu0 0
        %1061 = vmatpush.bf16.msra.mxu0 0
        %1062 = vmatpush.bf16.msra.mxu0 0
        %1063 = vmatpush.bf16.msra.mxu0 0
        %1064 = vmatpush.bf16.msra.mxu0 0
        %1065 = vmatpush.bf16.msra.mxu0 %v1053
        %1066 = vmatmul.bf16.gmra.mxu0 %v1056
        %v1067 = vpop.f32.mrf.mxu0
        %v1068 = vadd.f32 0.0, %v1067
        %v1069 = vpop.f32.mrf.mxu0
        %1070 = vdwg.mxu0
        %v1071 = vadd.f32 %v1045, %v1068
        %1072 = vst.msk [vmem:[%s510] sm:$0xff] %vm877, %v1071
        %s1073 = sand.u32 %s310, 1
        %s1074 = scalar_lea.sflag [#allocation7], %s1073
        %s1075 = sand.u32 %s310, 1
        %s1076 = smul.addr %s1075, 8
        %s1077 = scalar_lea.vmem [#allocation14], %s1076
        // Predicated region
        $region93: #{tpu_custom_call.1} parent=67 // pred_check
          %p1078 = pneg %p320
        $region94: #{tpu_custom_call.1} parent=67 // pred_check_branch
          %1080 = sbr.rel (%p1078) target = $region96
        $region95: #{tpu_custom_call.1} parent=67 // pred_region
          %1082 = vsyncadd %s1074, 0
          %s1083 = sadd.s32 %s36, %s35
          %s1084 = smul.addr %s1083, 8
          %s1085 = scalar_lea.hbm %s12, %s1084
          %s1087 = sshll.u32 %s1077, 4
          %s1088 = int_to_ptr.vmem [resolvable:$true] %s1087
          %s1089 = sshll.u32 %s1085, 4
          %s1090 = int_to_ptr.hbm [resolvable:$true] %s1089
          %1092 = dma.vmem_to_hbm [thread:$0]  %s1088, 128, %s1090, %s1074
        $region96: #{tpu_custom_call.1} parent=67 // pred_fallthru
          _
      $region68: #{tpu_custom_call.1} parent=5 // pred_fallthru
        _
      %p1093 = scmp.le.s32.totalorder 2, %s26
      // Predicated region
      $region97: #{tpu_custom_call.1} parent=5 // pred_check
        %p1094 = pneg %p1093
      $region98: #{tpu_custom_call.1} parent=5 // pred_check_branch
        %1096 = sbr.rel (%p1094) target = $region100
      $region99: #{tpu_custom_call.1} parent=5 // pred_region
        %s1097 = ssub.s32 %s26, 2
        // Predicated region
        $region101: #{tpu_custom_call.1} parent=99 // pred_check
          %p1098 = pneg %p326
        $region102: #{tpu_custom_call.1} parent=99 // pred_check_branch
          %1100 = sbr.rel (%p1098) target = $region104
        $region103: #{tpu_custom_call.1} parent=99 // pred_region
          %s1101 = sand.u32 %s311, 1
          %s1102 = scalar_lea.sflag [#allocation7], %s1101
          %s1103 = sand.u32 %s311, 1
          %s1104 = smul.addr %s1103, 8
          %s1105 = scalar_lea.vmem [#allocation14], %s1104
          %1107 = dma.done %s1102, 128
        $region104: #{tpu_custom_call.1} parent=99 // pred_fallthru
          _
      $region100: #{tpu_custom_call.1} parent=5 // pred_fallthru
        _
    $region6: #{tpu_custom_call.1} parent=1 // loop_footer
      %s30 = sadd.s32 1, %s26
    $region7: #{tpu_custom_call.1} parent=1 // loop_footer_branch
      %25 = sbr.rel target = $region3
    $region8: #{tpu_custom_call.1} parent=1 // loop_exit
      _
    %1108 = vsyncpa [#allocation6], 1
    %s1109 = scalar_lea.sflag [#allocation6], 1
    %1110 = vsyncpa %s1109, 1
    %1111 = vsyncpa [#allocation9], 1
    %1112 = vsyncpa [#allocation12], 1
    %1113 = vsyncpa [#allocation7], 1
    %s1114 = scalar_lea.sflag [#allocation7], 1
    %1115 = vsyncpa %s1114, 1

</llo_original>
